<compile_context>
chip_gen: v7x
topology: tpu7x:2x2x1
jax: 0.10.0
libtpu: 0.0.40
codegen_flags: <defaults>
</compile_context>

<pallas_src>
import functools

import jax
import jax.numpy as jnp
from jax.experimental import pallas as pl
from jax.experimental.pallas import tpu as pltpu

LP = 8          # left halo columns in the conv2 scratch -> aligned interior store
NOUT_PAD = 128  # fc output padded to one full lane width (lane-dense store)


# ------------------------------ Pallas kernel ------------------------------ #

def _fused_forward_kernel(x_ref, w1_ref, b1_ref, w2_ref, b2_ref,
                          fcw_ref, fcb_ref, out_ref, xpad_ref,
                          *, H, W, compute_dtype):
    """conv1+ReLU -> conv2+ReLU -> GAP -> fc for a block of BB images."""
    BB, HW, _ = x_ref.shape
    c1 = w1_ref.shape[-1]
    c2 = w2_ref.shape[-1]

    # ---- conv1: ONE MXU contraction over the wrapper-side im2col patches.
    acc1 = jnp.dot(x_ref[...].reshape(BB * HW, -1), w1_ref[...],
                   preferred_element_type=jnp.float32)
    a1 = jnp.maximum(acc1 + b1_ref[...], 0.0)                    # (BB*HW, c1) f32
    a1 = a1.astype(compute_dtype).reshape(BB, H, W, c1)

    # ---- stage conv1 output (compute_dtype) in the halo scratch.  Zero only
    #      the border strips the 9 tap windows actually read (every step, so it
    #      is correct under megacore 'parallel' sharding).
    xpad_ref[:, 0:1, LP - 1:LP + W + 1, :] = jnp.zeros((BB, 1, W + 2, c1), compute_dtype)
    xpad_ref[:, H + 1:H + 2, LP - 1:LP + W + 1, :] = jnp.zeros((BB, 1, W + 2, c1), compute_dtype)
    xpad_ref[:, 1:H + 1, LP - 1:LP, :] = jnp.zeros((BB, H, 1, c1), compute_dtype)
    xpad_ref[:, 1:H + 1, LP + W:LP + W + 1, :] = jnp.zeros((BB, H, 1, c1), compute_dtype)
    xpad_ref[:, 1:H + 1, LP:LP + W, :] = a1                      # aligned interior store

    # ---- conv2: 9 accumulating MXU dots on statically shifted slices.
    acc2 = jnp.zeros((BB * HW, c2), jnp.float32)
    for t in range(9):
        ky, kx = divmod(t, 3)
        c0 = LP - 1 + kx
        patch = xpad_ref[:, ky:ky + H, c0:c0 + W, :].reshape(BB * HW, c1)
        acc2 = acc2 + jnp.dot(patch, w2_ref[t], preferred_element_type=jnp.float32)
    a2 = jnp.maximum(acc2 + b2_ref[...], 0.0)                    # (BB*HW, c2) f32

    # ---- global average pool (f32) + fc head (lane-padded to 128 outputs).
    feat = a2.reshape(BB, HW, c2).sum(axis=1) * (1.0 / HW)       # (BB, c2) f32
    logits = jnp.dot(feat.astype(compute_dtype), fcw_ref[...],
                     preferred_element_type=jnp.float32) + fcb_ref[...]
    out_ref[...] = logits.reshape(BB, 1, -1).astype(out_ref.dtype)


# ------------------------------- JAX wrapper -------------------------------- #

def color_classifier_forward(x_nchw, params, *, compute_dtype=jnp.bfloat16,
                             bb_max=8):
    """Pallas forward.  x: [B, 3, H, W] (NCHW, like PyTorch) -> logits [B, 10]."""
    B, cin, H, W = x_nchw.shape
    HW = H * W
    c1 = params["conv1_w"].shape[0]
    c2 = params["conv2_w"].shape[0]
    nout = params["fc_w"].shape[0]
    k1 = 9 * cin
    k1p = -(-k1 // 8) * 8                     # conv1 im2col K padded (27 -> 32)

    # Batch blocking: BB images per grid step; keep >=2 steps when B >= 2 so
    # both v7x TensorCores get work under dimension_semantics=("parallel",).
    bb = bb_max if B > bb_max else max(1, B // 2)
    n_blk = -(-B // bb)
    b_pad = n_blk * bb

    # ---- wrapper-side im2col for conv1 (pure layout plumbing, no arithmetic).
    x = jnp.transpose(x_nchw, (0, 2, 3, 1)).astype(jnp.float32)      # NCHW -> NHWC
    xh = jnp.pad(x, ((0, b_pad - B), (1, 1), (1, 1), (0, 0)))        # halo + batch pad
    taps = [xh[:, ky:ky + H, kx:kx + W, :] for ky in range(3) for kx in range(3)]
    patches = jnp.concatenate(taps, axis=-1).reshape(b_pad, HW, k1)
    patches = jnp.pad(patches, ((0, 0), (0, 0), (0, k1p - k1))).astype(compute_dtype)

    # ---- weights / biases (tap index t = ky*3 + kx everywhere).
    w1 = jnp.transpose(params["conv1_w"], (2, 3, 1, 0)).reshape(k1, c1)
    w1 = jnp.pad(w1, ((0, k1p - k1), (0, 0))).astype(compute_dtype)
    w2 = jnp.transpose(params["conv2_w"], (2, 3, 1, 0)).reshape(9, c1, c2)
    w2 = w2.astype(compute_dtype)
    b1 = params["conv1_b"].reshape(1, c1).astype(jnp.float32)
    b2 = params["conv2_b"].reshape(1, c2).astype(jnp.float32)
    fcw = jnp.pad(params["fc_w"].T, ((0, 0), (0, NOUT_PAD - nout))).astype(compute_dtype)
    fcb = jnp.pad(params["fc_b"], (0, NOUT_PAD - nout)).reshape(1, NOUT_PAD)
    fcb = fcb.astype(jnp.float32)

    # conv2 halo scratch: 1 row top/bottom, LP cols left (aligned interior
    # store), right-padded so the sublane extent is a multiple of 8.
    hp = H + 2
    wp = -(-(LP + W + 1) // 8) * 8

    out = pl.pallas_call(
        functools.partial(_fused_forward_kernel, H=H, W=W,
                          compute_dtype=compute_dtype),
        out_shape=jax.ShapeDtypeStruct((b_pad, 1, NOUT_PAD), jnp.float32),
        grid=(n_blk,),
        in_specs=[
            pl.BlockSpec((bb, HW, k1p), lambda g: (g, 0, 0)),      # im2col patches
            pl.BlockSpec((k1p, c1), lambda g: (0, 0)),             # conv1 w
            pl.BlockSpec((1, c1), lambda g: (0, 0)),               # conv1 b
            pl.BlockSpec((9, c1, c2), lambda g: (0, 0, 0)),        # conv2 w
            pl.BlockSpec((1, c2), lambda g: (0, 0)),               # conv2 b
            pl.BlockSpec((c2, NOUT_PAD), lambda g: (0, 0)),        # fc w
            pl.BlockSpec((1, NOUT_PAD), lambda g: (0, 0)),         # fc b
        ],
        out_specs=pl.BlockSpec((bb, 1, NOUT_PAD), lambda g: (g, 0, 0)),
        scratch_shapes=[pltpu.VMEM((bb, hp, wp, c1), compute_dtype)],
        compiler_params=pltpu.CompilerParams(
            dimension_semantics=("parallel",),
            vmem_limit_bytes=32 * 1024 * 1024),
    )(patches, w1, b1, w2, b2, fcw, fcb)
    return out[:B, 0, :nout]


# ------------------------------- reference ---------------------------------- #

def reference_forward(x_nchw, params):
    """Pure-JAX reference for correctness checking."""
    x = jnp.transpose(x_nchw, (0, 2, 3, 1))

    def conv(x, w, b):
        y = jax.lax.conv_general_dilated(
            x, jnp.transpose(w, (2, 3, 1, 0)), (1, 1), "SAME",
            dimension_numbers=("NHWC", "HWIO", "NHWC"))
        return jax.nn.relu(y + b)

    x = conv(x, params["conv1_w"], params["conv1_b"])
    x = conv(x, params["conv2_w"], params["conv2_b"])
    feat = jnp.mean(x, axis=(1, 2))
    return feat @ params["fc_w"].T + params["fc_b"]


def init_params(key, in_ch=3, dim=32, output_size=10):
    k1, k2, k3, k4, k5, k6 = jax.random.split(key, 6)
    return {
        "conv1_w": jax.random.normal(k1, (dim, in_ch, 3, 3), jnp.float32) * 0.1,
        "conv1_b": jax.random.normal(k2, (dim,), jnp.float32) * 0.01,
        "conv2_w": jax.random.normal(k3, (dim, dim, 3, 3), jnp.float32) * 0.05,
        "conv2_b": jax.random.normal(k4, (dim,), jnp.float32) * 0.01,
        "fc_w": jax.random.normal(k5, (output_size, dim), jnp.float32) * 0.1,
        "fc_b": jax.random.normal(k6, (output_size,), jnp.float32) * 0.01,
    }


if __name__ == "__main__":
    key = jax.random.PRNGKey(0)
    k_x, k_p, k_b = jax.random.split(key, 3)

    params = init_params(k_p)

    # Small image-classifier style input: batch=2, channels=3, spatial=16x16.
    x = jax.random.normal(k_x, (2, 3, 16, 16), jnp.float32)
    ref = jax.block_until_ready(reference_forward(x, params))

    # f32 MXU path (tight correctness check; works on all generations).
    fwd_f32 = jax.jit(functools.partial(color_classifier_forward,
                                        compute_dtype=jnp.float32))
    logits = jax.block_until_ready(fwd_f32(x, params))
    assert logits.shape == (2, 10) and logits.dtype == jnp.float32
    assert jnp.allclose(logits, ref, rtol=1e-3, atol=1e-3), (
        f"f32 max abs diff {jnp.max(jnp.abs(logits - ref))}")

    # bf16 MXU fast path (production default); epilogues stay f32.
    fwd_bf16 = jax.jit(color_classifier_forward)
    logits_bf16 = jax.block_until_ready(fwd_bf16(x, params))
    assert logits_bf16.shape == (2, 10)
    assert jnp.allclose(logits_bf16, ref, rtol=5e-2, atol=5e-2), (
        f"bf16 max abs diff {jnp.max(jnp.abs(logits_bf16 - ref))}")

    # Exercise the batched path (BB=8 images per grid step, 2 grid steps).
    xb = jax.random.normal(k_b, (16, 3, 16, 16), jnp.float32)
    refb = jax.block_until_ready(reference_forward(xb, params))
    logits_b = jax.block_until_ready(fwd_bf16(xb, params))
    assert logits_b.shape == (16, 10)
    assert jnp.allclose(logits_b, refb, rtol=5e-2, atol=5e-2), (
        f"bf16 batched max abs diff {jnp.max(jnp.abs(logits_b - refb))}")

    print("KERNEL_OK")
</pallas_src>

<mosaic_0001>
module attributes {stable_mosaic.version = 11 : i64} {
  func.func @_fused_forward_kernel(%arg0: i32, %arg1: memref<1x256x32xf32, #tpu.memory_space<vmem>>, %arg2: memref<32x32xf32, #tpu.memory_space<vmem>>, %arg3: memref<1x32xf32, #tpu.memory_space<vmem>>, %arg4: memref<9x32x32xf32, #tpu.memory_space<vmem>>, %arg5: memref<1x32xf32, #tpu.memory_space<vmem>>, %arg6: memref<32x128xf32, #tpu.memory_space<vmem>>, %arg7: memref<1x128xf32, #tpu.memory_space<vmem>>, %arg8: memref<1x1x128xf32, #tpu.memory_space<vmem>>, %arg9: memref<1x18x32x32xf32, #tpu.memory_space<vmem>>) attributes {dimension_semantics = [#tpu.dimension_semantics<parallel>], iteration_bounds = array<i64: 2>, scalar_prefetch = 0 : i64, scratch_operands = 1 : i64, tpu.core_type = #tpu.core_type<tc>, window_params = [{transform_indices = @transform_0, window_bounds = array<i64: 1, 256, 32>}, {pipeline_mode = #tpu.pipeline_mode<synchronous>, transform_indices = @transform_1, window_bounds = array<i64: 32, 32>}, {pipeline_mode = #tpu.pipeline_mode<synchronous>, transform_indices = @transform_2, window_bounds = array<i64: 1, 32>}, {pipeline_mode = #tpu.pipeline_mode<synchronous>, transform_indices = @transform_3, window_bounds = array<i64: 9, 32, 32>}, {pipeline_mode = #tpu.pipeline_mode<synchronous>, transform_indices = @transform_4, window_bounds = array<i64: 1, 32>}, {pipeline_mode = #tpu.pipeline_mode<synchronous>, transform_indices = @transform_5, window_bounds = array<i64: 32, 128>}, {pipeline_mode = #tpu.pipeline_mode<synchronous>, transform_indices = @transform_6, window_bounds = array<i64: 1, 128>}, {transform_indices = @transform_7, window_bounds = array<i64: 1, 1, 128>}]} {
    %c0 = arith.constant 0 : index
    %c0_0 = arith.constant 0 : index
    %c0_1 = arith.constant 0 : index
    %0 = vector.load %arg1[%c0, %c0_0, %c0_1] : memref<1x256x32xf32, #tpu.memory_space<vmem>>, vector<1x256x32xf32>
    %1 = vector.shape_cast %0 : vector<1x256x32xf32> to vector<256x32xf32>
    %c0_2 = arith.constant 0 : index
    %c0_3 = arith.constant 0 : index
    %2 = vector.load %arg2[%c0_2, %c0_3] : memref<32x32xf32, #tpu.memory_space<vmem>>, vector<32x32xf32>
    %cst = arith.constant dense<0.000000e+00> : vector<256x32xf32>
    %3 = tpu.matmul %1, %2, %cst {dimension_numbers = #tpu.dot_dimension_numbers<[1], [0], [0], [1], [0, 0, 1, 1], [], []>} : vector<256x32xf32>, vector<32x32xf32>, vector<256x32xf32> -> vector<256x32xf32>
    %c0_4 = arith.constant 0 : index
    %c0_5 = arith.constant 0 : index
    %4 = vector.load %arg3[%c0_4, %c0_5] : memref<1x32xf32, #tpu.memory_space<vmem>>, vector<1x32xf32>
    %5 = vector.broadcast %4 : vector<1x32xf32> to vector<256x32xf32>
    %6 = arith.addf %3, %5 : vector<256x32xf32>
    %cst_6 = arith.constant 0.000000e+00 : f32
    %7 = vector.broadcast %cst_6 : f32 to vector<256x32xf32>
    %8 = arith.maximumf %6, %7 : vector<256x32xf32>
    %9 = vector.shape_cast %8 : vector<256x32xf32> to vector<1x16x16x32xf32>
    %cst_7 = arith.constant 0.000000e+00 : f32
    %10 = vector.broadcast %cst_7 : f32 to vector<1x1x18x32xf32>
    %c0_8 = arith.constant 0 : index
    %c0_9 = arith.constant 0 : index
    %c7 = arith.constant 7 : index
    %c0_10 = arith.constant 0 : index
    %11 = vector.load %arg9[%c0_8, %c0_9, %c7, %c0_10] : memref<1x18x32x32xf32, #tpu.memory_space<vmem>>, vector<1x1x18x32xf32>
    tpu.vector_store %arg9[%c0_8, %c0_9, %c7, %c0_10], %10 {strides = array<i32>} : memref<1x18x32x32xf32, #tpu.memory_space<vmem>>, vector<1x1x18x32xf32>,
    %cst_11 = arith.constant 0.000000e+00 : f32
    %12 = vector.broadcast %cst_11 : f32 to vector<1x1x18x32xf32>
    %c0_12 = arith.constant 0 : index
    %c17 = arith.constant 17 : index
    %c7_13 = arith.constant 7 : index
    %c0_14 = arith.constant 0 : index
    %13 = vector.load %arg9[%c0_12, %c17, %c7_13, %c0_14] : memref<1x18x32x32xf32, #tpu.memory_space<vmem>>, vector<1x1x18x32xf32>
    tpu.vector_store %arg9[%c0_12, %c17, %c7_13, %c0_14], %12 {strides = array<i32>} : memref<1x18x32x32xf32, #tpu.memory_space<vmem>>, vector<1x1x18x32xf32>,
    %cst_15 = arith.constant 0.000000e+00 : f32
    %14 = vector.broadcast %cst_15 : f32 to vector<1x16x1x32xf32>
    %c0_16 = arith.constant 0 : index
    %c1 = arith.constant 1 : index
    %c7_17 = arith.constant 7 : index
    %c0_18 = arith.constant 0 : index
    %15 = vector.load %arg9[%c0_16, %c1, %c7_17, %c0_18] : memref<1x18x32x32xf32, #tpu.memory_space<vmem>>, vector<1x16x1x32xf32>
    tpu.vector_store %arg9[%c0_16, %c1, %c7_17, %c0_18], %14 {strides = array<i32>} : memref<1x18x32x32xf32, #tpu.memory_space<vmem>>, vector<1x16x1x32xf32>,
    %cst_19 = arith.constant 0.000000e+00 : f32
    %16 = vector.broadcast %cst_19 : f32 to vector<1x16x1x32xf32>
    %c0_20 = arith.constant 0 : index
    %c1_21 = arith.constant 1 : index
    %c24 = arith.constant 24 : index
    %c0_22 = arith.constant 0 : index
    %17 = vector.load %arg9[%c0_20, %c1_21, %c24, %c0_22] : memref<1x18x32x32xf32, #tpu.memory_space<vmem>>, vector<1x16x1x32xf32>
    tpu.vector_store %arg9[%c0_20, %c1_21, %c24, %c0_22], %16 {strides = array<i32>} : memref<1x18x32x32xf32, #tpu.memory_space<vmem>>, vector<1x16x1x32xf32>,
    %c0_23 = arith.constant 0 : index
    %c1_24 = arith.constant 1 : index
    %c8 = arith.constant 8 : index
    %c0_25 = arith.constant 0 : index
    %18 = vector.load %arg9[%c0_23, %c1_24, %c8, %c0_25] : memref<1x18x32x32xf32, #tpu.memory_space<vmem>>, vector<1x16x16x32xf32>
    tpu.vector_store %arg9[%c0_23, %c1_24, %c8, %c0_25], %9 {strides = array<i32>} : memref<1x18x32x32xf32, #tpu.memory_space<vmem>>, vector<1x16x16x32xf32>,
    %cst_26 = arith.constant 0.000000e+00 : f32
    %19 = vector.broadcast %cst_26 : f32 to vector<256x32xf32>
    %c0_27 = arith.constant 0 : index
    %c0_28 = arith.constant 0 : index
    %c7_29 = arith.constant 7 : index
    %c0_30 = arith.constant 0 : index
    %20 = vector.load %arg9[%c0_27, %c0_28, %c7_29, %c0_30] : memref<1x18x32x32xf32, #tpu.memory_space<vmem>>, vector<1x16x16x32xf32>
    %21 = vector.shape_cast %20 : vector<1x16x16x32xf32> to vector<256x32xf32>
    %c0_31 = arith.constant 0 : index
    %c0_32 = arith.constant 0 : index
    %c0_33 = arith.constant 0 : index
    %22 = vector.load %arg4[%c0_31, %c0_32, %c0_33] : memref<9x32x32xf32, #tpu.memory_space<vmem>>, vector<1x32x32xf32>
    %23 = vector.shape_cast %22 : vector<1x32x32xf32> to vector<32x32xf32>
    %cst_34 = arith.constant dense<0.000000e+00> : vector<256x32xf32>
    %24 = tpu.matmul %21, %23, %cst_34 {dimension_numbers = #tpu.dot_dimension_numbers<[1], [0], [0], [1], [0, 0, 1, 1], [], []>} : vector<256x32xf32>, vector<32x32xf32>, vector<256x32xf32> -> vector<256x32xf32>
    %25 = arith.addf %19, %24 : vector<256x32xf32>
    %c0_35 = arith.constant 0 : index
    %c0_36 = arith.constant 0 : index
    %c8_37 = arith.constant 8 : index
    %c0_38 = arith.constant 0 : index
    %26 = vector.load %arg9[%c0_35, %c0_36, %c8_37, %c0_38] : memref<1x18x32x32xf32, #tpu.memory_space<vmem>>, vector<1x16x16x32xf32>
    %27 = vector.shape_cast %26 : vector<1x16x16x32xf32> to vector<256x32xf32>
    %c1_39 = arith.constant 1 : index
    %c0_40 = arith.constant 0 : index
    %c0_41 = arith.constant 0 : index
    %28 = vector.load %arg4[%c1_39, %c0_40, %c0_41] : memref<9x32x32xf32, #tpu.memory_space<vmem>>, vector<1x32x32xf32>
    %29 = vector.shape_cast %28 : vector<1x32x32xf32> to vector<32x32xf32>
    %cst_42 = arith.constant dense<0.000000e+00> : vector<256x32xf32>
    %30 = tpu.matmul %27, %29, %cst_42 {dimension_numbers = #tpu.dot_dimension_numbers<[1], [0], [0], [1], [0, 0, 1, 1], [], []>} : vector<256x32xf32>, vector<32x32xf32>, vector<256x32xf32> -> vector<256x32xf32>
    %31 = arith.addf %25, %30 : vector<256x32xf32>
    %c0_43 = arith.constant 0 : index
    %c0_44 = arith.constant 0 : index
    %c9 = arith.constant 9 : index
    %c0_45 = arith.constant 0 : index
    %32 = vector.load %arg9[%c0_43, %c0_44, %c9, %c0_45] : memref<1x18x32x32xf32, #tpu.memory_space<vmem>>, vector<1x16x16x32xf32>
    %33 = vector.shape_cast %32 : vector<1x16x16x32xf32> to vector<256x32xf32>
    %c2 = arith.constant 2 : index
    %c0_46 = arith.constant 0 : index
    %c0_47 = arith.constant 0 : index
    %34 = vector.load %arg4[%c2, %c0_46, %c0_47] : memref<9x32x32xf32, #tpu.memory_space<vmem>>, vector<1x32x32xf32>
    %35 = vector.shape_cast %34 : vector<1x32x32xf32> to vector<32x32xf32>
    %cst_48 = arith.constant dense<0.000000e+00> : vector<256x32xf32>
    %36 = tpu.matmul %33, %35, %cst_48 {dimension_numbers = #tpu.dot_dimension_numbers<[1], [0], [0], [1], [0, 0, 1, 1], [], []>} : vector<256x32xf32>, vector<32x32xf32>, vector<256x32xf32> -> vector<256x32xf32>
    %37 = arith.addf %31, %36 : vector<256x32xf32>
    %c0_49 = arith.constant 0 : index
    %c1_50 = arith.constant 1 : index
    %c7_51 = arith.constant 7 : index
    %c0_52 = arith.constant 0 : index
    %38 = vector.load %arg9[%c0_49, %c1_50, %c7_51, %c0_52] : memref<1x18x32x32xf32, #tpu.memory_space<vmem>>, vector<1x16x16x32xf32>
    %39 = vector.shape_cast %38 : vector<1x16x16x32xf32> to vector<256x32xf32>
    %c3 = arith.constant 3 : index
    %c0_53 = arith.constant 0 : index
    %c0_54 = arith.constant 0 : index
    %40 = vector.load %arg4[%c3, %c0_53, %c0_54] : memref<9x32x32xf32, #tpu.memory_space<vmem>>, vector<1x32x32xf32>
    %41 = vector.shape_cast %40 : vector<1x32x32xf32> to vector<32x32xf32>
    %cst_55 = arith.constant dense<0.000000e+00> : vector<256x32xf32>
    %42 = tpu.matmul %39, %41, %cst_55 {dimension_numbers = #tpu.dot_dimension_numbers<[1], [0], [0], [1], [0, 0, 1, 1], [], []>} : vector<256x32xf32>, vector<32x32xf32>, vector<256x32xf32> -> vector<256x32xf32>
    %43 = arith.addf %37, %42 : vector<256x32xf32>
    %c0_56 = arith.constant 0 : index
    %c1_57 = arith.constant 1 : index
    %c8_58 = arith.constant 8 : index
    %c0_59 = arith.constant 0 : index
    %44 = vector.load %arg9[%c0_56, %c1_57, %c8_58, %c0_59] : memref<1x18x32x32xf32, #tpu.memory_space<vmem>>, vector<1x16x16x32xf32>
    %45 = vector.shape_cast %44 : vector<1x16x16x32xf32> to vector<256x32xf32>
    %c4 = arith.constant 4 : index
    %c0_60 = arith.constant 0 : index
    %c0_61 = arith.constant 0 : index
    %46 = vector.load %arg4[%c4, %c0_60, %c0_61] : memref<9x32x32xf32, #tpu.memory_space<vmem>>, vector<1x32x32xf32>
    %47 = vector.shape_cast %46 : vector<1x32x32xf32> to vector<32x32xf32>
    %cst_62 = arith.constant dense<0.000000e+00> : vector<256x32xf32>
    %48 = tpu.matmul %45, %47, %cst_62 {dimension_numbers = #tpu.dot_dimension_numbers<[1], [0], [0], [1], [0, 0, 1, 1], [], []>} : vector<256x32xf32>, vector<32x32xf32>, vector<256x32xf32> -> vector<256x32xf32>
    %49 = arith.addf %43, %48 : vector<256x32xf32>
    %c0_63 = arith.constant 0 : index
    %c1_64 = arith.constant 1 : index
    %c9_65 = arith.constant 9 : index
    %c0_66 = arith.constant 0 : index
    %50 = vector.load %arg9[%c0_63, %c1_64, %c9_65, %c0_66] : memref<1x18x32x32xf32, #tpu.memory_space<vmem>>, vector<1x16x16x32xf32>
    %51 = vector.shape_cast %50 : vector<1x16x16x32xf32> to vector<256x32xf32>
    %c5 = arith.constant 5 : index
    %c0_67 = arith.constant 0 : index
    %c0_68 = arith.constant 0 : index
    %52 = vector.load %arg4[%c5, %c0_67, %c0_68] : memref<9x32x32xf32, #tpu.memory_space<vmem>>, vector<1x32x32xf32>
    %53 = vector.shape_cast %52 : vector<1x32x32xf32> to vector<32x32xf32>
    %cst_69 = arith.constant dense<0.000000e+00> : vector<256x32xf32>
    %54 = tpu.matmul %51, %53, %cst_69 {dimension_numbers = #tpu.dot_dimension_numbers<[1], [0], [0], [1], [0, 0, 1, 1], [], []>} : vector<256x32xf32>, vector<32x32xf32>, vector<256x32xf32> -> vector<256x32xf32>
    %55 = arith.addf %49, %54 : vector<256x32xf32>
    %c0_70 = arith.constant 0 : index
    %c2_71 = arith.constant 2 : index
    %c7_72 = arith.constant 7 : index
    %c0_73 = arith.constant 0 : index
    %56 = vector.load %arg9[%c0_70, %c2_71, %c7_72, %c0_73] : memref<1x18x32x32xf32, #tpu.memory_space<vmem>>, vector<1x16x16x32xf32>
    %57 = vector.shape_cast %56 : vector<1x16x16x32xf32> to vector<256x32xf32>
    %c6 = arith.constant 6 : index
    %c0_74 = arith.constant 0 : index
    %c0_75 = arith.constant 0 : index
    %58 = vector.load %arg4[%c6, %c0_74, %c0_75] : memref<9x32x32xf32, #tpu.memory_space<vmem>>, vector<1x32x32xf32>
    %59 = vector.shape_cast %58 : vector<1x32x32xf32> to vector<32x32xf32>
    %cst_76 = arith.constant dense<0.000000e+00> : vector<256x32xf32>
    %60 = tpu.matmul %57, %59, %cst_76 {dimension_numbers = #tpu.dot_dimension_numbers<[1], [0], [0], [1], [0, 0, 1, 1], [], []>} : vector<256x32xf32>, vector<32x32xf32>, vector<256x32xf32> -> vector<256x32xf32>
    %61 = arith.addf %55, %60 : vector<256x32xf32>
    %c0_77 = arith.constant 0 : index
    %c2_78 = arith.constant 2 : index
    %c8_79 = arith.constant 8 : index
    %c0_80 = arith.constant 0 : index
    %62 = vector.load %arg9[%c0_77, %c2_78, %c8_79, %c0_80] : memref<1x18x32x32xf32, #tpu.memory_space<vmem>>, vector<1x16x16x32xf32>
    %63 = vector.shape_cast %62 : vector<1x16x16x32xf32> to vector<256x32xf32>
    %c7_81 = arith.constant 7 : index
    %c0_82 = arith.constant 0 : index
    %c0_83 = arith.constant 0 : index
    %64 = vector.load %arg4[%c7_81, %c0_82, %c0_83] : memref<9x32x32xf32, #tpu.memory_space<vmem>>, vector<1x32x32xf32>
    %65 = vector.shape_cast %64 : vector<1x32x32xf32> to vector<32x32xf32>
    %cst_84 = arith.constant dense<0.000000e+00> : vector<256x32xf32>
    %66 = tpu.matmul %63, %65, %cst_84 {dimension_numbers = #tpu.dot_dimension_numbers<[1], [0], [0], [1], [0, 0, 1, 1], [], []>} : vector<256x32xf32>, vector<32x32xf32>, vector<256x32xf32> -> vector<256x32xf32>
    %67 = arith.addf %61, %66 : vector<256x32xf32>
    %c0_85 = arith.constant 0 : index
    %c2_86 = arith.constant 2 : index
    %c9_87 = arith.constant 9 : index
    %c0_88 = arith.constant 0 : index
    %68 = vector.load %arg9[%c0_85, %c2_86, %c9_87, %c0_88] : memref<1x18x32x32xf32, #tpu.memory_space<vmem>>, vector<1x16x16x32xf32>
    %69 = vector.shape_cast %68 : vector<1x16x16x32xf32> to vector<256x32xf32>
    %c8_89 = arith.constant 8 : index
    %c0_90 = arith.constant 0 : index
    %c0_91 = arith.constant 0 : index
    %70 = vector.load %arg4[%c8_89, %c0_90, %c0_91] : memref<9x32x32xf32, #tpu.memory_space<vmem>>, vector<1x32x32xf32>
    %71 = vector.shape_cast %70 : vector<1x32x32xf32> to vector<32x32xf32>
    %cst_92 = arith.constant dense<0.000000e+00> : vector<256x32xf32>
    %72 = tpu.matmul %69, %71, %cst_92 {dimension_numbers = #tpu.dot_dimension_numbers<[1], [0], [0], [1], [0, 0, 1, 1], [], []>} : vector<256x32xf32>, vector<32x32xf32>, vector<256x32xf32> -> vector<256x32xf32>
    %73 = arith.addf %67, %72 : vector<256x32xf32>
    %c0_93 = arith.constant 0 : index
    %c0_94 = arith.constant 0 : index
    %74 = vector.load %arg5[%c0_93, %c0_94] : memref<1x32xf32, #tpu.memory_space<vmem>>, vector<1x32xf32>
    %75 = vector.broadcast %74 : vector<1x32xf32> to vector<256x32xf32>
    %76 = arith.addf %73, %75 : vector<256x32xf32>
    %cst_95 = arith.constant 0.000000e+00 : f32
    %77 = vector.broadcast %cst_95 : f32 to vector<256x32xf32>
    %78 = arith.maximumf %76, %77 : vector<256x32xf32>
    %79 = vector.shape_cast %78 : vector<256x32xf32> to vector<1x256x32xf32>
    %cst_96 = arith.constant dense<0.000000e+00> : vector<1x32xf32>
    %80 = vector.multi_reduction <add>, %79, %cst_96 [1] : vector<1x256x32xf32> to vector<1x32xf32>
    %cst_97 = arith.constant 3.906250e-03 : f32
    %81 = vector.broadcast %cst_97 : f32 to vector<1x32xf32>
    %82 = arith.mulf %80, %81 : vector<1x32xf32>
    %c0_98 = arith.constant 0 : index
    %c0_99 = arith.constant 0 : index
    %83 = vector.load %arg6[%c0_98, %c0_99] : memref<32x128xf32, #tpu.memory_space<vmem>>, vector<32x128xf32>
    %cst_100 = arith.constant dense<0.000000e+00> : vector<1x128xf32>
    %84 = tpu.matmul %82, %83, %cst_100 {dimension_numbers = #tpu.dot_dimension_numbers<[1], [0], [0], [1], [0, 0, 1, 1], [], []>} : vector<1x32xf32>, vector<32x128xf32>, vector<1x128xf32> -> vector<1x128xf32>
    %c0_101 = arith.constant 0 : index
    %c0_102 = arith.constant 0 : index
    %85 = vector.load %arg7[%c0_101, %c0_102] : memref<1x128xf32, #tpu.memory_space<vmem>>, vector<1x128xf32>
    %86 = arith.addf %84, %85 : vector<1x128xf32>
    %87 = vector.shape_cast %86 : vector<1x128xf32> to vector<1x1x128xf32>
    %c0_103 = arith.constant 0 : index
    %c0_104 = arith.constant 0 : index
    %c0_105 = arith.constant 0 : index
    %88 = vector.load %arg8[%c0_103, %c0_104, %c0_105] : memref<1x1x128xf32, #tpu.memory_space<vmem>>, vector<1x1x128xf32>
    tpu.vector_store %arg8[%c0_103, %c0_104, %c0_105], %87 {strides = array<i32>} : memref<1x1x128xf32, #tpu.memory_space<vmem>>, vector<1x1x128xf32>,
    return
  }
  func.func @transform_0(%arg0: i32) -> (i32, i32, i32) {
    %c0_i32 = arith.constant 0 : i32
    %c0_i32_0 = arith.constant 0 : i32
    %c0_i32_1 = arith.constant 0 : i32
    return %arg0, %c0_i32, %c0_i32_0 : i32, i32, i32
  }
  func.func @transform_1(%arg0: i32) -> (i32, i32) {
    %c0_i32 = arith.constant 0 : i32
    %c0_i32_0 = arith.constant 0 : i32
    %c0_i32_1 = arith.constant 0 : i32
    return %c0_i32, %c0_i32_0 : i32, i32
  }
  func.func @transform_2(%arg0: i32) -> (i32, i32) {
    %c0_i32 = arith.constant 0 : i32
    %c0_i32_0 = arith.constant 0 : i32
    %c0_i32_1 = arith.constant 0 : i32
    return %c0_i32, %c0_i32_0 : i32, i32
  }
  func.func @transform_3(%arg0: i32) -> (i32, i32, i32) {
    %c0_i32 = arith.constant 0 : i32
    %c0_i32_0 = arith.constant 0 : i32
    %c0_i32_1 = arith.constant 0 : i32
    %c0_i32_2 = arith.constant 0 : i32
    return %c0_i32, %c0_i32_0, %c0_i32_1 : i32, i32, i32
  }
  func.func @transform_4(%arg0: i32) -> (i32, i32) {
    %c0_i32 = arith.constant 0 : i32
    %c0_i32_0 = arith.constant 0 : i32
    %c0_i32_1 = arith.constant 0 : i32
    return %c0_i32, %c0_i32_0 : i32, i32
  }
  func.func @transform_5(%arg0: i32) -> (i32, i32) {
    %c0_i32 = arith.constant 0 : i32
    %c0_i32_0 = arith.constant 0 : i32
    %c0_i32_1 = arith.constant 0 : i32
    return %c0_i32, %c0_i32_0 : i32, i32
  }
  func.func @transform_6(%arg0: i32) -> (i32, i32) {
    %c0_i32 = arith.constant 0 : i32
    %c0_i32_0 = arith.constant 0 : i32
    %c0_i32_1 = arith.constant 0 : i32
    return %c0_i32, %c0_i32_0 : i32, i32
  }
  func.func @transform_7(%arg0: i32) -> (i32, i32, i32) {
    %c0_i32 = arith.constant 0 : i32
    %c0_i32_0 = arith.constant 0 : i32
    %c0_i32_1 = arith.constant 0 : i32
    return %arg0, %c0_i32, %c0_i32_0 : i32, i32, i32
  }
}

</mosaic_0001>

<llo_original>
// kernel: color_classifier_forward.1
$region0: #{color_classifier_forward.1}
  #allocation0 [shape = 'u32[]', space=smem, size = 0x4, offset = 0x4, fixed_abs, tag = 'smem constant byte address 0x4 - core index']
  #allocation1 [shape = 'u32[144,128]{1,0:T(1,128)}', space=vmem, size = 0x12000, scoped, tag = 'internal scratch']
  #allocation2 [shape = 'f32[1,18,32,32]{3,2,1,0:T(8,128)}', space=vmem, size = 0x48000, scoped, tag = 'scratch operand']
  %s0 = inlined_call_operand.vmem [shape: f32[2,256,32], index: 0, kind: input, shape index: {}]
  %s1 = inlined_call_operand.vmem [shape: f32[32,32], index: 1, kind: input, shape index: {}]
  %s2 = inlined_call_operand.vmem [shape: f32[1,32], index: 2, kind: input, shape index: {}]
  %s3 = inlined_call_operand.vmem [shape: f32[9,32,32], index: 3, kind: input, shape index: {}]
  %s4 = inlined_call_operand.vmem [shape: f32[1,32], index: 4, kind: input, shape index: {}]
  %s5 = inlined_call_operand.vmem [shape: f32[32,128], index: 5, kind: input, shape index: {}]
  %s6 = inlined_call_operand.vmem [shape: f32[1,128], index: 6, kind: input, shape index: {}]
  %s7 = inlined_call_operand.hbm [shape: f32[2,1,128], index: 7, kind: output, shape index: {}]
  %s8 = sld [smem:[#allocation0]]
  $region61: #{color_classifier_forward.1} parent=0
    _
  %s10 = ssub.s32 1, %s8
  %s11 = scalar_select 0, %s10, %s8
  $region1: #{color_classifier_forward.1} parent=0
    #allocation3 [shape = 'u8[1024]{0}', space=vmem, size = 0x400, scoped, tag = 'output window, operand 0']
    #allocation4 [shape = 's32[2]{0}', space=sflag, size = 0x8, scoped, tag = 'scoped memory for color_classifier_forward.1']
    %12 = vsyncpa [#allocation4], 0
    %s13 = scalar_lea.sflag [#allocation4], 1
    %14 = vsyncpa %s13, 0
    loop: start=0, step=1, limit=4
    $region2: #{color_classifier_forward.1} parent=1 // loop_pre_header
      _
    $region3: #{color_classifier_forward.1} parent=1 // loop_header
      %s16 = sphi 0, %s20
      %p17 = scmp.ge.s32.totalorder %s16, 4
      %s26 = sphi 0, %s28
      %s29 = sphi 0, %s26
      %s30 = sphi 0, %s29
      %s46 = sphi 0, %s30
      %s50 = sphi 0, %s50
      %s52 = sphi 0, %s50
      %s53 = sphi 0, %s52
      %s67 = sphi 0, %s53
      %s71 = sphi 0, %s71
      %s73 = sphi 0, %s71
      %s74 = sphi 0, %s73
      %s88 = sphi 0, %s74
      %s92 = sphi 0, %s92
      %s94 = sphi 0, %s92
      %s95 = sphi 0, %s94
      %s109 = sphi 0, %s95
      %s113 = sphi 0, %s113
      %s115 = sphi 0, %s113
      %s116 = sphi 0, %s115
      %s130 = sphi 0, %s116
      %s134 = sphi 0, %s134
      %s136 = sphi 0, %s134
      %s137 = sphi 0, %s136
      %s151 = sphi 0, %s137
      %s155 = sphi 0, %s155
      %s157 = sphi 0, %s155
      %s158 = sphi 0, %s157
      %s172 = sphi 0, %s158
      %s178 = sphi 0, %s180
      %s181 = sphi 0, %s178
      %s182 = sphi 0, %s181
      %s198 = sphi 0, %s182
    $region4: #{color_classifier_forward.1} parent=1 // loop_header_branch
      %19 = sbr.rel (%p17) target = $region8
    $region5: #{color_classifier_forward.1} parent=1 // loop_body
      %s21 = ssub.s32 %s16, 1
      %s22 = ssub.s32 %s16, 2
      %s23 = sadd.s32 %s16, 1
      %s24 = ssub.s32 %s16, %s23
      %p25 = scmp.eq.s32.totalorder %s24, 0
      %s27 = sadd.s32 %s26, 1
      %s28 = scalar_select %p25, %s26, %s27
      %p31 = pneg %p25
      %p32 = scmp.eq.s32.totalorder %s16, 1
      %p33 = por %p31, %p32
      %p34 = scmp.ne.s32.totalorder %s26, %s29
      %p35 = scmp.eq.s32.totalorder %s16, 0
      %p36 = por %p34, %p35
      %p37 = scmp.ne.s32.totalorder %s26, %s29
      %p38 = scmp.eq.s32.totalorder %s21, 1
      %p39 = por %p37, %p38
      %p40 = scmp.ne.s32.totalorder %s29, %s30
      %p41 = scmp.eq.s32.totalorder %s21, 0
      %p42 = por %p40, %p41
      %p43 = scmp.ne.s32.totalorder %s29, %s30
      %p44 = scmp.eq.s32.totalorder %s22, 1
      %p45 = por %p43, %p44
      %p47 = scmp.ne.s32.totalorder %s30, %s46
      %p48 = scmp.eq.s32.totalorder %s22, 0
      %p49 = por %p47, %p48
      %s51 = sadd.s32 %s50, 1
      %p54 = scmp.eq.s32.totalorder %s16, 1
      %p55 = scmp.ne.s32.totalorder %s50, %s52
      %p56 = scmp.eq.s32.totalorder %s16, 0
      %p57 = por %p55, %p56
      %p58 = scmp.ne.s32.totalorder %s50, %s52
      %p59 = scmp.eq.s32.totalorder %s21, 1
      %p60 = por %p58, %p59
      %p61 = scmp.ne.s32.totalorder %s52, %s53
      %p62 = scmp.eq.s32.totalorder %s21, 0
      %p63 = por %p61, %p62
      %p64 = scmp.ne.s32.totalorder %s52, %s53
      %p65 = scmp.eq.s32.totalorder %s22, 1
      %p66 = por %p64, %p65
      %p68 = scmp.ne.s32.totalorder %s53, %s67
      %p69 = scmp.eq.s32.totalorder %s22, 0
      %p70 = por %p68, %p69
      %s72 = sadd.s32 %s71, 1
      %p75 = scmp.eq.s32.totalorder %s16, 1
      %p76 = scmp.ne.s32.totalorder %s71, %s73
      %p77 = scmp.eq.s32.totalorder %s16, 0
      %p78 = por %p76, %p77
      %p79 = scmp.ne.s32.totalorder %s71, %s73
      %p80 = scmp.eq.s32.totalorder %s21, 1
      %p81 = por %p79, %p80
      %p82 = scmp.ne.s32.totalorder %s73, %s74
      %p83 = scmp.eq.s32.totalorder %s21, 0
      %p84 = por %p82, %p83
      %p85 = scmp.ne.s32.totalorder %s73, %s74
      %p86 = scmp.eq.s32.totalorder %s22, 1
      %p87 = por %p85, %p86
      %p89 = scmp.ne.s32.totalorder %s74, %s88
      %p90 = scmp.eq.s32.totalorder %s22, 0
      %p91 = por %p89, %p90
      %s93 = sadd.s32 %s92, 1
      %p96 = scmp.eq.s32.totalorder %s16, 1
      %p97 = scmp.ne.s32.totalorder %s92, %s94
      %p98 = scmp.eq.s32.totalorder %s16, 0
      %p99 = por %p97, %p98
      %p100 = scmp.ne.s32.totalorder %s92, %s94
      %p101 = scmp.eq.s32.totalorder %s21, 1
      %p102 = por %p100, %p101
      %p103 = scmp.ne.s32.totalorder %s94, %s95
      %p104 = scmp.eq.s32.totalorder %s21, 0
      %p105 = por %p103, %p104
      %p106 = scmp.ne.s32.totalorder %s94, %s95
      %p107 = scmp.eq.s32.totalorder %s22, 1
      %p108 = por %p106, %p107
      %p110 = scmp.ne.s32.totalorder %s95, %s109
      %p111 = scmp.eq.s32.totalorder %s22, 0
      %p112 = por %p110, %p111
      %s114 = sadd.s32 %s113, 1
      %p117 = scmp.eq.s32.totalorder %s16, 1
      %p118 = scmp.ne.s32.totalorder %s113, %s115
      %p119 = scmp.eq.s32.totalorder %s16, 0
      %p120 = por %p118, %p119
      %p121 = scmp.ne.s32.totalorder %s113, %s115
      %p122 = scmp.eq.s32.totalorder %s21, 1
      %p123 = por %p121, %p122
      %p124 = scmp.ne.s32.totalorder %s115, %s116
      %p125 = scmp.eq.s32.totalorder %s21, 0
      %p126 = por %p124, %p125
      %p127 = scmp.ne.s32.totalorder %s115, %s116
      %p128 = scmp.eq.s32.totalorder %s22, 1
      %p129 = por %p127, %p128
      %p131 = scmp.ne.s32.totalorder %s116, %s130
      %p132 = scmp.eq.s32.totalorder %s22, 0
      %p133 = por %p131, %p132
      %s135 = sadd.s32 %s134, 1
      %p138 = scmp.eq.s32.totalorder %s16, 1
      %p139 = scmp.ne.s32.totalorder %s134, %s136
      %p140 = scmp.eq.s32.totalorder %s16, 0
      %p141 = por %p139, %p140
      %p142 = scmp.ne.s32.totalorder %s134, %s136
      %p143 = scmp.eq.s32.totalorder %s21, 1
      %p144 = por %p142, %p143
      %p145 = scmp.ne.s32.totalorder %s136, %s137
      %p146 = scmp.eq.s32.totalorder %s21, 0
      %p147 = por %p145, %p146
      %p148 = scmp.ne.s32.totalorder %s136, %s137
      %p149 = scmp.eq.s32.totalorder %s22, 1
      %p150 = por %p148, %p149
      %p152 = scmp.ne.s32.totalorder %s137, %s151
      %p153 = scmp.eq.s32.totalorder %s22, 0
      %p154 = por %p152, %p153
      %s156 = sadd.s32 %s155, 1
      %p159 = scmp.eq.s32.totalorder %s16, 1
      %p160 = scmp.ne.s32.totalorder %s155, %s157
      %p161 = scmp.eq.s32.totalorder %s16, 0
      %p162 = por %p160, %p161
      %p163 = scmp.ne.s32.totalorder %s155, %s157
      %p164 = scmp.eq.s32.totalorder %s21, 1
      %p165 = por %p163, %p164
      %p166 = scmp.ne.s32.totalorder %s157, %s158
      %p167 = scmp.eq.s32.totalorder %s21, 0
      %p168 = por %p166, %p167
      %p169 = scmp.ne.s32.totalorder %s157, %s158
      %p170 = scmp.eq.s32.totalorder %s22, 1
      %p171 = por %p169, %p170
      %p173 = scmp.ne.s32.totalorder %s158, %s172
      %p174 = scmp.eq.s32.totalorder %s22, 0
      %p175 = por %p173, %p174
      %s176 = ssub.s32 %s16, %s23
      %p177 = scmp.eq.s32.totalorder %s176, 0
      %s179 = sadd.s32 %s178, 1
      %s180 = scalar_select %p177, %s178, %s179
      %p183 = pneg %p177
      %p184 = scmp.eq.s32.totalorder %s16, 1
      %p185 = por %p183, %p184
      %p186 = scmp.ne.s32.totalorder %s178, %s181
      %p187 = scmp.eq.s32.totalorder %s16, 0
      %p188 = por %p186, %p187
      %p189 = scmp.ne.s32.totalorder %s178, %s181
      %p190 = scmp.eq.s32.totalorder %s21, 1
      %p191 = por %p189, %p190
      %p192 = scmp.ne.s32.totalorder %s181, %s182
      %p193 = scmp.eq.s32.totalorder %s21, 0
      %p194 = por %p192, %p193
      %p195 = scmp.ne.s32.totalorder %s181, %s182
      %p196 = scmp.eq.s32.totalorder %s22, 1
      %p197 = por %p195, %p196
      %p199 = scmp.ne.s32.totalorder %s182, %s198
      %p200 = scmp.eq.s32.totalorder %s22, 0
      %p201 = por %p199, %p200
      %p202 = scmp.le.s32.totalorder 1, %s16
      %p203 = scmp.lt.s32.totalorder %s16, 3
      %p204 = pnand %p202, %p203
      %p205 = pneg %p204
      // Predicated region
      $region9: #{color_classifier_forward.1} parent=5 // pred_check
        _
      $region10: #{color_classifier_forward.1} parent=5 // pred_check_branch
        %207 = sbr.rel (%p204) target = $region12
      $region11: #{color_classifier_forward.1} parent=5 // pred_region
        %s208 = ssub.s32 %s16, 1
        // Predicated region
        $region13: #{color_classifier_forward.1} parent=11 // pred_check
          %p209 = pneg %p63
        $region14: #{color_classifier_forward.1} parent=11 // pred_check_branch
          %211 = sbr.rel (%p209) target = $region16
        $region15: #{color_classifier_forward.1} parent=11 // pred_region
          _
        $region16: #{color_classifier_forward.1} parent=11 // pred_fallthru
          _
        // Predicated region
        $region17: #{color_classifier_forward.1} parent=11 // pred_check
          %p212 = pneg %p84
        $region18: #{color_classifier_forward.1} parent=11 // pred_check_branch
          %214 = sbr.rel (%p212) target = $region20
        $region19: #{color_classifier_forward.1} parent=11 // pred_region
          _
        $region20: #{color_classifier_forward.1} parent=11 // pred_fallthru
          _
        // Predicated region
        $region21: #{color_classifier_forward.1} parent=11 // pred_check
          %p215 = pneg %p105
        $region22: #{color_classifier_forward.1} parent=11 // pred_check_branch
          %217 = sbr.rel (%p215) target = $region24
        $region23: #{color_classifier_forward.1} parent=11 // pred_region
          _
        $region24: #{color_classifier_forward.1} parent=11 // pred_fallthru
          _
        // Predicated region
        $region25: #{color_classifier_forward.1} parent=11 // pred_check
          %p218 = pneg %p126
        $region26: #{color_classifier_forward.1} parent=11 // pred_check_branch
          %220 = sbr.rel (%p218) target = $region28
        $region27: #{color_classifier_forward.1} parent=11 // pred_region
          _
        $region28: #{color_classifier_forward.1} parent=11 // pred_fallthru
          _
        // Predicated region
        $region29: #{color_classifier_forward.1} parent=11 // pred_check
          %p221 = pneg %p147
        $region30: #{color_classifier_forward.1} parent=11 // pred_check_branch
          %223 = sbr.rel (%p221) target = $region32
        $region31: #{color_classifier_forward.1} parent=11 // pred_region
          _
        $region32: #{color_classifier_forward.1} parent=11 // pred_fallthru
          _
        // Predicated region
        $region33: #{color_classifier_forward.1} parent=11 // pred_check
          %p224 = pneg %p168
        $region34: #{color_classifier_forward.1} parent=11 // pred_check_branch
          %226 = sbr.rel (%p224) target = $region36
        $region35: #{color_classifier_forward.1} parent=11 // pred_region
          _
        $region36: #{color_classifier_forward.1} parent=11 // pred_fallthru
          _
      $region12: #{color_classifier_forward.1} parent=5 // pred_fallthru
        _
      %p227 = scmp.lt.s32.totalorder %s16, 2
      // Predicated region
      $region37: #{color_classifier_forward.1} parent=5 // pred_check
        %p228 = pneg %p227
      $region38: #{color_classifier_forward.1} parent=5 // pred_check_branch
        %230 = sbr.rel (%p228) target = $region40
      $region39: #{color_classifier_forward.1} parent=5 // pred_region
        // Predicated region
        $region41: #{color_classifier_forward.1} parent=39 // pred_check
          %p231 = pneg %p36
        $region42: #{color_classifier_forward.1} parent=39 // pred_check_branch
          %233 = sbr.rel (%p231) target = $region44
        $region43: #{color_classifier_forward.1} parent=39 // pred_region
          %p234 = scmp.lt.s32.totalorder %s16, 1
          %s235 = scalar_select %p234, %s16, 1
          %s236 = smul.addr %s235, 32
          %s237 = smul.addr %s236, 8
          %s238 = scalar_lea.vmem %s0, %s237
        $region44: #{color_classifier_forward.1} parent=39 // pred_fallthru
          _
      $region40: #{color_classifier_forward.1} parent=5 // pred_fallthru
        _
      %p239 = scmp.le.s32.totalorder 1, %s16
      %p240 = scmp.lt.s32.totalorder %s16, 3
      %p241 = pnand %p239, %p240
      %p242 = pneg %p241
      // Predicated region
      $region45: #{color_classifier_forward.1} parent=5 // pred_check
        _
      $region46: #{color_classifier_forward.1} parent=5 // pred_check_branch
        %244 = sbr.rel (%p241) target = $region48
      $region47: #{color_classifier_forward.1} parent=5 // pred_region
        %s245 = ssub.s32 %s16, 1
        %p246 = scmp.lt.s32.totalorder %s21, 1
        %s247 = scalar_select %p246, %s21, 1
        %s248 = smul.addr %s247, 32
        %s249 = smul.addr %s248, 8
        %s250 = scalar_lea.vmem %s0, %s249
        %p251 = pneg %p42
        %p252 = pneg %p39
        %p253 = pneg %p63
        %p254 = pneg %p60
        %p255 = pneg %p84
        %p256 = pneg %p81
        %p257 = pneg %p105
        %p258 = pneg %p102
        %p259 = pneg %p126
        %p260 = pneg %p123
        %p261 = pneg %p147
        %p262 = pneg %p144
        %p263 = pneg %p168
        %p264 = pneg %p165
        %p265 = pneg %p194
        %p266 = pneg %p191
        %s267 = sand.u32 %s181, 1
        %s268 = scalar_lea.sflag [#allocation4], %s267
        %s269 = sand.u32 %s181, 1
        %s270 = scalar_lea.vmem [#allocation3], %s269
        %p271 = scmp.lt.s32.totalorder %s21, 1
        %s272 = scalar_select %p271, %s21, 1
        %s273 = smul.addr %s272, 32
        %s274 = smul.addr %s273, 8
        %s275 = scalar_lea.vmem %s0, %s274
        %v276 = vld [vmem:[%s275] sm:$0xff]
        %v277 = vld [vmem:[%s275 + $0x8] sm:$0xff]
        %v278 = vld [vmem:[%s275 + $0x10] sm:$0xff]
        %v279 = vld [vmem:[%s275 + $0x18] sm:$0xff]
        %v280 = vld [vmem:[%s275 + $0x20] sm:$0xff]
        %v281 = vld [vmem:[%s275 + $0x28] sm:$0xff]
        %v282 = vld [vmem:[%s275 + $0x30] sm:$0xff]
        %v283 = vld [vmem:[%s275 + $0x38] sm:$0xff]
        %v284 = vld [vmem:[%s275 + $0x40] sm:$0xff]
        %v285 = vld [vmem:[%s275 + $0x48] sm:$0xff]
        %v286 = vld [vmem:[%s275 + $0x50] sm:$0xff]
        %v287 = vld [vmem:[%s275 + $0x58] sm:$0xff]
        %v288 = vld [vmem:[%s275 + $0x60] sm:$0xff]
        %v289 = vld [vmem:[%s275 + $0x68] sm:$0xff]
        %v290 = vld [vmem:[%s275 + $0x70] sm:$0xff]
        %v291 = vld [vmem:[%s275 + $0x78] sm:$0xff]
        %v292 = vld [vmem:[%s275 + $0x80] sm:$0xff]
        %v293 = vld [vmem:[%s275 + $0x88] sm:$0xff]
        %v294 = vld [vmem:[%s275 + $0x90] sm:$0xff]
        %v295 = vld [vmem:[%s275 + $0x98] sm:$0xff]
        %v296 = vld [vmem:[%s275 + $0xa0] sm:$0xff]
        %v297 = vld [vmem:[%s275 + $0xa8] sm:$0xff]
        %v298 = vld [vmem:[%s275 + $0xb0] sm:$0xff]
        %v299 = vld [vmem:[%s275 + $0xb8] sm:$0xff]
        %v300 = vld [vmem:[%s275 + $0xc0] sm:$0xff]
        %v301 = vld [vmem:[%s275 + $0xc8] sm:$0xff]
        %v302 = vld [vmem:[%s275 + $0xd0] sm:$0xff]
        %v303 = vld [vmem:[%s275 + $0xd8] sm:$0xff]
        %v304 = vld [vmem:[%s275 + $0xe0] sm:$0xff]
        %v305 = vld [vmem:[%s275 + $0xe8] sm:$0xff]
        %v306 = vld [vmem:[%s275 + $0xf0] sm:$0xff]
        %v307 = vld [vmem:[%s275 + $0xf8] sm:$0xff]
        %v308 = vld [vmem:[%s1] sm:$0xff]
        %v309 = vld [vmem:[%s1 + $0x8] sm:$0xff]
        %v310 = vld [vmem:[%s1 + $0x10] sm:$0xff]
        %v311 = vld [vmem:[%s1 + $0x18] sm:$0xff]
        %v312 = vld [vmem:[%s2] sm:$0x1]
        %v314 = vlaneseq
        %v315 = vshrl.u32 %v314, 7
        %v316 = vsub.s32 0, %v315
        %v317 = vrot.slane %v312, %v316
        %vm319 = vcmask 261120
        %v321 = vsel %vm319, %v276, 0
        %v324 = vsel %vm319, %v277, 0
        %v327 = vsel %vm319, %v278, 0
        %v330 = vsel %vm319, %v279, 0
        %v333 = vsel %vm319, %v280, 0
        %v336 = vsel %vm319, %v281, 0
        %v339 = vsel %vm319, %v282, 0
        %v342 = vsel %vm319, %v283, 0
        %v345 = vsel %vm319, %v284, 0
        %v348 = vsel %vm319, %v285, 0
        %v351 = vsel %vm319, %v286, 0
        %v354 = vsel %vm319, %v287, 0
        %v357 = vsel %vm319, %v288, 0
        %v360 = vsel %vm319, %v289, 0
        %v363 = vsel %vm319, %v290, 0
        %v366 = vsel %vm319, %v291, 0
        %v369 = vsel %vm319, %v292, 0
        %v372 = vsel %vm319, %v293, 0
        %v375 = vsel %vm319, %v294, 0
        %v378 = vsel %vm319, %v295, 0
        %v381 = vsel %vm319, %v296, 0
        %v384 = vsel %vm319, %v297, 0
        %v387 = vsel %vm319, %v298, 0
        %v390 = vsel %vm319, %v299, 0
        %v393 = vsel %vm319, %v300, 0
        %v396 = vsel %vm319, %v301, 0
        %v399 = vsel %vm319, %v302, 0
        %v402 = vsel %vm319, %v303, 0
        %v405 = vsel %vm319, %v304, 0
        %v408 = vsel %vm319, %v305, 0
        %v411 = vsel %vm319, %v306, 0
        %v414 = vsel %vm319, %v307, 0
        %416 = vmatprep.subr.mxu0 0.0
        %417 = vmatpush1.msra.mxu0 %v308
        %418 = vmatprep.subr.mxu0 0.0
        %419 = vmatpush1.msra.mxu0 %v309
        %420 = vmatprep.subr.mxu0 0.0
        %421 = vmatpush1.msra.mxu0 %v310
        %422 = vmatprep.subr.mxu0 0.0
        %423 = vmatpush1.msra.mxu0 %v311
        %424 = vmatprep.subr.mxu0 0.0
        %425 = vmatpush1.msra.mxu0 0.0
        %426 = vmatprep.subr.mxu0 0.0
        %427 = vmatpush1.msra.mxu0 0.0
        %428 = vmatprep.subr.mxu0 0.0
        %429 = vmatpush1.msra.mxu0 0.0
        %430 = vmatprep.subr.mxu0 0.0
        %431 = vmatpush1.msra.mxu0 0.0
        %432 = vmatprep.subr.mxu0 0.0
        %433 = vmatpush1.msra.mxu0 0.0
        %434 = vmatprep.subr.mxu0 0.0
        %435 = vmatpush1.msra.mxu0 0.0
        %436 = vmatprep.subr.mxu0 0.0
        %437 = vmatpush1.msra.mxu0 0.0
        %438 = vmatprep.subr.mxu0 0.0
        %439 = vmatpush1.msra.mxu0 0.0
        %440 = vmatprep.subr.mxu0 0.0
        %441 = vmatpush1.msra.mxu0 0.0
        %442 = vmatprep.subr.mxu0 0.0
        %443 = vmatpush1.msra.mxu0 0.0
        %444 = vmatprep.subr.mxu0 0.0
        %445 = vmatpush1.msra.mxu0 0.0
        %446 = vmatprep.subr.mxu0 0.0
        %447 = vmatpush1.msra.mxu0 0.0
        %448 = vmatprep.subr.mxu0 0.0
        %449 = vmatpush1.msra.mxu0 0.0
        %450 = vmatprep.subr.mxu0 0.0
        %451 = vmatpush1.msra.mxu0 0.0
        %452 = vmatprep.subr.mxu0 0.0
        %453 = vmatpush1.msra.mxu0 0.0
        %454 = vmatprep.subr.mxu0 0.0
        %455 = vmatpush1.msra.mxu0 0.0
        %456 = vmatprep.subr.mxu0 0.0
        %457 = vmatpush1.msra.mxu0 0.0
        %458 = vmatprep.subr.mxu0 0.0
        %459 = vmatpush1.msra.mxu0 0.0
        %460 = vmatprep.subr.mxu0 0.0
        %461 = vmatpush1.msra.mxu0 0.0
        %462 = vmatprep.subr.mxu0 0.0
        %463 = vmatpush1.msra.mxu0 0.0
        %464 = vmatprep.subr.mxu0 0.0
        %465 = vmatpush1.msra.mxu0 0.0
        %466 = vmatprep.subr.mxu0 0.0
        %467 = vmatpush1.msra.mxu0 0.0
        %468 = vmatprep.subr.mxu0 0.0
        %469 = vmatpush1.msra.mxu0 0.0
        %470 = vmatprep.subr.mxu0 0.0
        %471 = vmatpush1.msra.mxu0 0.0
        %472 = vmatprep.subr.mxu0 0.0
        %473 = vmatpush1.msra.mxu0 0.0
        %474 = vmatprep.subr.mxu0 0.0
        %475 = vmatpush1.msra.mxu0 0.0
        %476 = vmatprep.subr.mxu0 0.0
        %477 = vmatpush1.msra.mxu0 0.0
        %478 = vmatprep.subr.mxu0 0.0
        %479 = vmatpush1.msra.mxu0 0.0
        %480 = vmatprep.mubr.f32.mxu0 0.0
        %481 = vmatmul.mubr.f32.gmra.mrb[0].mxu0 %v321
        %v482 = vpop.f32.mrb[0].mxu0
        %v483 = vadd.f32 %v317, %v482
        %v484 = vpop.f32.mrb[0].mxu0
        %485 = vmatprep.mubr.f32.mxu0 0.0
        %486 = vmatmul.mubr.f32.gmra.mrb[0].mxu0 %v324
        %v487 = vpop.f32.mrb[0].mxu0
        %v488 = vadd.f32 %v317, %v487
        %v489 = vpop.f32.mrb[0].mxu0
        %490 = vmatprep.mubr.f32.mxu0 0.0
        %491 = vmatmul.mubr.f32.gmra.mrb[0].mxu0 %v327
        %v492 = vpop.f32.mrb[0].mxu0
        %v493 = vadd.f32 %v317, %v492
        %v494 = vpop.f32.mrb[0].mxu0
        %495 = vmatprep.mubr.f32.mxu0 0.0
        %496 = vmatmul.mubr.f32.gmra.mrb[0].mxu0 %v330
        %v497 = vpop.f32.mrb[0].mxu0
        %v498 = vadd.f32 %v317, %v497
        %v499 = vpop.f32.mrb[0].mxu0
        %500 = vmatprep.mubr.f32.mxu0 0.0
        %501 = vmatmul.mubr.f32.gmra.mrb[0].mxu0 %v333
        %v502 = vpop.f32.mrb[0].mxu0
        %v503 = vadd.f32 %v317, %v502
        %v504 = vpop.f32.mrb[0].mxu0
        %505 = vmatprep.mubr.f32.mxu0 0.0
        %506 = vmatmul.mubr.f32.gmra.mrb[0].mxu0 %v336
        %v507 = vpop.f32.mrb[0].mxu0
        %v508 = vadd.f32 %v317, %v507
        %v509 = vpop.f32.mrb[0].mxu0
        %510 = vmatprep.mubr.f32.mxu0 0.0
        %511 = vmatmul.mubr.f32.gmra.mrb[0].mxu0 %v339
        %v512 = vpop.f32.mrb[0].mxu0
        %v513 = vadd.f32 %v317, %v512
        %v514 = vpop.f32.mrb[0].mxu0
        %515 = vmatprep.mubr.f32.mxu0 0.0
        %516 = vmatmul.mubr.f32.gmra.mrb[0].mxu0 %v342
        %v517 = vpop.f32.mrb[0].mxu0
        %v518 = vadd.f32 %v317, %v517
        %v519 = vpop.f32.mrb[0].mxu0
        %520 = vmatprep.mubr.f32.mxu0 0.0
        %521 = vmatmul.mubr.f32.gmra.mrb[0].mxu0 %v345
        %v522 = vpop.f32.mrb[0].mxu0
        %v523 = vadd.f32 %v317, %v522
        %v524 = vpop.f32.mrb[0].mxu0
        %525 = vmatprep.mubr.f32.mxu0 0.0
        %526 = vmatmul.mubr.f32.gmra.mrb[0].mxu0 %v348
        %v527 = vpop.f32.mrb[0].mxu0
        %v528 = vadd.f32 %v317, %v527
        %v529 = vpop.f32.mrb[0].mxu0
        %530 = vmatprep.mubr.f32.mxu0 0.0
        %531 = vmatmul.mubr.f32.gmra.mrb[0].mxu0 %v351
        %v532 = vpop.f32.mrb[0].mxu0
        %v533 = vadd.f32 %v317, %v532
        %v534 = vpop.f32.mrb[0].mxu0
        %535 = vmatprep.mubr.f32.mxu0 0.0
        %536 = vmatmul.mubr.f32.gmra.mrb[0].mxu0 %v354
        %v537 = vpop.f32.mrb[0].mxu0
        %v538 = vadd.f32 %v317, %v537
        %v539 = vpop.f32.mrb[0].mxu0
        %540 = vmatprep.mubr.f32.mxu0 0.0
        %541 = vmatmul.mubr.f32.gmra.mrb[0].mxu0 %v357
        %v542 = vpop.f32.mrb[0].mxu0
        %v543 = vadd.f32 %v317, %v542
        %v544 = vpop.f32.mrb[0].mxu0
        %545 = vmatprep.mubr.f32.mxu0 0.0
        %546 = vmatmul.mubr.f32.gmra.mrb[0].mxu0 %v360
        %v547 = vpop.f32.mrb[0].mxu0
        %v548 = vadd.f32 %v317, %v547
        %v549 = vpop.f32.mrb[0].mxu0
        %550 = vmatprep.mubr.f32.mxu0 0.0
        %551 = vmatmul.mubr.f32.gmra.mrb[0].mxu0 %v363
        %v552 = vpop.f32.mrb[0].mxu0
        %v553 = vadd.f32 %v317, %v552
        %v554 = vpop.f32.mrb[0].mxu0
        %555 = vmatprep.mubr.f32.mxu0 0.0
        %556 = vmatmul.mubr.f32.gmra.mrb[0].mxu0 %v366
        %v557 = vpop.f32.mrb[0].mxu0
        %v558 = vadd.f32 %v317, %v557
        %v559 = vpop.f32.mrb[0].mxu0
        %560 = vmatprep.mubr.f32.mxu0 0.0
        %561 = vmatmul.mubr.f32.gmra.mrb[0].mxu0 %v369
        %v562 = vpop.f32.mrb[0].mxu0
        %v563 = vadd.f32 %v317, %v562
        %v564 = vpop.f32.mrb[0].mxu0
        %565 = vmatprep.mubr.f32.mxu0 0.0
        %566 = vmatmul.mubr.f32.gmra.mrb[0].mxu0 %v372
        %v567 = vpop.f32.mrb[0].mxu0
        %v568 = vadd.f32 %v317, %v567
        %v569 = vpop.f32.mrb[0].mxu0
        %570 = vmatprep.mubr.f32.mxu0 0.0
        %571 = vmatmul.mubr.f32.gmra.mrb[0].mxu0 %v375
        %v572 = vpop.f32.mrb[0].mxu0
        %v573 = vadd.f32 %v317, %v572
        %v574 = vpop.f32.mrb[0].mxu0
        %575 = vmatprep.mubr.f32.mxu0 0.0
        %576 = vmatmul.mubr.f32.gmra.mrb[0].mxu0 %v378
        %v577 = vpop.f32.mrb[0].mxu0
        %v578 = vadd.f32 %v317, %v577
        %v579 = vpop.f32.mrb[0].mxu0
        %580 = vmatprep.mubr.f32.mxu0 0.0
        %581 = vmatmul.mubr.f32.gmra.mrb[0].mxu0 %v381
        %v582 = vpop.f32.mrb[0].mxu0
        %v583 = vadd.f32 %v317, %v582
        %v584 = vpop.f32.mrb[0].mxu0
        %585 = vmatprep.mubr.f32.mxu0 0.0
        %586 = vmatmul.mubr.f32.gmra.mrb[0].mxu0 %v384
        %v587 = vpop.f32.mrb[0].mxu0
        %v588 = vadd.f32 %v317, %v587
        %v589 = vpop.f32.mrb[0].mxu0
        %590 = vmatprep.mubr.f32.mxu0 0.0
        %591 = vmatmul.mubr.f32.gmra.mrb[0].mxu0 %v387
        %v592 = vpop.f32.mrb[0].mxu0
        %v593 = vadd.f32 %v317, %v592
        %v594 = vpop.f32.mrb[0].mxu0
        %595 = vmatprep.mubr.f32.mxu0 0.0
        %596 = vmatmul.mubr.f32.gmra.mrb[0].mxu0 %v390
        %v597 = vpop.f32.mrb[0].mxu0
        %v598 = vadd.f32 %v317, %v597
        %v599 = vpop.f32.mrb[0].mxu0
        %600 = vmatprep.mubr.f32.mxu0 0.0
        %601 = vmatmul.mubr.f32.gmra.mrb[0].mxu0 %v393
        %v602 = vpop.f32.mrb[0].mxu0
        %v603 = vadd.f32 %v317, %v602
        %v604 = vpop.f32.mrb[0].mxu0
        %605 = vmatprep.mubr.f32.mxu0 0.0
        %606 = vmatmul.mubr.f32.gmra.mrb[0].mxu0 %v396
        %v607 = vpop.f32.mrb[0].mxu0
        %v608 = vadd.f32 %v317, %v607
        %v609 = vpop.f32.mrb[0].mxu0
        %610 = vmatprep.mubr.f32.mxu0 0.0
        %611 = vmatmul.mubr.f32.gmra.mrb[0].mxu0 %v399
        %v612 = vpop.f32.mrb[0].mxu0
        %v613 = vadd.f32 %v317, %v612
        %v614 = vpop.f32.mrb[0].mxu0
        %615 = vmatprep.mubr.f32.mxu0 0.0
        %616 = vmatmul.mubr.f32.gmra.mrb[0].mxu0 %v402
        %v617 = vpop.f32.mrb[0].mxu0
        %v618 = vadd.f32 %v317, %v617
        %v619 = vpop.f32.mrb[0].mxu0
        %620 = vmatprep.mubr.f32.mxu0 0.0
        %621 = vmatmul.mubr.f32.gmra.mrb[0].mxu0 %v405
        %v622 = vpop.f32.mrb[0].mxu0
        %v623 = vadd.f32 %v317, %v622
        %v624 = vpop.f32.mrb[0].mxu0
        %625 = vmatprep.mubr.f32.mxu0 0.0
        %626 = vmatmul.mubr.f32.gmra.mrb[0].mxu0 %v408
        %v627 = vpop.f32.mrb[0].mxu0
        %v628 = vadd.f32 %v317, %v627
        %v629 = vpop.f32.mrb[0].mxu0
        %630 = vmatprep.mubr.f32.mxu0 0.0
        %631 = vmatmul.mubr.f32.gmra.mrb[0].mxu0 %v411
        %v632 = vpop.f32.mrb[0].mxu0
        %v633 = vadd.f32 %v317, %v632
        %v634 = vpop.f32.mrb[0].mxu0
        %635 = vmatprep.mubr.f32.mxu0 0.0
        %636 = vmatmul.mubr.f32.gmra.mrb[0].mxu0 %v414
        %v637 = vpop.f32.mrb[0].mxu0
        %v638 = vadd.f32 %v317, %v637
        %v639 = vpop.f32.mrb[0].mxu0
        %640 = vdwg.mxu0
        %v641 = vmax.f32 %v483, 0.0
        %v642 = vmax.f32 %v488, 0.0
        %v643 = vmax.f32 %v493, 0.0
        %v644 = vmax.f32 %v498, 0.0
        %v645 = vmax.f32 %v503, 0.0
        %v646 = vmax.f32 %v508, 0.0
        %v647 = vmax.f32 %v513, 0.0
        %v648 = vmax.f32 %v518, 0.0
        %v649 = vmax.f32 %v523, 0.0
        %v650 = vmax.f32 %v528, 0.0
        %v651 = vmax.f32 %v533, 0.0
        %v652 = vmax.f32 %v538, 0.0
        %v653 = vmax.f32 %v543, 0.0
        %v654 = vmax.f32 %v548, 0.0
        %v655 = vmax.f32 %v553, 0.0
        %v656 = vmax.f32 %v558, 0.0
        %v657 = vmax.f32 %v563, 0.0
        %v658 = vmax.f32 %v568, 0.0
        %v659 = vmax.f32 %v573, 0.0
        %v660 = vmax.f32 %v578, 0.0
        %v661 = vmax.f32 %v583, 0.0
        %v662 = vmax.f32 %v588, 0.0
        %v663 = vmax.f32 %v593, 0.0
        %v664 = vmax.f32 %v598, 0.0
        %v665 = vmax.f32 %v603, 0.0
        %v666 = vmax.f32 %v608, 0.0
        %v667 = vmax.f32 %v613, 0.0
        %v668 = vmax.f32 %v618, 0.0
        %v669 = vmax.f32 %v623, 0.0
        %v670 = vmax.f32 %v628, 0.0
        %v671 = vmax.f32 %v633, 0.0
        %v672 = vmax.f32 %v638, 0.0
        %673 = vst.msk [vmem:[#allocation2 + $0x7] sm:$0xff] %vm319, 0.0
        %674 = vst.msk [vmem:[#allocation2 + $0xf] sm:$0xff] %vm319, 0.0
        %vm675 = vcmask 254976
        %676 = vst.msk [vmem:[#allocation2 + $0x17] sm:$0x3] %vm675, 0.0
        %s677 = scalar_lea.vmem [#allocation2], 544
        %678 = vst.msk [vmem:[%s677 + $0x7] sm:$0xff] %vm319, 0.0
        %679 = vst.msk [vmem:[%s677 + $0xf] sm:$0xff] %vm319, 0.0
        %680 = vst.msk [vmem:[%s677 + $0x17] sm:$0x3] %vm675, 0.0
        %s681 = scalar_lea.vmem [#allocation2], 32
        %vm682 = vcmask 253952
        %683 = vst.msk [vmem:[%s681 + $0x7] sm:$0x1] %vm682, 0.0
        %684 = vst.msk [vmem:[%s681 + $0x27] sm:$0x1] %vm682, 0.0
        %685 = vst.msk [vmem:[%s681 + $0x47] sm:$0x1] %vm682, 0.0
        %686 = vst.msk [vmem:[%s681 + $0x67] sm:$0x1] %vm682, 0.0
        %687 = vst.msk [vmem:[%s681 + $0x87] sm:$0x1] %vm682, 0.0
        %688 = vst.msk [vmem:[%s681 + $0xa7] sm:$0x1] %vm682, 0.0
        %689 = vst.msk [vmem:[%s681 + $0xc7] sm:$0x1] %vm682, 0.0
        %690 = vst.msk [vmem:[%s681 + $0xe7] sm:$0x1] %vm682, 0.0
        %691 = vst.msk [vmem:[%s681 + $0x107] sm:$0x1] %vm682, 0.0
        %692 = vst.msk [vmem:[%s681 + $0x127] sm:$0x1] %vm682, 0.0
        %693 = vst.msk [vmem:[%s681 + $0x147] sm:$0x1] %vm682, 0.0
        %694 = vst.msk [vmem:[%s681 + $0x167] sm:$0x1] %vm682, 0.0
        %695 = vst.msk [vmem:[%s681 + $0x187] sm:$0x1] %vm682, 0.0
        %696 = vst.msk [vmem:[%s681 + $0x1a7] sm:$0x1] %vm682, 0.0
        %697 = vst.msk [vmem:[%s681 + $0x1c7] sm:$0x1] %vm682, 0.0
        %698 = vst.msk [vmem:[%s681 + $0x1e7] sm:$0x1] %vm682, 0.0
        %699 = vst.msk [vmem:[%s681 + $0x18] sm:$0x1] %vm682, 0.0
        %700 = vst.msk [vmem:[%s681 + $0x38] sm:$0x1] %vm682, 0.0
        %701 = vst.msk [vmem:[%s681 + $0x58] sm:$0x1] %vm682, 0.0
        %702 = vst.msk [vmem:[%s681 + $0x78] sm:$0x1] %vm682, 0.0
        %703 = vst.msk [vmem:[%s681 + $0x98] sm:$0x1] %vm682, 0.0
        %704 = vst.msk [vmem:[%s681 + $0xb8] sm:$0x1] %vm682, 0.0
        %705 = vst.msk [vmem:[%s681 + $0xd8] sm:$0x1] %vm682, 0.0
        %706 = vst.msk [vmem:[%s681 + $0xf8] sm:$0x1] %vm682, 0.0
        %707 = vst.msk [vmem:[%s681 + $0x118] sm:$0x1] %vm682, 0.0
        %708 = vst.msk [vmem:[%s681 + $0x138] sm:$0x1] %vm682, 0.0
        %709 = vst.msk [vmem:[%s681 + $0x158] sm:$0x1] %vm682, 0.0
        %710 = vst.msk [vmem:[%s681 + $0x178] sm:$0x1] %vm682, 0.0
        %711 = vst.msk [vmem:[%s681 + $0x198] sm:$0x1] %vm682, 0.0
        %712 = vst.msk [vmem:[%s681 + $0x1b8] sm:$0x1] %vm682, 0.0
        %713 = vst.msk [vmem:[%s681 + $0x1d8] sm:$0x1] %vm682, 0.0
        %714 = vst.msk [vmem:[%s681 + $0x1f8] sm:$0x1] %vm682, 0.0
        %715 = vst.msk [vmem:[%s681 + $0x8] sm:$0xff] %vm319, %v641
        %716 = vst.msk [vmem:[%s681 + $0x10] sm:$0xff] %vm319, %v642
        %717 = vst.msk [vmem:[%s681 + $0x28] sm:$0xff] %vm319, %v643
        %718 = vst.msk [vmem:[%s681 + $0x30] sm:$0xff] %vm319, %v644
        %719 = vst.msk [vmem:[%s681 + $0x48] sm:$0xff] %vm319, %v645
        %720 = vst.msk [vmem:[%s681 + $0x50] sm:$0xff] %vm319, %v646
        %721 = vst.msk [vmem:[%s681 + $0x68] sm:$0xff] %vm319, %v647
        %722 = vst.msk [vmem:[%s681 + $0x70] sm:$0xff] %vm319, %v648
        %723 = vst.msk [vmem:[%s681 + $0x88] sm:$0xff] %vm319, %v649
        %724 = vst.msk [vmem:[%s681 + $0x90] sm:$0xff] %vm319, %v650
        %725 = vst.msk [vmem:[%s681 + $0xa8] sm:$0xff] %vm319, %v651
        %726 = vst.msk [vmem:[%s681 + $0xb0] sm:$0xff] %vm319, %v652
        %727 = vst.msk [vmem:[%s681 + $0xc8] sm:$0xff] %vm319, %v653
        %728 = vst.msk [vmem:[%s681 + $0xd0] sm:$0xff] %vm319, %v654
        %729 = vst.msk [vmem:[%s681 + $0xe8] sm:$0xff] %vm319, %v655
        %730 = vst.msk [vmem:[%s681 + $0xf0] sm:$0xff] %vm319, %v656
        %731 = vst.msk [vmem:[%s681 + $0x108] sm:$0xff] %vm319, %v657
        %732 = vst.msk [vmem:[%s681 + $0x110] sm:$0xff] %vm319, %v658
        %733 = vst.msk [vmem:[%s681 + $0x128] sm:$0xff] %vm319, %v659
        %734 = vst.msk [vmem:[%s681 + $0x130] sm:$0xff] %vm319, %v660
        %735 = vst.msk [vmem:[%s681 + $0x148] sm:$0xff] %vm319, %v661
        %736 = vst.msk [vmem:[%s681 + $0x150] sm:$0xff] %vm319, %v662
        %737 = vst.msk [vmem:[%s681 + $0x168] sm:$0xff] %vm319, %v663
        %738 = vst.msk [vmem:[%s681 + $0x170] sm:$0xff] %vm319, %v664
        %739 = vst.msk [vmem:[%s681 + $0x188] sm:$0xff] %vm319, %v665
        %740 = vst.msk [vmem:[%s681 + $0x190] sm:$0xff] %vm319, %v666
        %741 = vst.msk [vmem:[%s681 + $0x1a8] sm:$0xff] %vm319, %v667
        %742 = vst.msk [vmem:[%s681 + $0x1b0] sm:$0xff] %vm319, %v668
        %743 = vst.msk [vmem:[%s681 + $0x1c8] sm:$0xff] %vm319, %v669
        %744 = vst.msk [vmem:[%s681 + $0x1d0] sm:$0xff] %vm319, %v670
        %745 = vst.msk [vmem:[%s681 + $0x1e8] sm:$0xff] %vm319, %v671
        %746 = vst.msk [vmem:[%s681 + $0x1f0] sm:$0xff] %vm319, %v672
        %v747 = vld [vmem:[#allocation2 + $0x7] sm:$0xff]
        %v748 = vld [vmem:[#allocation2 + $0xf] sm:$0xff]
        %v749 = vld [vmem:[#allocation2 + $0x27] sm:$0xff]
        %v750 = vld [vmem:[#allocation2 + $0x2f] sm:$0xff]
        %v751 = vld [vmem:[#allocation2 + $0x47] sm:$0xff]
        %v752 = vld [vmem:[#allocation2 + $0x4f] sm:$0xff]
        %v753 = vld [vmem:[#allocation2 + $0x67] sm:$0xff]
        %v754 = vld [vmem:[#allocation2 + $0x6f] sm:$0xff]
        %v755 = vld [vmem:[#allocation2 + $0x87] sm:$0xff]
        %v756 = vld [vmem:[#allocation2 + $0x8f] sm:$0xff]
        %v757 = vld [vmem:[#allocation2 + $0xa7] sm:$0xff]
        %v758 = vld [vmem:[#allocation2 + $0xaf] sm:$0xff]
        %v759 = vld [vmem:[#allocation2 + $0xc7] sm:$0xff]
        %v760 = vld [vmem:[#allocation2 + $0xcf] sm:$0xff]
        %v761 = vld [vmem:[#allocation2 + $0xe7] sm:$0xff]
        %v762 = vld [vmem:[#allocation2 + $0xef] sm:$0xff]
        %v763 = vld [vmem:[#allocation2 + $0x107] sm:$0xff]
        %v764 = vld [vmem:[#allocation2 + $0x10f] sm:$0xff]
        %v765 = vld [vmem:[#allocation2 + $0x127] sm:$0xff]
        %v766 = vld [vmem:[#allocation2 + $0x12f] sm:$0xff]
        %v767 = vld [vmem:[#allocation2 + $0x147] sm:$0xff]
        %v768 = vld [vmem:[#allocation2 + $0x14f] sm:$0xff]
        %v769 = vld [vmem:[#allocation2 + $0x167] sm:$0xff]
        %v770 = vld [vmem:[#allocation2 + $0x16f] sm:$0xff]
        %v771 = vld [vmem:[#allocation2 + $0x187] sm:$0xff]
        %v772 = vld [vmem:[#allocation2 + $0x18f] sm:$0xff]
        %v773 = vld [vmem:[#allocation2 + $0x1a7] sm:$0xff]
        %v774 = vld [vmem:[#allocation2 + $0x1af] sm:$0xff]
        %v775 = vld [vmem:[#allocation2 + $0x1c7] sm:$0xff]
        %v776 = vld [vmem:[#allocation2 + $0x1cf] sm:$0xff]
        %v777 = vld [vmem:[#allocation2 + $0x1e7] sm:$0xff]
        %v778 = vld [vmem:[#allocation2 + $0x1ef] sm:$0xff]
        %v779 = vld [vmem:[%s3] sm:$0xff]
        %v780 = vld [vmem:[%s3 + $0x8] sm:$0xff]
        %v781 = vld [vmem:[%s3 + $0x10] sm:$0xff]
        %v782 = vld [vmem:[%s3 + $0x18] sm:$0xff]
        %v783 = vld [vmem:[#allocation2 + $0x8] sm:$0xff]
        %v784 = vld [vmem:[#allocation2 + $0x10] sm:$0xff]
        %v785 = vld [vmem:[#allocation2 + $0x28] sm:$0xff]
        %v786 = vld [vmem:[#allocation2 + $0x30] sm:$0xff]
        %v787 = vld [vmem:[#allocation2 + $0x48] sm:$0xff]
        %v788 = vld [vmem:[#allocation2 + $0x50] sm:$0xff]
        %v789 = vld [vmem:[#allocation2 + $0x68] sm:$0xff]
        %v790 = vld [vmem:[#allocation2 + $0x70] sm:$0xff]
        %v791 = vld [vmem:[#allocation2 + $0x88] sm:$0xff]
        %v792 = vld [vmem:[#allocation2 + $0x90] sm:$0xff]
        %v793 = vld [vmem:[#allocation2 + $0xa8] sm:$0xff]
        %v794 = vld [vmem:[#allocation2 + $0xb0] sm:$0xff]
        %v795 = vld [vmem:[#allocation2 + $0xc8] sm:$0xff]
        %v796 = vld [vmem:[#allocation2 + $0xd0] sm:$0xff]
        %v797 = vld [vmem:[#allocation2 + $0xe8] sm:$0xff]
        %v798 = vld [vmem:[#allocation2 + $0xf0] sm:$0xff]
        %v799 = vld [vmem:[#allocation2 + $0x108] sm:$0xff]
        %v800 = vld [vmem:[#allocation2 + $0x110] sm:$0xff]
        %v801 = vld [vmem:[#allocation2 + $0x128] sm:$0xff]
        %v802 = vld [vmem:[#allocation2 + $0x130] sm:$0xff]
        %v803 = vld [vmem:[#allocation2 + $0x148] sm:$0xff]
        %v804 = vld [vmem:[#allocation2 + $0x150] sm:$0xff]
        %v805 = vld [vmem:[#allocation2 + $0x168] sm:$0xff]
        %v806 = vld [vmem:[#allocation2 + $0x170] sm:$0xff]
        %v807 = vld [vmem:[#allocation2 + $0x188] sm:$0xff]
        %v808 = vld [vmem:[#allocation2 + $0x190] sm:$0xff]
        %v809 = vld [vmem:[#allocation2 + $0x1a8] sm:$0xff]
        %v810 = vld [vmem:[#allocation2 + $0x1b0] sm:$0xff]
        %v811 = vld [vmem:[#allocation2 + $0x1c8] sm:$0xff]
        %v812 = vld [vmem:[#allocation2 + $0x1d0] sm:$0xff]
        %v813 = vld [vmem:[#allocation2 + $0x1e8] sm:$0xff]
        %v814 = vld [vmem:[#allocation2 + $0x1f0] sm:$0xff]
        %s815 = scalar_lea.vmem %s3, 32
        %v816 = vld [vmem:[%s815] sm:$0xff]
        %v817 = vld [vmem:[%s815 + $0x8] sm:$0xff]
        %v818 = vld [vmem:[%s815 + $0x10] sm:$0xff]
        %v819 = vld [vmem:[%s815 + $0x18] sm:$0xff]
        %v821 = vsel %vm319, %v783, 0
        %v824 = vsel %vm319, %v784, 0
        %v827 = vsel %vm319, %v785, 0
        %v830 = vsel %vm319, %v786, 0
        %v833 = vsel %vm319, %v787, 0
        %v836 = vsel %vm319, %v788, 0
        %v839 = vsel %vm319, %v789, 0
        %v842 = vsel %vm319, %v790, 0
        %v845 = vsel %vm319, %v791, 0
        %v848 = vsel %vm319, %v792, 0
        %v851 = vsel %vm319, %v793, 0
        %v854 = vsel %vm319, %v794, 0
        %v857 = vsel %vm319, %v795, 0
        %v860 = vsel %vm319, %v796, 0
        %v863 = vsel %vm319, %v797, 0
        %v866 = vsel %vm319, %v798, 0
        %v869 = vsel %vm319, %v799, 0
        %v872 = vsel %vm319, %v800, 0
        %v875 = vsel %vm319, %v801, 0
        %v878 = vsel %vm319, %v802, 0
        %v881 = vsel %vm319, %v803, 0
        %v884 = vsel %vm319, %v804, 0
        %v887 = vsel %vm319, %v805, 0
        %v890 = vsel %vm319, %v806, 0
        %v893 = vsel %vm319, %v807, 0
        %v896 = vsel %vm319, %v808, 0
        %v899 = vsel %vm319, %v809, 0
        %v902 = vsel %vm319, %v810, 0
        %v905 = vsel %vm319, %v811, 0
        %v908 = vsel %vm319, %v812, 0
        %v911 = vsel %vm319, %v813, 0
        %v914 = vsel %vm319, %v814, 0
        %916 = vmatprep.subr.mxu0 0.0
        %917 = vmatpush1.msra.mxu0 %v816
        %918 = vmatprep.subr.mxu0 0.0
        %919 = vmatpush1.msra.mxu0 %v817
        %920 = vmatprep.subr.mxu0 0.0
        %921 = vmatpush1.msra.mxu0 %v818
        %922 = vmatprep.subr.mxu0 0.0
        %923 = vmatpush1.msra.mxu0 %v819
        %924 = vmatprep.subr.mxu0 0.0
        %925 = vmatpush1.msra.mxu0 0.0
        %926 = vmatprep.subr.mxu0 0.0
        %927 = vmatpush1.msra.mxu0 0.0
        %928 = vmatprep.subr.mxu0 0.0
        %929 = vmatpush1.msra.mxu0 0.0
        %930 = vmatprep.subr.mxu0 0.0
        %931 = vmatpush1.msra.mxu0 0.0
        %932 = vmatprep.subr.mxu0 0.0
        %933 = vmatpush1.msra.mxu0 0.0
        %934 = vmatprep.subr.mxu0 0.0
        %935 = vmatpush1.msra.mxu0 0.0
        %936 = vmatprep.subr.mxu0 0.0
        %937 = vmatpush1.msra.mxu0 0.0
        %938 = vmatprep.subr.mxu0 0.0
        %939 = vmatpush1.msra.mxu0 0.0
        %940 = vmatprep.subr.mxu0 0.0
        %941 = vmatpush1.msra.mxu0 0.0
        %942 = vmatprep.subr.mxu0 0.0
        %943 = vmatpush1.msra.mxu0 0.0
        %944 = vmatprep.subr.mxu0 0.0
        %945 = vmatpush1.msra.mxu0 0.0
        %946 = vmatprep.subr.mxu0 0.0
        %947 = vmatpush1.msra.mxu0 0.0
        %948 = vmatprep.subr.mxu0 0.0
        %949 = vmatpush1.msra.mxu0 0.0
        %950 = vmatprep.subr.mxu0 0.0
        %951 = vmatpush1.msra.mxu0 0.0
        %952 = vmatprep.subr.mxu0 0.0
        %953 = vmatpush1.msra.mxu0 0.0
        %954 = vmatprep.subr.mxu0 0.0
        %955 = vmatpush1.msra.mxu0 0.0
        %956 = vmatprep.subr.mxu0 0.0
        %957 = vmatpush1.msra.mxu0 0.0
        %958 = vmatprep.subr.mxu0 0.0
        %959 = vmatpush1.msra.mxu0 0.0
        %960 = vmatprep.subr.mxu0 0.0
        %961 = vmatpush1.msra.mxu0 0.0
        %962 = vmatprep.subr.mxu0 0.0
        %963 = vmatpush1.msra.mxu0 0.0
        %964 = vmatprep.subr.mxu0 0.0
        %965 = vmatpush1.msra.mxu0 0.0
        %966 = vmatprep.subr.mxu0 0.0
        %967 = vmatpush1.msra.mxu0 0.0
        %968 = vmatprep.subr.mxu0 0.0
        %969 = vmatpush1.msra.mxu0 0.0
        %970 = vmatprep.subr.mxu0 0.0
        %971 = vmatpush1.msra.mxu0 0.0
        %972 = vmatprep.subr.mxu0 0.0
        %973 = vmatpush1.msra.mxu0 0.0
        %974 = vmatprep.subr.mxu0 0.0
        %975 = vmatpush1.msra.mxu0 0.0
        %976 = vmatprep.subr.mxu0 0.0
        %977 = vmatpush1.msra.mxu0 0.0
        %978 = vmatprep.subr.mxu0 0.0
        %979 = vmatpush1.msra.mxu0 0.0
        %980 = vmatprep.mubr.f32.mxu0 0.0
        %981 = vmatmul.mubr.f32.gmra.mrb[0].mxu0 %v821
        %v982 = vpop.f32.mrb[0].mxu0
        %v983 = vadd.f32 0.0, %v982
        %v984 = vpop.f32.mrb[0].mxu0
        %985 = vmatprep.mubr.f32.mxu0 0.0
        %986 = vmatmul.mubr.f32.gmra.mrb[0].mxu0 %v824
        %v987 = vpop.f32.mrb[0].mxu0
        %v988 = vadd.f32 0.0, %v987
        %v989 = vpop.f32.mrb[0].mxu0
        %990 = vmatprep.mubr.f32.mxu0 0.0
        %991 = vmatmul.mubr.f32.gmra.mrb[0].mxu0 %v827
        %v992 = vpop.f32.mrb[0].mxu0
        %v993 = vadd.f32 0.0, %v992
        %v994 = vpop.f32.mrb[0].mxu0
        %995 = vmatprep.mubr.f32.mxu0 0.0
        %996 = vmatmul.mubr.f32.gmra.mrb[0].mxu0 %v830
        %v997 = vpop.f32.mrb[0].mxu0
        %v998 = vadd.f32 0.0, %v997
        %v999 = vpop.f32.mrb[0].mxu0
        %1000 = vmatprep.mubr.f32.mxu0 0.0
        %1001 = vmatmul.mubr.f32.gmra.mrb[0].mxu0 %v833
        %v1002 = vpop.f32.mrb[0].mxu0
        %v1003 = vadd.f32 0.0, %v1002
        %v1004 = vpop.f32.mrb[0].mxu0
        %1005 = vmatprep.mubr.f32.mxu0 0.0
        %1006 = vmatmul.mubr.f32.gmra.mrb[0].mxu0 %v836
        %v1007 = vpop.f32.mrb[0].mxu0
        %v1008 = vadd.f32 0.0, %v1007
        %v1009 = vpop.f32.mrb[0].mxu0
        %1010 = vmatprep.mubr.f32.mxu0 0.0
        %1011 = vmatmul.mubr.f32.gmra.mrb[0].mxu0 %v839
        %v1012 = vpop.f32.mrb[0].mxu0
        %v1013 = vadd.f32 0.0, %v1012
        %v1014 = vpop.f32.mrb[0].mxu0
        %1015 = vmatprep.mubr.f32.mxu0 0.0
        %1016 = vmatmul.mubr.f32.gmra.mrb[0].mxu0 %v842
        %v1017 = vpop.f32.mrb[0].mxu0
        %v1018 = vadd.f32 0.0, %v1017
        %v1019 = vpop.f32.mrb[0].mxu0
        %1020 = vmatprep.mubr.f32.mxu0 0.0
        %1021 = vmatmul.mubr.f32.gmra.mrb[0].mxu0 %v845
        %v1022 = vpop.f32.mrb[0].mxu0
        %v1023 = vadd.f32 0.0, %v1022
        %v1024 = vpop.f32.mrb[0].mxu0
        %1025 = vmatprep.mubr.f32.mxu0 0.0
        %1026 = vmatmul.mubr.f32.gmra.mrb[0].mxu0 %v848
        %v1027 = vpop.f32.mrb[0].mxu0
        %v1028 = vadd.f32 0.0, %v1027
        %v1029 = vpop.f32.mrb[0].mxu0
        %1030 = vmatprep.mubr.f32.mxu0 0.0
        %1031 = vmatmul.mubr.f32.gmra.mrb[0].mxu0 %v851
        %v1032 = vpop.f32.mrb[0].mxu0
        %v1033 = vadd.f32 0.0, %v1032
        %v1034 = vpop.f32.mrb[0].mxu0
        %1035 = vmatprep.mubr.f32.mxu0 0.0
        %1036 = vmatmul.mubr.f32.gmra.mrb[0].mxu0 %v854
        %v1037 = vpop.f32.mrb[0].mxu0
        %v1038 = vadd.f32 0.0, %v1037
        %v1039 = vpop.f32.mrb[0].mxu0
        %1040 = vmatprep.mubr.f32.mxu0 0.0
        %1041 = vmatmul.mubr.f32.gmra.mrb[0].mxu0 %v857
        %v1042 = vpop.f32.mrb[0].mxu0
        %v1043 = vadd.f32 0.0, %v1042
        %v1044 = vpop.f32.mrb[0].mxu0
        %1045 = vmatprep.mubr.f32.mxu0 0.0
        %1046 = vmatmul.mubr.f32.gmra.mrb[0].mxu0 %v860
        %v1047 = vpop.f32.mrb[0].mxu0
        %v1048 = vadd.f32 0.0, %v1047
        %v1049 = vpop.f32.mrb[0].mxu0
        %1050 = vmatprep.mubr.f32.mxu0 0.0
        %1051 = vmatmul.mubr.f32.gmra.mrb[0].mxu0 %v863
        %v1052 = vpop.f32.mrb[0].mxu0
        %v1053 = vadd.f32 0.0, %v1052
        %v1054 = vpop.f32.mrb[0].mxu0
        %1055 = vmatprep.mubr.f32.mxu0 0.0
        %1056 = vmatmul.mubr.f32.gmra.mrb[0].mxu0 %v866
        %v1057 = vpop.f32.mrb[0].mxu0
        %v1058 = vadd.f32 0.0, %v1057
        %v1059 = vpop.f32.mrb[0].mxu0
        %1060 = vmatprep.mubr.f32.mxu0 0.0
        %1061 = vmatmul.mubr.f32.gmra.mrb[0].mxu0 %v869
        %v1062 = vpop.f32.mrb[0].mxu0
        %v1063 = vadd.f32 0.0, %v1062
        %v1064 = vpop.f32.mrb[0].mxu0
        %1065 = vmatprep.mubr.f32.mxu0 0.0
        %1066 = vmatmul.mubr.f32.gmra.mrb[0].mxu0 %v872
        %v1067 = vpop.f32.mrb[0].mxu0
        %v1068 = vadd.f32 0.0, %v1067
        %v1069 = vpop.f32.mrb[0].mxu0
        %1070 = vmatprep.mubr.f32.mxu0 0.0
        %1071 = vmatmul.mubr.f32.gmra.mrb[0].mxu0 %v875
        %v1072 = vpop.f32.mrb[0].mxu0
        %v1073 = vadd.f32 0.0, %v1072
        %v1074 = vpop.f32.mrb[0].mxu0
        %1075 = vmatprep.mubr.f32.mxu0 0.0
        %1076 = vmatmul.mubr.f32.gmra.mrb[0].mxu0 %v878
        %v1077 = vpop.f32.mrb[0].mxu0
        %v1078 = vadd.f32 0.0, %v1077
        %v1079 = vpop.f32.mrb[0].mxu0
        %1080 = vmatprep.mubr.f32.mxu0 0.0
        %1081 = vmatmul.mubr.f32.gmra.mrb[0].mxu0 %v881
        %v1082 = vpop.f32.mrb[0].mxu0
        %v1083 = vadd.f32 0.0, %v1082
        %v1084 = vpop.f32.mrb[0].mxu0
        %1085 = vmatprep.mubr.f32.mxu0 0.0
        %1086 = vmatmul.mubr.f32.gmra.mrb[0].mxu0 %v884
        %v1087 = vpop.f32.mrb[0].mxu0
        %v1088 = vadd.f32 0.0, %v1087
        %v1089 = vpop.f32.mrb[0].mxu0
        %1090 = vmatprep.mubr.f32.mxu0 0.0
        %1091 = vmatmul.mubr.f32.gmra.mrb[0].mxu0 %v887
        %v1092 = vpop.f32.mrb[0].mxu0
        %v1093 = vadd.f32 0.0, %v1092
        %v1094 = vpop.f32.mrb[0].mxu0
        %1095 = vmatprep.mubr.f32.mxu0 0.0
        %1096 = vmatmul.mubr.f32.gmra.mrb[0].mxu0 %v890
        %v1097 = vpop.f32.mrb[0].mxu0
        %v1098 = vadd.f32 0.0, %v1097
        %v1099 = vpop.f32.mrb[0].mxu0
        %1100 = vmatprep.mubr.f32.mxu0 0.0
        %1101 = vmatmul.mubr.f32.gmra.mrb[0].mxu0 %v893
        %v1102 = vpop.f32.mrb[0].mxu0
        %v1103 = vadd.f32 0.0, %v1102
        %v1104 = vpop.f32.mrb[0].mxu0
        %1105 = vmatprep.mubr.f32.mxu0 0.0
        %1106 = vmatmul.mubr.f32.gmra.mrb[0].mxu0 %v896
        %v1107 = vpop.f32.mrb[0].mxu0
        %v1108 = vadd.f32 0.0, %v1107
        %v1109 = vpop.f32.mrb[0].mxu0
        %1110 = vmatprep.mubr.f32.mxu0 0.0
        %1111 = vmatmul.mubr.f32.gmra.mrb[0].mxu0 %v899
        %v1112 = vpop.f32.mrb[0].mxu0
        %v1113 = vadd.f32 0.0, %v1112
        %v1114 = vpop.f32.mrb[0].mxu0
        %1115 = vmatprep.mubr.f32.mxu0 0.0
        %1116 = vmatmul.mubr.f32.gmra.mrb[0].mxu0 %v902
        %v1117 = vpop.f32.mrb[0].mxu0
        %v1118 = vadd.f32 0.0, %v1117
        %v1119 = vpop.f32.mrb[0].mxu0
        %1120 = vmatprep.mubr.f32.mxu0 0.0
        %1121 = vmatmul.mubr.f32.gmra.mrb[0].mxu0 %v905
        %v1122 = vpop.f32.mrb[0].mxu0
        %v1123 = vadd.f32 0.0, %v1122
        %v1124 = vpop.f32.mrb[0].mxu0
        %1125 = vmatprep.mubr.f32.mxu0 0.0
        %1126 = vmatmul.mubr.f32.gmra.mrb[0].mxu0 %v908
        %v1127 = vpop.f32.mrb[0].mxu0
        %v1128 = vadd.f32 0.0, %v1127
        %v1129 = vpop.f32.mrb[0].mxu0
        %1130 = vmatprep.mubr.f32.mxu0 0.0
        %1131 = vmatmul.mubr.f32.gmra.mrb[0].mxu0 %v911
        %v1132 = vpop.f32.mrb[0].mxu0
        %v1133 = vadd.f32 0.0, %v1132
        %v1134 = vpop.f32.mrb[0].mxu0
        %1135 = vmatprep.mubr.f32.mxu0 0.0
        %1136 = vmatmul.mubr.f32.gmra.mrb[0].mxu0 %v914
        %v1137 = vpop.f32.mrb[0].mxu0
        %v1138 = vadd.f32 0.0, %v1137
        %v1139 = vpop.f32.mrb[0].mxu0
        %1140 = vdwg.mxu0
        %v1142 = vsel %vm319, %v747, 0
        %v1145 = vsel %vm319, %v748, 0
        %v1148 = vsel %vm319, %v749, 0
        %v1151 = vsel %vm319, %v750, 0
        %v1154 = vsel %vm319, %v751, 0
        %v1157 = vsel %vm319, %v752, 0
        %v1160 = vsel %vm319, %v753, 0
        %v1163 = vsel %vm319, %v754, 0
        %v1166 = vsel %vm319, %v755, 0
        %v1169 = vsel %vm319, %v756, 0
        %v1172 = vsel %vm319, %v757, 0
        %v1175 = vsel %vm319, %v758, 0
        %v1178 = vsel %vm319, %v759, 0
        %v1181 = vsel %vm319, %v760, 0
        %v1184 = vsel %vm319, %v761, 0
        %v1187 = vsel %vm319, %v762, 0
        %v1190 = vsel %vm319, %v763, 0
        %v1193 = vsel %vm319, %v764, 0
        %v1196 = vsel %vm319, %v765, 0
        %v1199 = vsel %vm319, %v766, 0
        %v1202 = vsel %vm319, %v767, 0
        %v1205 = vsel %vm319, %v768, 0
        %v1208 = vsel %vm319, %v769, 0
        %v1211 = vsel %vm319, %v770, 0
        %v1214 = vsel %vm319, %v771, 0
        %v1217 = vsel %vm319, %v772, 0
        %v1220 = vsel %vm319, %v773, 0
        %v1223 = vsel %vm319, %v774, 0
        %v1226 = vsel %vm319, %v775, 0
        %v1229 = vsel %vm319, %v776, 0
        %v1232 = vsel %vm319, %v777, 0
        %v1235 = vsel %vm319, %v778, 0
        %1237 = vmatprep.subr.mxu0 0.0
        %1238 = vmatpush1.msra.mxu0 %v779
        %1239 = vmatprep.subr.mxu0 0.0
        %1240 = vmatpush1.msra.mxu0 %v780
        %1241 = vmatprep.subr.mxu0 0.0
        %1242 = vmatpush1.msra.mxu0 %v781
        %1243 = vmatprep.subr.mxu0 0.0
        %1244 = vmatpush1.msra.mxu0 %v782
        %1245 = vmatprep.subr.mxu0 0.0
        %1246 = vmatpush1.msra.mxu0 0.0
        %1247 = vmatprep.subr.mxu0 0.0
        %1248 = vmatpush1.msra.mxu0 0.0
        %1249 = vmatprep.subr.mxu0 0.0
        %1250 = vmatpush1.msra.mxu0 0.0
        %1251 = vmatprep.subr.mxu0 0.0
        %1252 = vmatpush1.msra.mxu0 0.0
        %1253 = vmatprep.subr.mxu0 0.0
        %1254 = vmatpush1.msra.mxu0 0.0
        %1255 = vmatprep.subr.mxu0 0.0
        %1256 = vmatpush1.msra.mxu0 0.0
        %1257 = vmatprep.subr.mxu0 0.0
        %1258 = vmatpush1.msra.mxu0 0.0
        %1259 = vmatprep.subr.mxu0 0.0
        %1260 = vmatpush1.msra.mxu0 0.0
        %1261 = vmatprep.subr.mxu0 0.0
        %1262 = vmatpush1.msra.mxu0 0.0
        %1263 = vmatprep.subr.mxu0 0.0
        %1264 = vmatpush1.msra.mxu0 0.0
        %1265 = vmatprep.subr.mxu0 0.0
        %1266 = vmatpush1.msra.mxu0 0.0
        %1267 = vmatprep.subr.mxu0 0.0
        %1268 = vmatpush1.msra.mxu0 0.0
        %1269 = vmatprep.subr.mxu0 0.0
        %1270 = vmatpush1.msra.mxu0 0.0
        %1271 = vmatprep.subr.mxu0 0.0
        %1272 = vmatpush1.msra.mxu0 0.0
        %1273 = vmatprep.subr.mxu0 0.0
        %1274 = vmatpush1.msra.mxu0 0.0
        %1275 = vmatprep.subr.mxu0 0.0
        %1276 = vmatpush1.msra.mxu0 0.0
        %1277 = vmatprep.subr.mxu0 0.0
        %1278 = vmatpush1.msra.mxu0 0.0
        %1279 = vmatprep.subr.mxu0 0.0
        %1280 = vmatpush1.msra.mxu0 0.0
        %1281 = vmatprep.subr.mxu0 0.0
        %1282 = vmatpush1.msra.mxu0 0.0
        %1283 = vmatprep.subr.mxu0 0.0
        %1284 = vmatpush1.msra.mxu0 0.0
        %1285 = vmatprep.subr.mxu0 0.0
        %1286 = vmatpush1.msra.mxu0 0.0
        %1287 = vmatprep.subr.mxu0 0.0
        %1288 = vmatpush1.msra.mxu0 0.0
        %1289 = vmatprep.subr.mxu0 0.0
        %1290 = vmatpush1.msra.mxu0 0.0
        %1291 = vmatprep.subr.mxu0 0.0
        %1292 = vmatpush1.msra.mxu0 0.0
        %1293 = vmatprep.subr.mxu0 0.0
        %1294 = vmatpush1.msra.mxu0 0.0
        %1295 = vmatprep.subr.mxu0 0.0
        %1296 = vmatpush1.msra.mxu0 0.0
        %1297 = vmatprep.subr.mxu0 0.0
        %1298 = vmatpush1.msra.mxu0 0.0
        %1299 = vmatprep.subr.mxu0 0.0
        %1300 = vmatpush1.msra.mxu0 0.0
        %1301 = vmatprep.mubr.f32.mxu0 0.0
        %1302 = vmatmul.mubr.f32.gmra.mrb[0].mxu0 %v1142
        %v1303 = vpop.f32.mrb[0].mxu0
        %v1304 = vadd.f32 %v983, %v1303
        %v1305 = vpop.f32.mrb[0].mxu0
        %1306 = vmatprep.mubr.f32.mxu0 0.0
        %1307 = vmatmul.mubr.f32.gmra.mrb[0].mxu0 %v1145
        %v1308 = vpop.f32.mrb[0].mxu0
        %v1309 = vadd.f32 %v988, %v1308
        %v1310 = vpop.f32.mrb[0].mxu0
        %1311 = vmatprep.mubr.f32.mxu0 0.0
        %1312 = vmatmul.mubr.f32.gmra.mrb[0].mxu0 %v1148
        %v1313 = vpop.f32.mrb[0].mxu0
        %v1314 = vadd.f32 %v993, %v1313
        %v1315 = vpop.f32.mrb[0].mxu0
        %1316 = vmatprep.mubr.f32.mxu0 0.0
        %1317 = vmatmul.mubr.f32.gmra.mrb[0].mxu0 %v1151
        %v1318 = vpop.f32.mrb[0].mxu0
        %v1319 = vadd.f32 %v998, %v1318
        %v1320 = vpop.f32.mrb[0].mxu0
        %1321 = vmatprep.mubr.f32.mxu0 0.0
        %1322 = vmatmul.mubr.f32.gmra.mrb[0].mxu0 %v1154
        %v1323 = vpop.f32.mrb[0].mxu0
        %v1324 = vadd.f32 %v1003, %v1323
        %v1325 = vpop.f32.mrb[0].mxu0
        %1326 = vmatprep.mubr.f32.mxu0 0.0
        %1327 = vmatmul.mubr.f32.gmra.mrb[0].mxu0 %v1157
        %v1328 = vpop.f32.mrb[0].mxu0
        %v1329 = vadd.f32 %v1008, %v1328
        %v1330 = vpop.f32.mrb[0].mxu0
        %1331 = vmatprep.mubr.f32.mxu0 0.0
        %1332 = vmatmul.mubr.f32.gmra.mrb[0].mxu0 %v1160
        %v1333 = vpop.f32.mrb[0].mxu0
        %v1334 = vadd.f32 %v1013, %v1333
        %v1335 = vpop.f32.mrb[0].mxu0
        %1336 = vmatprep.mubr.f32.mxu0 0.0
        %1337 = vmatmul.mubr.f32.gmra.mrb[0].mxu0 %v1163
        %v1338 = vpop.f32.mrb[0].mxu0
        %v1339 = vadd.f32 %v1018, %v1338
        %v1340 = vpop.f32.mrb[0].mxu0
        %1341 = vmatprep.mubr.f32.mxu0 0.0
        %1342 = vmatmul.mubr.f32.gmra.mrb[0].mxu0 %v1166
        %v1343 = vpop.f32.mrb[0].mxu0
        %v1344 = vadd.f32 %v1023, %v1343
        %v1345 = vpop.f32.mrb[0].mxu0
        %1346 = vmatprep.mubr.f32.mxu0 0.0
        %1347 = vmatmul.mubr.f32.gmra.mrb[0].mxu0 %v1169
        %v1348 = vpop.f32.mrb[0].mxu0
        %v1349 = vadd.f32 %v1028, %v1348
        %v1350 = vpop.f32.mrb[0].mxu0
        %1351 = vmatprep.mubr.f32.mxu0 0.0
        %1352 = vmatmul.mubr.f32.gmra.mrb[0].mxu0 %v1172
        %v1353 = vpop.f32.mrb[0].mxu0
        %v1354 = vadd.f32 %v1033, %v1353
        %v1355 = vpop.f32.mrb[0].mxu0
        %1356 = vmatprep.mubr.f32.mxu0 0.0
        %1357 = vmatmul.mubr.f32.gmra.mrb[0].mxu0 %v1175
        %v1358 = vpop.f32.mrb[0].mxu0
        %v1359 = vadd.f32 %v1038, %v1358
        %v1360 = vpop.f32.mrb[0].mxu0
        %1361 = vmatprep.mubr.f32.mxu0 0.0
        %1362 = vmatmul.mubr.f32.gmra.mrb[0].mxu0 %v1178
        %v1363 = vpop.f32.mrb[0].mxu0
        %v1364 = vadd.f32 %v1043, %v1363
        %v1365 = vpop.f32.mrb[0].mxu0
        %1366 = vmatprep.mubr.f32.mxu0 0.0
        %1367 = vmatmul.mubr.f32.gmra.mrb[0].mxu0 %v1181
        %v1368 = vpop.f32.mrb[0].mxu0
        %v1369 = vadd.f32 %v1048, %v1368
        %v1370 = vpop.f32.mrb[0].mxu0
        %1371 = vmatprep.mubr.f32.mxu0 0.0
        %1372 = vmatmul.mubr.f32.gmra.mrb[0].mxu0 %v1184
        %v1373 = vpop.f32.mrb[0].mxu0
        %v1374 = vadd.f32 %v1053, %v1373
        %v1375 = vpop.f32.mrb[0].mxu0
        %1376 = vmatprep.mubr.f32.mxu0 0.0
        %1377 = vmatmul.mubr.f32.gmra.mrb[0].mxu0 %v1187
        %v1378 = vpop.f32.mrb[0].mxu0
        %v1379 = vadd.f32 %v1058, %v1378
        %v1380 = vpop.f32.mrb[0].mxu0
        %1381 = vmatprep.mubr.f32.mxu0 0.0
        %1382 = vmatmul.mubr.f32.gmra.mrb[0].mxu0 %v1190
        %v1383 = vpop.f32.mrb[0].mxu0
        %v1384 = vadd.f32 %v1063, %v1383
        %v1385 = vpop.f32.mrb[0].mxu0
        %1386 = vmatprep.mubr.f32.mxu0 0.0
        %1387 = vmatmul.mubr.f32.gmra.mrb[0].mxu0 %v1193
        %v1388 = vpop.f32.mrb[0].mxu0
        %v1389 = vadd.f32 %v1068, %v1388
        %v1390 = vpop.f32.mrb[0].mxu0
        %1391 = vmatprep.mubr.f32.mxu0 0.0
        %1392 = vmatmul.mubr.f32.gmra.mrb[0].mxu0 %v1196
        %v1393 = vpop.f32.mrb[0].mxu0
        %v1394 = vadd.f32 %v1073, %v1393
        %v1395 = vpop.f32.mrb[0].mxu0
        %1396 = vmatprep.mubr.f32.mxu0 0.0
        %1397 = vmatmul.mubr.f32.gmra.mrb[0].mxu0 %v1199
        %v1398 = vpop.f32.mrb[0].mxu0
        %v1399 = vadd.f32 %v1078, %v1398
        %v1400 = vpop.f32.mrb[0].mxu0
        %1401 = vmatprep.mubr.f32.mxu0 0.0
        %1402 = vmatmul.mubr.f32.gmra.mrb[0].mxu0 %v1202
        %v1403 = vpop.f32.mrb[0].mxu0
        %v1404 = vadd.f32 %v1083, %v1403
        %v1405 = vpop.f32.mrb[0].mxu0
        %1406 = vmatprep.mubr.f32.mxu0 0.0
        %1407 = vmatmul.mubr.f32.gmra.mrb[0].mxu0 %v1205
        %v1408 = vpop.f32.mrb[0].mxu0
        %v1409 = vadd.f32 %v1088, %v1408
        %v1410 = vpop.f32.mrb[0].mxu0
        %1411 = vmatprep.mubr.f32.mxu0 0.0
        %1412 = vmatmul.mubr.f32.gmra.mrb[0].mxu0 %v1208
        %v1413 = vpop.f32.mrb[0].mxu0
        %v1414 = vadd.f32 %v1093, %v1413
        %v1415 = vpop.f32.mrb[0].mxu0
        %1416 = vmatprep.mubr.f32.mxu0 0.0
        %1417 = vmatmul.mubr.f32.gmra.mrb[0].mxu0 %v1211
        %v1418 = vpop.f32.mrb[0].mxu0
        %v1419 = vadd.f32 %v1098, %v1418
        %v1420 = vpop.f32.mrb[0].mxu0
        %1421 = vmatprep.mubr.f32.mxu0 0.0
        %1422 = vmatmul.mubr.f32.gmra.mrb[0].mxu0 %v1214
        %v1423 = vpop.f32.mrb[0].mxu0
        %v1424 = vadd.f32 %v1103, %v1423
        %v1425 = vpop.f32.mrb[0].mxu0
        %1426 = vmatprep.mubr.f32.mxu0 0.0
        %1427 = vmatmul.mubr.f32.gmra.mrb[0].mxu0 %v1217
        %v1428 = vpop.f32.mrb[0].mxu0
        %v1429 = vadd.f32 %v1108, %v1428
        %v1430 = vpop.f32.mrb[0].mxu0
        %1431 = vmatprep.mubr.f32.mxu0 0.0
        %1432 = vmatmul.mubr.f32.gmra.mrb[0].mxu0 %v1220
        %v1433 = vpop.f32.mrb[0].mxu0
        %v1434 = vadd.f32 %v1113, %v1433
        %v1435 = vpop.f32.mrb[0].mxu0
        %1436 = vmatprep.mubr.f32.mxu0 0.0
        %1437 = vmatmul.mubr.f32.gmra.mrb[0].mxu0 %v1223
        %v1438 = vpop.f32.mrb[0].mxu0
        %v1439 = vadd.f32 %v1118, %v1438
        %v1440 = vpop.f32.mrb[0].mxu0
        %1441 = vmatprep.mubr.f32.mxu0 0.0
        %1442 = vmatmul.mubr.f32.gmra.mrb[0].mxu0 %v1226
        %v1443 = vpop.f32.mrb[0].mxu0
        %v1444 = vadd.f32 %v1123, %v1443
        %v1445 = vpop.f32.mrb[0].mxu0
        %1446 = vmatprep.mubr.f32.mxu0 0.0
        %1447 = vmatmul.mubr.f32.gmra.mrb[0].mxu0 %v1229
        %v1448 = vpop.f32.mrb[0].mxu0
        %v1449 = vadd.f32 %v1128, %v1448
        %v1450 = vpop.f32.mrb[0].mxu0
        %1451 = vmatprep.mubr.f32.mxu0 0.0
        %1452 = vmatmul.mubr.f32.gmra.mrb[0].mxu0 %v1232
        %v1453 = vpop.f32.mrb[0].mxu0
        %v1454 = vadd.f32 %v1133, %v1453
        %v1455 = vpop.f32.mrb[0].mxu0
        %1456 = vmatprep.mubr.f32.mxu0 0.0
        %1457 = vmatmul.mubr.f32.gmra.mrb[0].mxu0 %v1235
        %v1458 = vpop.f32.mrb[0].mxu0
        %v1459 = vadd.f32 %v1138, %v1458
        %v1460 = vpop.f32.mrb[0].mxu0
        %1461 = vdwg.mxu0
        %v1462 = vld [vmem:[#allocation2 + $0x9] sm:$0xff]
        %v1463 = vld [vmem:[#allocation2 + $0x11] sm:$0xff]
        %v1464 = vld [vmem:[#allocation2 + $0x29] sm:$0xff]
        %v1465 = vld [vmem:[#allocation2 + $0x31] sm:$0xff]
        %v1466 = vld [vmem:[#allocation2 + $0x49] sm:$0xff]
        %v1467 = vld [vmem:[#allocation2 + $0x51] sm:$0xff]
        %v1468 = vld [vmem:[#allocation2 + $0x69] sm:$0xff]
        %v1469 = vld [vmem:[#allocation2 + $0x71] sm:$0xff]
        %v1470 = vld [vmem:[#allocation2 + $0x89] sm:$0xff]
        %v1471 = vld [vmem:[#allocation2 + $0x91] sm:$0xff]
        %v1472 = vld [vmem:[#allocation2 + $0xa9] sm:$0xff]
        %v1473 = vld [vmem:[#allocation2 + $0xb1] sm:$0xff]
        %v1474 = vld [vmem:[#allocation2 + $0xc9] sm:$0xff]
        %v1475 = vld [vmem:[#allocation2 + $0xd1] sm:$0xff]
        %v1476 = vld [vmem:[#allocation2 + $0xe9] sm:$0xff]
        %v1477 = vld [vmem:[#allocation2 + $0xf1] sm:$0xff]
        %v1478 = vld [vmem:[#allocation2 + $0x109] sm:$0xff]
        %v1479 = vld [vmem:[#allocation2 + $0x111] sm:$0xff]
        %v1480 = vld [vmem:[#allocation2 + $0x129] sm:$0xff]
        %v1481 = vld [vmem:[#allocation2 + $0x131] sm:$0xff]
        %v1482 = vld [vmem:[#allocation2 + $0x149] sm:$0xff]
        %v1483 = vld [vmem:[#allocation2 + $0x151] sm:$0xff]
        %v1484 = vld [vmem:[#allocation2 + $0x169] sm:$0xff]
        %v1485 = vld [vmem:[#allocation2 + $0x171] sm:$0xff]
        %v1486 = vld [vmem:[#allocation2 + $0x189] sm:$0xff]
        %v1487 = vld [vmem:[#allocation2 + $0x191] sm:$0xff]
        %v1488 = vld [vmem:[#allocation2 + $0x1a9] sm:$0xff]
        %v1489 = vld [vmem:[#allocation2 + $0x1b1] sm:$0xff]
        %v1490 = vld [vmem:[#allocation2 + $0x1c9] sm:$0xff]
        %v1491 = vld [vmem:[#allocation2 + $0x1d1] sm:$0xff]
        %v1492 = vld [vmem:[#allocation2 + $0x1e9] sm:$0xff]
        %v1493 = vld [vmem:[#allocation2 + $0x1f1] sm:$0xff]
        %s1494 = scalar_lea.vmem %s3, 64
        %v1495 = vld [vmem:[%s1494] sm:$0xff]
        %v1496 = vld [vmem:[%s1494 + $0x8] sm:$0xff]
        %v1497 = vld [vmem:[%s1494 + $0x10] sm:$0xff]
        %v1498 = vld [vmem:[%s1494 + $0x18] sm:$0xff]
        %v1500 = vsel %vm319, %v1462, 0
        %v1503 = vsel %vm319, %v1463, 0
        %v1506 = vsel %vm319, %v1464, 0
        %v1509 = vsel %vm319, %v1465, 0
        %v1512 = vsel %vm319, %v1466, 0
        %v1515 = vsel %vm319, %v1467, 0
        %v1518 = vsel %vm319, %v1468, 0
        %v1521 = vsel %vm319, %v1469, 0
        %v1524 = vsel %vm319, %v1470, 0
        %v1527 = vsel %vm319, %v1471, 0
        %v1530 = vsel %vm319, %v1472, 0
        %v1533 = vsel %vm319, %v1473, 0
        %v1536 = vsel %vm319, %v1474, 0
        %v1539 = vsel %vm319, %v1475, 0
        %v1542 = vsel %vm319, %v1476, 0
        %v1545 = vsel %vm319, %v1477, 0
        %v1548 = vsel %vm319, %v1478, 0
        %v1551 = vsel %vm319, %v1479, 0
        %v1554 = vsel %vm319, %v1480, 0
        %v1557 = vsel %vm319, %v1481, 0
        %v1560 = vsel %vm319, %v1482, 0
        %v1563 = vsel %vm319, %v1483, 0
        %v1566 = vsel %vm319, %v1484, 0
        %v1569 = vsel %vm319, %v1485, 0
        %v1572 = vsel %vm319, %v1486, 0
        %v1575 = vsel %vm319, %v1487, 0
        %v1578 = vsel %vm319, %v1488, 0
        %v1581 = vsel %vm319, %v1489, 0
        %v1584 = vsel %vm319, %v1490, 0
        %v1587 = vsel %vm319, %v1491, 0
        %v1590 = vsel %vm319, %v1492, 0
        %v1593 = vsel %vm319, %v1493, 0
        %1595 = vmatprep.subr.mxu0 0.0
        %1596 = vmatpush1.msra.mxu0 %v1495
        %1597 = vmatprep.subr.mxu0 0.0
        %1598 = vmatpush1.msra.mxu0 %v1496
        %1599 = vmatprep.subr.mxu0 0.0
        %1600 = vmatpush1.msra.mxu0 %v1497
        %1601 = vmatprep.subr.mxu0 0.0
        %1602 = vmatpush1.msra.mxu0 %v1498
        %1603 = vmatprep.subr.mxu0 0.0
        %1604 = vmatpush1.msra.mxu0 0.0
        %1605 = vmatprep.subr.mxu0 0.0
        %1606 = vmatpush1.msra.mxu0 0.0
        %1607 = vmatprep.subr.mxu0 0.0
        %1608 = vmatpush1.msra.mxu0 0.0
        %1609 = vmatprep.subr.mxu0 0.0
        %1610 = vmatpush1.msra.mxu0 0.0
        %1611 = vmatprep.subr.mxu0 0.0
        %1612 = vmatpush1.msra.mxu0 0.0
        %1613 = vmatprep.subr.mxu0 0.0
        %1614 = vmatpush1.msra.mxu0 0.0
        %1615 = vmatprep.subr.mxu0 0.0
        %1616 = vmatpush1.msra.mxu0 0.0
        %1617 = vmatprep.subr.mxu0 0.0
        %1618 = vmatpush1.msra.mxu0 0.0
        %1619 = vmatprep.subr.mxu0 0.0
        %1620 = vmatpush1.msra.mxu0 0.0
        %1621 = vmatprep.subr.mxu0 0.0
        %1622 = vmatpush1.msra.mxu0 0.0
        %1623 = vmatprep.subr.mxu0 0.0
        %1624 = vmatpush1.msra.mxu0 0.0
        %1625 = vmatprep.subr.mxu0 0.0
        %1626 = vmatpush1.msra.mxu0 0.0
        %1627 = vmatprep.subr.mxu0 0.0
        %1628 = vmatpush1.msra.mxu0 0.0
        %1629 = vmatprep.subr.mxu0 0.0
        %1630 = vmatpush1.msra.mxu0 0.0
        %1631 = vmatprep.subr.mxu0 0.0
        %1632 = vmatpush1.msra.mxu0 0.0
        %1633 = vmatprep.subr.mxu0 0.0
        %1634 = vmatpush1.msra.mxu0 0.0
        %1635 = vmatprep.subr.mxu0 0.0
        %1636 = vmatpush1.msra.mxu0 0.0
        %1637 = vmatprep.subr.mxu0 0.0
        %1638 = vmatpush1.msra.mxu0 0.0
        %1639 = vmatprep.subr.mxu0 0.0
        %1640 = vmatpush1.msra.mxu0 0.0
        %1641 = vmatprep.subr.mxu0 0.0
        %1642 = vmatpush1.msra.mxu0 0.0
        %1643 = vmatprep.subr.mxu0 0.0
        %1644 = vmatpush1.msra.mxu0 0.0
        %1645 = vmatprep.subr.mxu0 0.0
        %1646 = vmatpush1.msra.mxu0 0.0
        %1647 = vmatprep.subr.mxu0 0.0
        %1648 = vmatpush1.msra.mxu0 0.0
        %1649 = vmatprep.subr.mxu0 0.0
        %1650 = vmatpush1.msra.mxu0 0.0
        %1651 = vmatprep.subr.mxu0 0.0
        %1652 = vmatpush1.msra.mxu0 0.0
        %1653 = vmatprep.subr.mxu0 0.0
        %1654 = vmatpush1.msra.mxu0 0.0
        %1655 = vmatprep.subr.mxu0 0.0
        %1656 = vmatpush1.msra.mxu0 0.0
        %1657 = vmatprep.subr.mxu0 0.0
        %1658 = vmatpush1.msra.mxu0 0.0
        %1659 = vmatprep.mubr.f32.mxu0 0.0
        %1660 = vmatmul.mubr.f32.gmra.mrb[0].mxu0 %v1500
        %v1661 = vpop.f32.mrb[0].mxu0
        %v1662 = vadd.f32 0.0, %v1661
        %v1663 = vpop.f32.mrb[0].mxu0
        %1664 = vmatprep.mubr.f32.mxu0 0.0
        %1665 = vmatmul.mubr.f32.gmra.mrb[0].mxu0 %v1503
        %v1666 = vpop.f32.mrb[0].mxu0
        %v1667 = vadd.f32 0.0, %v1666
        %v1668 = vpop.f32.mrb[0].mxu0
        %1669 = vmatprep.mubr.f32.mxu0 0.0
        %1670 = vmatmul.mubr.f32.gmra.mrb[0].mxu0 %v1506
        %v1671 = vpop.f32.mrb[0].mxu0
        %v1672 = vadd.f32 0.0, %v1671
        %v1673 = vpop.f32.mrb[0].mxu0
        %1674 = vmatprep.mubr.f32.mxu0 0.0
        %1675 = vmatmul.mubr.f32.gmra.mrb[0].mxu0 %v1509
        %v1676 = vpop.f32.mrb[0].mxu0
        %v1677 = vadd.f32 0.0, %v1676
        %v1678 = vpop.f32.mrb[0].mxu0
        %1679 = vmatprep.mubr.f32.mxu0 0.0
        %1680 = vmatmul.mubr.f32.gmra.mrb[0].mxu0 %v1512
        %v1681 = vpop.f32.mrb[0].mxu0
        %v1682 = vadd.f32 0.0, %v1681
        %v1683 = vpop.f32.mrb[0].mxu0
        %1684 = vmatprep.mubr.f32.mxu0 0.0
        %1685 = vmatmul.mubr.f32.gmra.mrb[0].mxu0 %v1515
        %v1686 = vpop.f32.mrb[0].mxu0
        %v1687 = vadd.f32 0.0, %v1686
        %v1688 = vpop.f32.mrb[0].mxu0
        %1689 = vmatprep.mubr.f32.mxu0 0.0
        %1690 = vmatmul.mubr.f32.gmra.mrb[0].mxu0 %v1518
        %v1691 = vpop.f32.mrb[0].mxu0
        %v1692 = vadd.f32 0.0, %v1691
        %v1693 = vpop.f32.mrb[0].mxu0
        %1694 = vmatprep.mubr.f32.mxu0 0.0
        %1695 = vmatmul.mubr.f32.gmra.mrb[0].mxu0 %v1521
        %v1696 = vpop.f32.mrb[0].mxu0
        %v1697 = vadd.f32 0.0, %v1696
        %v1698 = vpop.f32.mrb[0].mxu0
        %1699 = vmatprep.mubr.f32.mxu0 0.0
        %1700 = vmatmul.mubr.f32.gmra.mrb[0].mxu0 %v1524
        %v1701 = vpop.f32.mrb[0].mxu0
        %v1702 = vadd.f32 0.0, %v1701
        %v1703 = vpop.f32.mrb[0].mxu0
        %1704 = vmatprep.mubr.f32.mxu0 0.0
        %1705 = vmatmul.mubr.f32.gmra.mrb[0].mxu0 %v1527
        %v1706 = vpop.f32.mrb[0].mxu0
        %v1707 = vadd.f32 0.0, %v1706
        %v1708 = vpop.f32.mrb[0].mxu0
        %1709 = vmatprep.mubr.f32.mxu0 0.0
        %1710 = vmatmul.mubr.f32.gmra.mrb[0].mxu0 %v1530
        %v1711 = vpop.f32.mrb[0].mxu0
        %v1712 = vadd.f32 0.0, %v1711
        %v1713 = vpop.f32.mrb[0].mxu0
        %1714 = vmatprep.mubr.f32.mxu0 0.0
        %1715 = vmatmul.mubr.f32.gmra.mrb[0].mxu0 %v1533
        %v1716 = vpop.f32.mrb[0].mxu0
        %v1717 = vadd.f32 0.0, %v1716
        %v1718 = vpop.f32.mrb[0].mxu0
        %1719 = vmatprep.mubr.f32.mxu0 0.0
        %1720 = vmatmul.mubr.f32.gmra.mrb[0].mxu0 %v1536
        %v1721 = vpop.f32.mrb[0].mxu0
        %v1722 = vadd.f32 0.0, %v1721
        %v1723 = vpop.f32.mrb[0].mxu0
        %1724 = vmatprep.mubr.f32.mxu0 0.0
        %1725 = vmatmul.mubr.f32.gmra.mrb[0].mxu0 %v1539
        %v1726 = vpop.f32.mrb[0].mxu0
        %v1727 = vadd.f32 0.0, %v1726
        %v1728 = vpop.f32.mrb[0].mxu0
        %1729 = vmatprep.mubr.f32.mxu0 0.0
        %1730 = vmatmul.mubr.f32.gmra.mrb[0].mxu0 %v1542
        %v1731 = vpop.f32.mrb[0].mxu0
        %v1732 = vadd.f32 0.0, %v1731
        %v1733 = vpop.f32.mrb[0].mxu0
        %1734 = vmatprep.mubr.f32.mxu0 0.0
        %1735 = vmatmul.mubr.f32.gmra.mrb[0].mxu0 %v1545
        %v1736 = vpop.f32.mrb[0].mxu0
        %v1737 = vadd.f32 0.0, %v1736
        %v1738 = vpop.f32.mrb[0].mxu0
        %1739 = vmatprep.mubr.f32.mxu0 0.0
        %1740 = vmatmul.mubr.f32.gmra.mrb[0].mxu0 %v1548
        %v1741 = vpop.f32.mrb[0].mxu0
        %v1742 = vadd.f32 0.0, %v1741
        %v1743 = vpop.f32.mrb[0].mxu0
        %1744 = vmatprep.mubr.f32.mxu0 0.0
        %1745 = vmatmul.mubr.f32.gmra.mrb[0].mxu0 %v1551
        %v1746 = vpop.f32.mrb[0].mxu0
        %v1747 = vadd.f32 0.0, %v1746
        %v1748 = vpop.f32.mrb[0].mxu0
        %1749 = vmatprep.mubr.f32.mxu0 0.0
        %1750 = vmatmul.mubr.f32.gmra.mrb[0].mxu0 %v1554
        %v1751 = vpop.f32.mrb[0].mxu0
        %v1752 = vadd.f32 0.0, %v1751
        %v1753 = vpop.f32.mrb[0].mxu0
        %1754 = vmatprep.mubr.f32.mxu0 0.0
        %1755 = vmatmul.mubr.f32.gmra.mrb[0].mxu0 %v1557
        %v1756 = vpop.f32.mrb[0].mxu0
        %v1757 = vadd.f32 0.0, %v1756
        %v1758 = vpop.f32.mrb[0].mxu0
        %1759 = vmatprep.mubr.f32.mxu0 0.0
        %1760 = vmatmul.mubr.f32.gmra.mrb[0].mxu0 %v1560
        %v1761 = vpop.f32.mrb[0].mxu0
        %v1762 = vadd.f32 0.0, %v1761
        %v1763 = vpop.f32.mrb[0].mxu0
        %1764 = vmatprep.mubr.f32.mxu0 0.0
        %1765 = vmatmul.mubr.f32.gmra.mrb[0].mxu0 %v1563
        %v1766 = vpop.f32.mrb[0].mxu0
        %v1767 = vadd.f32 0.0, %v1766
        %v1768 = vpop.f32.mrb[0].mxu0
        %1769 = vmatprep.mubr.f32.mxu0 0.0
        %1770 = vmatmul.mubr.f32.gmra.mrb[0].mxu0 %v1566
        %v1771 = vpop.f32.mrb[0].mxu0
        %v1772 = vadd.f32 0.0, %v1771
        %v1773 = vpop.f32.mrb[0].mxu0
        %1774 = vmatprep.mubr.f32.mxu0 0.0
        %1775 = vmatmul.mubr.f32.gmra.mrb[0].mxu0 %v1569
        %v1776 = vpop.f32.mrb[0].mxu0
        %v1777 = vadd.f32 0.0, %v1776
        %v1778 = vpop.f32.mrb[0].mxu0
        %1779 = vmatprep.mubr.f32.mxu0 0.0
        %1780 = vmatmul.mubr.f32.gmra.mrb[0].mxu0 %v1572
        %v1781 = vpop.f32.mrb[0].mxu0
        %v1782 = vadd.f32 0.0, %v1781
        %v1783 = vpop.f32.mrb[0].mxu0
        %1784 = vmatprep.mubr.f32.mxu0 0.0
        %1785 = vmatmul.mubr.f32.gmra.mrb[0].mxu0 %v1575
        %v1786 = vpop.f32.mrb[0].mxu0
        %v1787 = vadd.f32 0.0, %v1786
        %v1788 = vpop.f32.mrb[0].mxu0
        %1789 = vmatprep.mubr.f32.mxu0 0.0
        %1790 = vmatmul.mubr.f32.gmra.mrb[0].mxu0 %v1578
        %v1791 = vpop.f32.mrb[0].mxu0
        %v1792 = vadd.f32 0.0, %v1791
        %v1793 = vpop.f32.mrb[0].mxu0
        %1794 = vmatprep.mubr.f32.mxu0 0.0
        %1795 = vmatmul.mubr.f32.gmra.mrb[0].mxu0 %v1581
        %v1796 = vpop.f32.mrb[0].mxu0
        %v1797 = vadd.f32 0.0, %v1796
        %v1798 = vpop.f32.mrb[0].mxu0
        %1799 = vmatprep.mubr.f32.mxu0 0.0
        %1800 = vmatmul.mubr.f32.gmra.mrb[0].mxu0 %v1584
        %v1801 = vpop.f32.mrb[0].mxu0
        %v1802 = vadd.f32 0.0, %v1801
        %v1803 = vpop.f32.mrb[0].mxu0
        %1804 = vmatprep.mubr.f32.mxu0 0.0
        %1805 = vmatmul.mubr.f32.gmra.mrb[0].mxu0 %v1587
        %v1806 = vpop.f32.mrb[0].mxu0
        %v1807 = vadd.f32 0.0, %v1806
        %v1808 = vpop.f32.mrb[0].mxu0
        %1809 = vmatprep.mubr.f32.mxu0 0.0
        %1810 = vmatmul.mubr.f32.gmra.mrb[0].mxu0 %v1590
        %v1811 = vpop.f32.mrb[0].mxu0
        %v1812 = vadd.f32 0.0, %v1811
        %v1813 = vpop.f32.mrb[0].mxu0
        %1814 = vmatprep.mubr.f32.mxu0 0.0
        %1815 = vmatmul.mubr.f32.gmra.mrb[0].mxu0 %v1593
        %v1816 = vpop.f32.mrb[0].mxu0
        %v1817 = vadd.f32 0.0, %v1816
        %v1818 = vpop.f32.mrb[0].mxu0
        %1819 = vdwg.mxu0
        %v1820 = vadd.f32 %v1304, %v1662
        %v1821 = vadd.f32 %v1309, %v1667
        %v1822 = vadd.f32 %v1314, %v1672
        %v1823 = vadd.f32 %v1319, %v1677
        %v1824 = vadd.f32 %v1324, %v1682
        %v1825 = vadd.f32 %v1329, %v1687
        %v1826 = vadd.f32 %v1334, %v1692
        %v1827 = vadd.f32 %v1339, %v1697
        %v1828 = vadd.f32 %v1344, %v1702
        %v1829 = vadd.f32 %v1349, %v1707
        %v1830 = vadd.f32 %v1354, %v1712
        %v1831 = vadd.f32 %v1359, %v1717
        %v1832 = vadd.f32 %v1364, %v1722
        %v1833 = vadd.f32 %v1369, %v1727
        %v1834 = vadd.f32 %v1374, %v1732
        %v1835 = vadd.f32 %v1379, %v1737
        %v1836 = vadd.f32 %v1384, %v1742
        %v1837 = vadd.f32 %v1389, %v1747
        %v1838 = vadd.f32 %v1394, %v1752
        %v1839 = vadd.f32 %v1399, %v1757
        %v1840 = vadd.f32 %v1404, %v1762
        %v1841 = vadd.f32 %v1409, %v1767
        %v1842 = vadd.f32 %v1414, %v1772
        %v1843 = vadd.f32 %v1419, %v1777
        %v1844 = vadd.f32 %v1424, %v1782
        %v1845 = vadd.f32 %v1429, %v1787
        %v1846 = vadd.f32 %v1434, %v1792
        %v1847 = vadd.f32 %v1439, %v1797
        %v1848 = vadd.f32 %v1444, %v1802
        %v1849 = vadd.f32 %v1449, %v1807
        %v1850 = vadd.f32 %v1454, %v1812
        %v1851 = vadd.f32 %v1459, %v1817
        %v1852 = vld [vmem:[%s681 + $0x7] sm:$0xff]
        %v1853 = vld [vmem:[%s681 + $0xf] sm:$0xff]
        %v1854 = vld [vmem:[%s681 + $0x27] sm:$0xff]
        %v1855 = vld [vmem:[%s681 + $0x2f] sm:$0xff]
        %v1856 = vld [vmem:[%s681 + $0x47] sm:$0xff]
        %v1857 = vld [vmem:[%s681 + $0x4f] sm:$0xff]
        %v1858 = vld [vmem:[%s681 + $0x67] sm:$0xff]
        %v1859 = vld [vmem:[%s681 + $0x6f] sm:$0xff]
        %v1860 = vld [vmem:[%s681 + $0x87] sm:$0xff]
        %v1861 = vld [vmem:[%s681 + $0x8f] sm:$0xff]
        %v1862 = vld [vmem:[%s681 + $0xa7] sm:$0xff]
        %v1863 = vld [vmem:[%s681 + $0xaf] sm:$0xff]
        %v1864 = vld [vmem:[%s681 + $0xc7] sm:$0xff]
        %v1865 = vld [vmem:[%s681 + $0xcf] sm:$0xff]
        %v1866 = vld [vmem:[%s681 + $0xe7] sm:$0xff]
        %v1867 = vld [vmem:[%s681 + $0xef] sm:$0xff]
        %v1868 = vld [vmem:[%s681 + $0x107] sm:$0xff]
        %v1869 = vld [vmem:[%s681 + $0x10f] sm:$0xff]
        %v1870 = vld [vmem:[%s681 + $0x127] sm:$0xff]
        %v1871 = vld [vmem:[%s681 + $0x12f] sm:$0xff]
        %v1872 = vld [vmem:[%s681 + $0x147] sm:$0xff]
        %v1873 = vld [vmem:[%s681 + $0x14f] sm:$0xff]
        %v1874 = vld [vmem:[%s681 + $0x167] sm:$0xff]
        %v1875 = vld [vmem:[%s681 + $0x16f] sm:$0xff]
        %v1876 = vld [vmem:[%s681 + $0x187] sm:$0xff]
        %v1877 = vld [vmem:[%s681 + $0x18f] sm:$0xff]
        %v1878 = vld [vmem:[%s681 + $0x1a7] sm:$0xff]
        %v1879 = vld [vmem:[%s681 + $0x1af] sm:$0xff]
        %v1880 = vld [vmem:[%s681 + $0x1c7] sm:$0xff]
        %v1881 = vld [vmem:[%s681 + $0x1cf] sm:$0xff]
        %v1882 = vld [vmem:[%s681 + $0x1e7] sm:$0xff]
        %v1883 = vld [vmem:[%s681 + $0x1ef] sm:$0xff]
        %s1884 = scalar_lea.vmem %s3, 96
        %v1885 = vld [vmem:[%s1884] sm:$0xff]
        %v1886 = vld [vmem:[%s1884 + $0x8] sm:$0xff]
        %v1887 = vld [vmem:[%s1884 + $0x10] sm:$0xff]
        %v1888 = vld [vmem:[%s1884 + $0x18] sm:$0xff]
        %v1890 = vsel %vm319, %v1852, 0
        %v1893 = vsel %vm319, %v1853, 0
        %v1896 = vsel %vm319, %v1854, 0
        %v1899 = vsel %vm319, %v1855, 0
        %v1902 = vsel %vm319, %v1856, 0
        %v1905 = vsel %vm319, %v1857, 0
        %v1908 = vsel %vm319, %v1858, 0
        %v1911 = vsel %vm319, %v1859, 0
        %v1914 = vsel %vm319, %v1860, 0
        %v1917 = vsel %vm319, %v1861, 0
        %v1920 = vsel %vm319, %v1862, 0
        %v1923 = vsel %vm319, %v1863, 0
        %v1926 = vsel %vm319, %v1864, 0
        %v1929 = vsel %vm319, %v1865, 0
        %v1932 = vsel %vm319, %v1866, 0
        %v1935 = vsel %vm319, %v1867, 0
        %v1938 = vsel %vm319, %v1868, 0
        %v1941 = vsel %vm319, %v1869, 0
        %v1944 = vsel %vm319, %v1870, 0
        %v1947 = vsel %vm319, %v1871, 0
        %v1950 = vsel %vm319, %v1872, 0
        %v1953 = vsel %vm319, %v1873, 0
        %v1956 = vsel %vm319, %v1874, 0
        %v1959 = vsel %vm319, %v1875, 0
        %v1962 = vsel %vm319, %v1876, 0
        %v1965 = vsel %vm319, %v1877, 0
        %v1968 = vsel %vm319, %v1878, 0
        %v1971 = vsel %vm319, %v1879, 0
        %v1974 = vsel %vm319, %v1880, 0
        %v1977 = vsel %vm319, %v1881, 0
        %v1980 = vsel %vm319, %v1882, 0
        %v1983 = vsel %vm319, %v1883, 0
        %1985 = vmatprep.subr.mxu0 0.0
        %1986 = vmatpush1.msra.mxu0 %v1885
        %1987 = vmatprep.subr.mxu0 0.0
        %1988 = vmatpush1.msra.mxu0 %v1886
        %1989 = vmatprep.subr.mxu0 0.0
        %1990 = vmatpush1.msra.mxu0 %v1887
        %1991 = vmatprep.subr.mxu0 0.0
        %1992 = vmatpush1.msra.mxu0 %v1888
        %1993 = vmatprep.subr.mxu0 0.0
        %1994 = vmatpush1.msra.mxu0 0.0
        %1995 = vmatprep.subr.mxu0 0.0
        %1996 = vmatpush1.msra.mxu0 0.0
        %1997 = vmatprep.subr.mxu0 0.0
        %1998 = vmatpush1.msra.mxu0 0.0
        %1999 = vmatprep.subr.mxu0 0.0
        %2000 = vmatpush1.msra.mxu0 0.0
        %2001 = vmatprep.subr.mxu0 0.0
        %2002 = vmatpush1.msra.mxu0 0.0
        %2003 = vmatprep.subr.mxu0 0.0
        %2004 = vmatpush1.msra.mxu0 0.0
        %2005 = vmatprep.subr.mxu0 0.0
        %2006 = vmatpush1.msra.mxu0 0.0
        %2007 = vmatprep.subr.mxu0 0.0
        %2008 = vmatpush1.msra.mxu0 0.0
        %2009 = vmatprep.subr.mxu0 0.0
        %2010 = vmatpush1.msra.mxu0 0.0
        %2011 = vmatprep.subr.mxu0 0.0
        %2012 = vmatpush1.msra.mxu0 0.0
        %2013 = vmatprep.subr.mxu0 0.0
        %2014 = vmatpush1.msra.mxu0 0.0
        %2015 = vmatprep.subr.mxu0 0.0
        %2016 = vmatpush1.msra.mxu0 0.0
        %2017 = vmatprep.subr.mxu0 0.0
        %2018 = vmatpush1.msra.mxu0 0.0
        %2019 = vmatprep.subr.mxu0 0.0
        %2020 = vmatpush1.msra.mxu0 0.0
        %2021 = vmatprep.subr.mxu0 0.0
        %2022 = vmatpush1.msra.mxu0 0.0
        %2023 = vmatprep.subr.mxu0 0.0
        %2024 = vmatpush1.msra.mxu0 0.0
        %2025 = vmatprep.subr.mxu0 0.0
        %2026 = vmatpush1.msra.mxu0 0.0
        %2027 = vmatprep.subr.mxu0 0.0
        %2028 = vmatpush1.msra.mxu0 0.0
        %2029 = vmatprep.subr.mxu0 0.0
        %2030 = vmatpush1.msra.mxu0 0.0
        %2031 = vmatprep.subr.mxu0 0.0
        %2032 = vmatpush1.msra.mxu0 0.0
        %2033 = vmatprep.subr.mxu0 0.0
        %2034 = vmatpush1.msra.mxu0 0.0
        %2035 = vmatprep.subr.mxu0 0.0
        %2036 = vmatpush1.msra.mxu0 0.0
        %2037 = vmatprep.subr.mxu0 0.0
        %2038 = vmatpush1.msra.mxu0 0.0
        %2039 = vmatprep.subr.mxu0 0.0
        %2040 = vmatpush1.msra.mxu0 0.0
        %2041 = vmatprep.subr.mxu0 0.0
        %2042 = vmatpush1.msra.mxu0 0.0
        %2043 = vmatprep.subr.mxu0 0.0
        %2044 = vmatpush1.msra.mxu0 0.0
        %2045 = vmatprep.subr.mxu0 0.0
        %2046 = vmatpush1.msra.mxu0 0.0
        %2047 = vmatprep.subr.mxu0 0.0
        %2048 = vmatpush1.msra.mxu0 0.0
        %2049 = vmatprep.mubr.f32.mxu0 0.0
        %2050 = vmatmul.mubr.f32.gmra.mrb[0].mxu0 %v1890
        %v2051 = vpop.f32.mrb[0].mxu0
        %v2052 = vadd.f32 0.0, %v2051
        %v2053 = vpop.f32.mrb[0].mxu0
        %2054 = vmatprep.mubr.f32.mxu0 0.0
        %2055 = vmatmul.mubr.f32.gmra.mrb[0].mxu0 %v1893
        %v2056 = vpop.f32.mrb[0].mxu0
        %v2057 = vadd.f32 0.0, %v2056
        %v2058 = vpop.f32.mrb[0].mxu0
        %2059 = vmatprep.mubr.f32.mxu0 0.0
        %2060 = vmatmul.mubr.f32.gmra.mrb[0].mxu0 %v1896
        %v2061 = vpop.f32.mrb[0].mxu0
        %v2062 = vadd.f32 0.0, %v2061
        %v2063 = vpop.f32.mrb[0].mxu0
        %2064 = vmatprep.mubr.f32.mxu0 0.0
        %2065 = vmatmul.mubr.f32.gmra.mrb[0].mxu0 %v1899
        %v2066 = vpop.f32.mrb[0].mxu0
        %v2067 = vadd.f32 0.0, %v2066
        %v2068 = vpop.f32.mrb[0].mxu0
        %2069 = vmatprep.mubr.f32.mxu0 0.0
        %2070 = vmatmul.mubr.f32.gmra.mrb[0].mxu0 %v1902
        %v2071 = vpop.f32.mrb[0].mxu0
        %v2072 = vadd.f32 0.0, %v2071
        %v2073 = vpop.f32.mrb[0].mxu0
        %2074 = vmatprep.mubr.f32.mxu0 0.0
        %2075 = vmatmul.mubr.f32.gmra.mrb[0].mxu0 %v1905
        %v2076 = vpop.f32.mrb[0].mxu0
        %v2077 = vadd.f32 0.0, %v2076
        %v2078 = vpop.f32.mrb[0].mxu0
        %2079 = vmatprep.mubr.f32.mxu0 0.0
        %2080 = vmatmul.mubr.f32.gmra.mrb[0].mxu0 %v1908
        %v2081 = vpop.f32.mrb[0].mxu0
        %v2082 = vadd.f32 0.0, %v2081
        %v2083 = vpop.f32.mrb[0].mxu0
        %2084 = vmatprep.mubr.f32.mxu0 0.0
        %2085 = vmatmul.mubr.f32.gmra.mrb[0].mxu0 %v1911
        %v2086 = vpop.f32.mrb[0].mxu0
        %v2087 = vadd.f32 0.0, %v2086
        %v2088 = vpop.f32.mrb[0].mxu0
        %2089 = vmatprep.mubr.f32.mxu0 0.0
        %2090 = vmatmul.mubr.f32.gmra.mrb[0].mxu0 %v1914
        %v2091 = vpop.f32.mrb[0].mxu0
        %v2092 = vadd.f32 0.0, %v2091
        %v2093 = vpop.f32.mrb[0].mxu0
        %2094 = vmatprep.mubr.f32.mxu0 0.0
        %2095 = vmatmul.mubr.f32.gmra.mrb[0].mxu0 %v1917
        %v2096 = vpop.f32.mrb[0].mxu0
        %v2097 = vadd.f32 0.0, %v2096
        %v2098 = vpop.f32.mrb[0].mxu0
        %2099 = vmatprep.mubr.f32.mxu0 0.0
        %2100 = vmatmul.mubr.f32.gmra.mrb[0].mxu0 %v1920
        %v2101 = vpop.f32.mrb[0].mxu0
        %v2102 = vadd.f32 0.0, %v2101
        %v2103 = vpop.f32.mrb[0].mxu0
        %2104 = vmatprep.mubr.f32.mxu0 0.0
        %2105 = vmatmul.mubr.f32.gmra.mrb[0].mxu0 %v1923
        %v2106 = vpop.f32.mrb[0].mxu0
        %v2107 = vadd.f32 0.0, %v2106
        %v2108 = vpop.f32.mrb[0].mxu0
        %2109 = vmatprep.mubr.f32.mxu0 0.0
        %2110 = vmatmul.mubr.f32.gmra.mrb[0].mxu0 %v1926
        %v2111 = vpop.f32.mrb[0].mxu0
        %v2112 = vadd.f32 0.0, %v2111
        %v2113 = vpop.f32.mrb[0].mxu0
        %2114 = vmatprep.mubr.f32.mxu0 0.0
        %2115 = vmatmul.mubr.f32.gmra.mrb[0].mxu0 %v1929
        %v2116 = vpop.f32.mrb[0].mxu0
        %v2117 = vadd.f32 0.0, %v2116
        %v2118 = vpop.f32.mrb[0].mxu0
        %2119 = vmatprep.mubr.f32.mxu0 0.0
        %2120 = vmatmul.mubr.f32.gmra.mrb[0].mxu0 %v1932
        %v2121 = vpop.f32.mrb[0].mxu0
        %v2122 = vadd.f32 0.0, %v2121
        %v2123 = vpop.f32.mrb[0].mxu0
        %2124 = vmatprep.mubr.f32.mxu0 0.0
        %2125 = vmatmul.mubr.f32.gmra.mrb[0].mxu0 %v1935
        %v2126 = vpop.f32.mrb[0].mxu0
        %v2127 = vadd.f32 0.0, %v2126
        %v2128 = vpop.f32.mrb[0].mxu0
        %2129 = vmatprep.mubr.f32.mxu0 0.0
        %2130 = vmatmul.mubr.f32.gmra.mrb[0].mxu0 %v1938
        %v2131 = vpop.f32.mrb[0].mxu0
        %v2132 = vadd.f32 0.0, %v2131
        %v2133 = vpop.f32.mrb[0].mxu0
        %2134 = vmatprep.mubr.f32.mxu0 0.0
        %2135 = vmatmul.mubr.f32.gmra.mrb[0].mxu0 %v1941
        %v2136 = vpop.f32.mrb[0].mxu0
        %v2137 = vadd.f32 0.0, %v2136
        %v2138 = vpop.f32.mrb[0].mxu0
        %2139 = vmatprep.mubr.f32.mxu0 0.0
        %2140 = vmatmul.mubr.f32.gmra.mrb[0].mxu0 %v1944
        %v2141 = vpop.f32.mrb[0].mxu0
        %v2142 = vadd.f32 0.0, %v2141
        %v2143 = vpop.f32.mrb[0].mxu0
        %2144 = vmatprep.mubr.f32.mxu0 0.0
        %2145 = vmatmul.mubr.f32.gmra.mrb[0].mxu0 %v1947
        %v2146 = vpop.f32.mrb[0].mxu0
        %v2147 = vadd.f32 0.0, %v2146
        %v2148 = vpop.f32.mrb[0].mxu0
        %2149 = vmatprep.mubr.f32.mxu0 0.0
        %2150 = vmatmul.mubr.f32.gmra.mrb[0].mxu0 %v1950
        %v2151 = vpop.f32.mrb[0].mxu0
        %v2152 = vadd.f32 0.0, %v2151
        %v2153 = vpop.f32.mrb[0].mxu0
        %2154 = vmatprep.mubr.f32.mxu0 0.0
        %2155 = vmatmul.mubr.f32.gmra.mrb[0].mxu0 %v1953
        %v2156 = vpop.f32.mrb[0].mxu0
        %v2157 = vadd.f32 0.0, %v2156
        %v2158 = vpop.f32.mrb[0].mxu0
        %2159 = vmatprep.mubr.f32.mxu0 0.0
        %2160 = vmatmul.mubr.f32.gmra.mrb[0].mxu0 %v1956
        %v2161 = vpop.f32.mrb[0].mxu0
        %v2162 = vadd.f32 0.0, %v2161
        %v2163 = vpop.f32.mrb[0].mxu0
        %2164 = vmatprep.mubr.f32.mxu0 0.0
        %2165 = vmatmul.mubr.f32.gmra.mrb[0].mxu0 %v1959
        %v2166 = vpop.f32.mrb[0].mxu0
        %v2167 = vadd.f32 0.0, %v2166
        %v2168 = vpop.f32.mrb[0].mxu0
        %2169 = vmatprep.mubr.f32.mxu0 0.0
        %2170 = vmatmul.mubr.f32.gmra.mrb[0].mxu0 %v1962
        %v2171 = vpop.f32.mrb[0].mxu0
        %v2172 = vadd.f32 0.0, %v2171
        %v2173 = vpop.f32.mrb[0].mxu0
        %2174 = vmatprep.mubr.f32.mxu0 0.0
        %2175 = vmatmul.mubr.f32.gmra.mrb[0].mxu0 %v1965
        %v2176 = vpop.f32.mrb[0].mxu0
        %v2177 = vadd.f32 0.0, %v2176
        %v2178 = vpop.f32.mrb[0].mxu0
        %2179 = vmatprep.mubr.f32.mxu0 0.0
        %2180 = vmatmul.mubr.f32.gmra.mrb[0].mxu0 %v1968
        %v2181 = vpop.f32.mrb[0].mxu0
        %v2182 = vadd.f32 0.0, %v2181
        %v2183 = vpop.f32.mrb[0].mxu0
        %2184 = vmatprep.mubr.f32.mxu0 0.0
        %2185 = vmatmul.mubr.f32.gmra.mrb[0].mxu0 %v1971
        %v2186 = vpop.f32.mrb[0].mxu0
        %v2187 = vadd.f32 0.0, %v2186
        %v2188 = vpop.f32.mrb[0].mxu0
        %2189 = vmatprep.mubr.f32.mxu0 0.0
        %2190 = vmatmul.mubr.f32.gmra.mrb[0].mxu0 %v1974
        %v2191 = vpop.f32.mrb[0].mxu0
        %v2192 = vadd.f32 0.0, %v2191
        %v2193 = vpop.f32.mrb[0].mxu0
        %2194 = vmatprep.mubr.f32.mxu0 0.0
        %2195 = vmatmul.mubr.f32.gmra.mrb[0].mxu0 %v1977
        %v2196 = vpop.f32.mrb[0].mxu0
        %v2197 = vadd.f32 0.0, %v2196
        %v2198 = vpop.f32.mrb[0].mxu0
        %2199 = vmatprep.mubr.f32.mxu0 0.0
        %2200 = vmatmul.mubr.f32.gmra.mrb[0].mxu0 %v1980
        %v2201 = vpop.f32.mrb[0].mxu0
        %v2202 = vadd.f32 0.0, %v2201
        %v2203 = vpop.f32.mrb[0].mxu0
        %2204 = vmatprep.mubr.f32.mxu0 0.0
        %2205 = vmatmul.mubr.f32.gmra.mrb[0].mxu0 %v1983
        %v2206 = vpop.f32.mrb[0].mxu0
        %v2207 = vadd.f32 0.0, %v2206
        %v2208 = vpop.f32.mrb[0].mxu0
        %2209 = vdwg.mxu0
        %v2210 = vadd.f32 %v1820, %v2052
        %v2211 = vadd.f32 %v1821, %v2057
        %v2212 = vadd.f32 %v1822, %v2062
        %v2213 = vadd.f32 %v1823, %v2067
        %v2214 = vadd.f32 %v1824, %v2072
        %v2215 = vadd.f32 %v1825, %v2077
        %v2216 = vadd.f32 %v1826, %v2082
        %v2217 = vadd.f32 %v1827, %v2087
        %v2218 = vadd.f32 %v1828, %v2092
        %v2219 = vadd.f32 %v1829, %v2097
        %v2220 = vadd.f32 %v1830, %v2102
        %v2221 = vadd.f32 %v1831, %v2107
        %v2222 = vadd.f32 %v1832, %v2112
        %v2223 = vadd.f32 %v1833, %v2117
        %v2224 = vadd.f32 %v1834, %v2122
        %v2225 = vadd.f32 %v1835, %v2127
        %v2226 = vadd.f32 %v1836, %v2132
        %v2227 = vadd.f32 %v1837, %v2137
        %v2228 = vadd.f32 %v1838, %v2142
        %v2229 = vadd.f32 %v1839, %v2147
        %v2230 = vadd.f32 %v1840, %v2152
        %v2231 = vadd.f32 %v1841, %v2157
        %v2232 = vadd.f32 %v1842, %v2162
        %v2233 = vadd.f32 %v1843, %v2167
        %v2234 = vadd.f32 %v1844, %v2172
        %v2235 = vadd.f32 %v1845, %v2177
        %v2236 = vadd.f32 %v1846, %v2182
        %v2237 = vadd.f32 %v1847, %v2187
        %v2238 = vadd.f32 %v1848, %v2192
        %v2239 = vadd.f32 %v1849, %v2197
        %v2240 = vadd.f32 %v1850, %v2202
        %v2241 = vadd.f32 %v1851, %v2207
        %v2242 = vld [vmem:[%s681 + $0x8] sm:$0xff]
        %v2243 = vld [vmem:[%s681 + $0x10] sm:$0xff]
        %v2244 = vld [vmem:[%s681 + $0x28] sm:$0xff]
        %v2245 = vld [vmem:[%s681 + $0x30] sm:$0xff]
        %v2246 = vld [vmem:[%s681 + $0x48] sm:$0xff]
        %v2247 = vld [vmem:[%s681 + $0x50] sm:$0xff]
        %v2248 = vld [vmem:[%s681 + $0x68] sm:$0xff]
        %v2249 = vld [vmem:[%s681 + $0x70] sm:$0xff]
        %v2250 = vld [vmem:[%s681 + $0x88] sm:$0xff]
        %v2251 = vld [vmem:[%s681 + $0x90] sm:$0xff]
        %v2252 = vld [vmem:[%s681 + $0xa8] sm:$0xff]
        %v2253 = vld [vmem:[%s681 + $0xb0] sm:$0xff]
        %v2254 = vld [vmem:[%s681 + $0xc8] sm:$0xff]
        %v2255 = vld [vmem:[%s681 + $0xd0] sm:$0xff]
        %v2256 = vld [vmem:[%s681 + $0xe8] sm:$0xff]
        %v2257 = vld [vmem:[%s681 + $0xf0] sm:$0xff]
        %v2258 = vld [vmem:[%s681 + $0x108] sm:$0xff]
        %v2259 = vld [vmem:[%s681 + $0x110] sm:$0xff]
        %v2260 = vld [vmem:[%s681 + $0x128] sm:$0xff]
        %v2261 = vld [vmem:[%s681 + $0x130] sm:$0xff]
        %v2262 = vld [vmem:[%s681 + $0x148] sm:$0xff]
        %v2263 = vld [vmem:[%s681 + $0x150] sm:$0xff]
        %v2264 = vld [vmem:[%s681 + $0x168] sm:$0xff]
        %v2265 = vld [vmem:[%s681 + $0x170] sm:$0xff]
        %v2266 = vld [vmem:[%s681 + $0x188] sm:$0xff]
        %v2267 = vld [vmem:[%s681 + $0x190] sm:$0xff]
        %v2268 = vld [vmem:[%s681 + $0x1a8] sm:$0xff]
        %v2269 = vld [vmem:[%s681 + $0x1b0] sm:$0xff]
        %v2270 = vld [vmem:[%s681 + $0x1c8] sm:$0xff]
        %v2271 = vld [vmem:[%s681 + $0x1d0] sm:$0xff]
        %v2272 = vld [vmem:[%s681 + $0x1e8] sm:$0xff]
        %v2273 = vld [vmem:[%s681 + $0x1f0] sm:$0xff]
        %s2274 = scalar_lea.vmem %s3, 128
        %v2275 = vld [vmem:[%s2274] sm:$0xff]
        %v2276 = vld [vmem:[%s2274 + $0x8] sm:$0xff]
        %v2277 = vld [vmem:[%s2274 + $0x10] sm:$0xff]
        %v2278 = vld [vmem:[%s2274 + $0x18] sm:$0xff]
        %v2280 = vsel %vm319, %v2242, 0
        %v2283 = vsel %vm319, %v2243, 0
        %v2286 = vsel %vm319, %v2244, 0
        %v2289 = vsel %vm319, %v2245, 0
        %v2292 = vsel %vm319, %v2246, 0
        %v2295 = vsel %vm319, %v2247, 0
        %v2298 = vsel %vm319, %v2248, 0
        %v2301 = vsel %vm319, %v2249, 0
        %v2304 = vsel %vm319, %v2250, 0
        %v2307 = vsel %vm319, %v2251, 0
        %v2310 = vsel %vm319, %v2252, 0
        %v2313 = vsel %vm319, %v2253, 0
        %v2316 = vsel %vm319, %v2254, 0
        %v2319 = vsel %vm319, %v2255, 0
        %v2322 = vsel %vm319, %v2256, 0
        %v2325 = vsel %vm319, %v2257, 0
        %v2328 = vsel %vm319, %v2258, 0
        %v2331 = vsel %vm319, %v2259, 0
        %v2334 = vsel %vm319, %v2260, 0
        %v2337 = vsel %vm319, %v2261, 0
        %v2340 = vsel %vm319, %v2262, 0
        %v2343 = vsel %vm319, %v2263, 0
        %v2346 = vsel %vm319, %v2264, 0
        %v2349 = vsel %vm319, %v2265, 0
        %v2352 = vsel %vm319, %v2266, 0
        %v2355 = vsel %vm319, %v2267, 0
        %v2358 = vsel %vm319, %v2268, 0
        %v2361 = vsel %vm319, %v2269, 0
        %v2364 = vsel %vm319, %v2270, 0
        %v2367 = vsel %vm319, %v2271, 0
        %v2370 = vsel %vm319, %v2272, 0
        %v2373 = vsel %vm319, %v2273, 0
        %2375 = vmatprep.subr.mxu0 0.0
        %2376 = vmatpush1.msra.mxu0 %v2275
        %2377 = vmatprep.subr.mxu0 0.0
        %2378 = vmatpush1.msra.mxu0 %v2276
        %2379 = vmatprep.subr.mxu0 0.0
        %2380 = vmatpush1.msra.mxu0 %v2277
        %2381 = vmatprep.subr.mxu0 0.0
        %2382 = vmatpush1.msra.mxu0 %v2278
        %2383 = vmatprep.subr.mxu0 0.0
        %2384 = vmatpush1.msra.mxu0 0.0
        %2385 = vmatprep.subr.mxu0 0.0
        %2386 = vmatpush1.msra.mxu0 0.0
        %2387 = vmatprep.subr.mxu0 0.0
        %2388 = vmatpush1.msra.mxu0 0.0
        %2389 = vmatprep.subr.mxu0 0.0
        %2390 = vmatpush1.msra.mxu0 0.0
        %2391 = vmatprep.subr.mxu0 0.0
        %2392 = vmatpush1.msra.mxu0 0.0
        %2393 = vmatprep.subr.mxu0 0.0
        %2394 = vmatpush1.msra.mxu0 0.0
        %2395 = vmatprep.subr.mxu0 0.0
        %2396 = vmatpush1.msra.mxu0 0.0
        %2397 = vmatprep.subr.mxu0 0.0
        %2398 = vmatpush1.msra.mxu0 0.0
        %2399 = vmatprep.subr.mxu0 0.0
        %2400 = vmatpush1.msra.mxu0 0.0
        %2401 = vmatprep.subr.mxu0 0.0
        %2402 = vmatpush1.msra.mxu0 0.0
        %2403 = vmatprep.subr.mxu0 0.0
        %2404 = vmatpush1.msra.mxu0 0.0
        %2405 = vmatprep.subr.mxu0 0.0
        %2406 = vmatpush1.msra.mxu0 0.0
        %2407 = vmatprep.subr.mxu0 0.0
        %2408 = vmatpush1.msra.mxu0 0.0
        %2409 = vmatprep.subr.mxu0 0.0
        %2410 = vmatpush1.msra.mxu0 0.0
        %2411 = vmatprep.subr.mxu0 0.0
        %2412 = vmatpush1.msra.mxu0 0.0
        %2413 = vmatprep.subr.mxu0 0.0
        %2414 = vmatpush1.msra.mxu0 0.0
        %2415 = vmatprep.subr.mxu0 0.0
        %2416 = vmatpush1.msra.mxu0 0.0
        %2417 = vmatprep.subr.mxu0 0.0
        %2418 = vmatpush1.msra.mxu0 0.0
        %2419 = vmatprep.subr.mxu0 0.0
        %2420 = vmatpush1.msra.mxu0 0.0
        %2421 = vmatprep.subr.mxu0 0.0
        %2422 = vmatpush1.msra.mxu0 0.0
        %2423 = vmatprep.subr.mxu0 0.0
        %2424 = vmatpush1.msra.mxu0 0.0
        %2425 = vmatprep.subr.mxu0 0.0
        %2426 = vmatpush1.msra.mxu0 0.0
        %2427 = vmatprep.subr.mxu0 0.0
        %2428 = vmatpush1.msra.mxu0 0.0
        %2429 = vmatprep.subr.mxu0 0.0
        %2430 = vmatpush1.msra.mxu0 0.0
        %2431 = vmatprep.subr.mxu0 0.0
        %2432 = vmatpush1.msra.mxu0 0.0
        %2433 = vmatprep.subr.mxu0 0.0
        %2434 = vmatpush1.msra.mxu0 0.0
        %2435 = vmatprep.subr.mxu0 0.0
        %2436 = vmatpush1.msra.mxu0 0.0
        %2437 = vmatprep.subr.mxu0 0.0
        %2438 = vmatpush1.msra.mxu0 0.0
        %2439 = vmatprep.mubr.f32.mxu0 0.0
        %2440 = vmatmul.mubr.f32.gmra.mrb[0].mxu0 %v2280
        %v2441 = vpop.f32.mrb[0].mxu0
        %v2442 = vadd.f32 0.0, %v2441
        %v2443 = vpop.f32.mrb[0].mxu0
        %2444 = vmatprep.mubr.f32.mxu0 0.0
        %2445 = vmatmul.mubr.f32.gmra.mrb[0].mxu0 %v2283
        %v2446 = vpop.f32.mrb[0].mxu0
        %v2447 = vadd.f32 0.0, %v2446
        %v2448 = vpop.f32.mrb[0].mxu0
        %2449 = vmatprep.mubr.f32.mxu0 0.0
        %2450 = vmatmul.mubr.f32.gmra.mrb[0].mxu0 %v2286
        %v2451 = vpop.f32.mrb[0].mxu0
        %v2452 = vadd.f32 0.0, %v2451
        %v2453 = vpop.f32.mrb[0].mxu0
        %2454 = vmatprep.mubr.f32.mxu0 0.0
        %2455 = vmatmul.mubr.f32.gmra.mrb[0].mxu0 %v2289
        %v2456 = vpop.f32.mrb[0].mxu0
        %v2457 = vadd.f32 0.0, %v2456
        %v2458 = vpop.f32.mrb[0].mxu0
        %2459 = vmatprep.mubr.f32.mxu0 0.0
        %2460 = vmatmul.mubr.f32.gmra.mrb[0].mxu0 %v2292
        %v2461 = vpop.f32.mrb[0].mxu0
        %v2462 = vadd.f32 0.0, %v2461
        %v2463 = vpop.f32.mrb[0].mxu0
        %2464 = vmatprep.mubr.f32.mxu0 0.0
        %2465 = vmatmul.mubr.f32.gmra.mrb[0].mxu0 %v2295
        %v2466 = vpop.f32.mrb[0].mxu0
        %v2467 = vadd.f32 0.0, %v2466
        %v2468 = vpop.f32.mrb[0].mxu0
        %2469 = vmatprep.mubr.f32.mxu0 0.0
        %2470 = vmatmul.mubr.f32.gmra.mrb[0].mxu0 %v2298
        %v2471 = vpop.f32.mrb[0].mxu0
        %v2472 = vadd.f32 0.0, %v2471
        %v2473 = vpop.f32.mrb[0].mxu0
        %2474 = vmatprep.mubr.f32.mxu0 0.0
        %2475 = vmatmul.mubr.f32.gmra.mrb[0].mxu0 %v2301
        %v2476 = vpop.f32.mrb[0].mxu0
        %v2477 = vadd.f32 0.0, %v2476
        %v2478 = vpop.f32.mrb[0].mxu0
        %2479 = vmatprep.mubr.f32.mxu0 0.0
        %2480 = vmatmul.mubr.f32.gmra.mrb[0].mxu0 %v2304
        %v2481 = vpop.f32.mrb[0].mxu0
        %v2482 = vadd.f32 0.0, %v2481
        %v2483 = vpop.f32.mrb[0].mxu0
        %2484 = vmatprep.mubr.f32.mxu0 0.0
        %2485 = vmatmul.mubr.f32.gmra.mrb[0].mxu0 %v2307
        %v2486 = vpop.f32.mrb[0].mxu0
        %v2487 = vadd.f32 0.0, %v2486
        %v2488 = vpop.f32.mrb[0].mxu0
        %2489 = vmatprep.mubr.f32.mxu0 0.0
        %2490 = vmatmul.mubr.f32.gmra.mrb[0].mxu0 %v2310
        %v2491 = vpop.f32.mrb[0].mxu0
        %v2492 = vadd.f32 0.0, %v2491
        %v2493 = vpop.f32.mrb[0].mxu0
        %2494 = vmatprep.mubr.f32.mxu0 0.0
        %2495 = vmatmul.mubr.f32.gmra.mrb[0].mxu0 %v2313
        %v2496 = vpop.f32.mrb[0].mxu0
        %v2497 = vadd.f32 0.0, %v2496
        %v2498 = vpop.f32.mrb[0].mxu0
        %2499 = vmatprep.mubr.f32.mxu0 0.0
        %2500 = vmatmul.mubr.f32.gmra.mrb[0].mxu0 %v2316
        %v2501 = vpop.f32.mrb[0].mxu0
        %v2502 = vadd.f32 0.0, %v2501
        %v2503 = vpop.f32.mrb[0].mxu0
        %2504 = vmatprep.mubr.f32.mxu0 0.0
        %2505 = vmatmul.mubr.f32.gmra.mrb[0].mxu0 %v2319
        %v2506 = vpop.f32.mrb[0].mxu0
        %v2507 = vadd.f32 0.0, %v2506
        %v2508 = vpop.f32.mrb[0].mxu0
        %2509 = vmatprep.mubr.f32.mxu0 0.0
        %2510 = vmatmul.mubr.f32.gmra.mrb[0].mxu0 %v2322
        %v2511 = vpop.f32.mrb[0].mxu0
        %v2512 = vadd.f32 0.0, %v2511
        %v2513 = vpop.f32.mrb[0].mxu0
        %2514 = vmatprep.mubr.f32.mxu0 0.0
        %2515 = vmatmul.mubr.f32.gmra.mrb[0].mxu0 %v2325
        %v2516 = vpop.f32.mrb[0].mxu0
        %v2517 = vadd.f32 0.0, %v2516
        %v2518 = vpop.f32.mrb[0].mxu0
        %2519 = vmatprep.mubr.f32.mxu0 0.0
        %2520 = vmatmul.mubr.f32.gmra.mrb[0].mxu0 %v2328
        %v2521 = vpop.f32.mrb[0].mxu0
        %v2522 = vadd.f32 0.0, %v2521
        %v2523 = vpop.f32.mrb[0].mxu0
        %2524 = vmatprep.mubr.f32.mxu0 0.0
        %2525 = vmatmul.mubr.f32.gmra.mrb[0].mxu0 %v2331
        %v2526 = vpop.f32.mrb[0].mxu0
        %v2527 = vadd.f32 0.0, %v2526
        %v2528 = vpop.f32.mrb[0].mxu0
        %2529 = vmatprep.mubr.f32.mxu0 0.0
        %2530 = vmatmul.mubr.f32.gmra.mrb[0].mxu0 %v2334
        %v2531 = vpop.f32.mrb[0].mxu0
        %v2532 = vadd.f32 0.0, %v2531
        %v2533 = vpop.f32.mrb[0].mxu0
        %2534 = vmatprep.mubr.f32.mxu0 0.0
        %2535 = vmatmul.mubr.f32.gmra.mrb[0].mxu0 %v2337
        %v2536 = vpop.f32.mrb[0].mxu0
        %v2537 = vadd.f32 0.0, %v2536
        %v2538 = vpop.f32.mrb[0].mxu0
        %2539 = vmatprep.mubr.f32.mxu0 0.0
        %2540 = vmatmul.mubr.f32.gmra.mrb[0].mxu0 %v2340
        %v2541 = vpop.f32.mrb[0].mxu0
        %v2542 = vadd.f32 0.0, %v2541
        %v2543 = vpop.f32.mrb[0].mxu0
        %2544 = vmatprep.mubr.f32.mxu0 0.0
        %2545 = vmatmul.mubr.f32.gmra.mrb[0].mxu0 %v2343
        %v2546 = vpop.f32.mrb[0].mxu0
        %v2547 = vadd.f32 0.0, %v2546
        %v2548 = vpop.f32.mrb[0].mxu0
        %2549 = vmatprep.mubr.f32.mxu0 0.0
        %2550 = vmatmul.mubr.f32.gmra.mrb[0].mxu0 %v2346
        %v2551 = vpop.f32.mrb[0].mxu0
        %v2552 = vadd.f32 0.0, %v2551
        %v2553 = vpop.f32.mrb[0].mxu0
        %2554 = vmatprep.mubr.f32.mxu0 0.0
        %2555 = vmatmul.mubr.f32.gmra.mrb[0].mxu0 %v2349
        %v2556 = vpop.f32.mrb[0].mxu0
        %v2557 = vadd.f32 0.0, %v2556
        %v2558 = vpop.f32.mrb[0].mxu0
        %2559 = vmatprep.mubr.f32.mxu0 0.0
        %2560 = vmatmul.mubr.f32.gmra.mrb[0].mxu0 %v2352
        %v2561 = vpop.f32.mrb[0].mxu0
        %v2562 = vadd.f32 0.0, %v2561
        %v2563 = vpop.f32.mrb[0].mxu0
        %2564 = vmatprep.mubr.f32.mxu0 0.0
        %2565 = vmatmul.mubr.f32.gmra.mrb[0].mxu0 %v2355
        %v2566 = vpop.f32.mrb[0].mxu0
        %v2567 = vadd.f32 0.0, %v2566
        %v2568 = vpop.f32.mrb[0].mxu0
        %2569 = vmatprep.mubr.f32.mxu0 0.0
        %2570 = vmatmul.mubr.f32.gmra.mrb[0].mxu0 %v2358
        %v2571 = vpop.f32.mrb[0].mxu0
        %v2572 = vadd.f32 0.0, %v2571
        %v2573 = vpop.f32.mrb[0].mxu0
        %2574 = vmatprep.mubr.f32.mxu0 0.0
        %2575 = vmatmul.mubr.f32.gmra.mrb[0].mxu0 %v2361
        %v2576 = vpop.f32.mrb[0].mxu0
        %v2577 = vadd.f32 0.0, %v2576
        %v2578 = vpop.f32.mrb[0].mxu0
        %2579 = vmatprep.mubr.f32.mxu0 0.0
        %2580 = vmatmul.mubr.f32.gmra.mrb[0].mxu0 %v2364
        %v2581 = vpop.f32.mrb[0].mxu0
        %v2582 = vadd.f32 0.0, %v2581
        %v2583 = vpop.f32.mrb[0].mxu0
        %2584 = vmatprep.mubr.f32.mxu0 0.0
        %2585 = vmatmul.mubr.f32.gmra.mrb[0].mxu0 %v2367
        %v2586 = vpop.f32.mrb[0].mxu0
        %v2587 = vadd.f32 0.0, %v2586
        %v2588 = vpop.f32.mrb[0].mxu0
        %2589 = vmatprep.mubr.f32.mxu0 0.0
        %2590 = vmatmul.mubr.f32.gmra.mrb[0].mxu0 %v2370
        %v2591 = vpop.f32.mrb[0].mxu0
        %v2592 = vadd.f32 0.0, %v2591
        %v2593 = vpop.f32.mrb[0].mxu0
        %2594 = vmatprep.mubr.f32.mxu0 0.0
        %2595 = vmatmul.mubr.f32.gmra.mrb[0].mxu0 %v2373
        %v2596 = vpop.f32.mrb[0].mxu0
        %v2597 = vadd.f32 0.0, %v2596
        %v2598 = vpop.f32.mrb[0].mxu0
        %2599 = vdwg.mxu0
        %v2600 = vadd.f32 %v2210, %v2442
        %v2601 = vadd.f32 %v2211, %v2447
        %v2602 = vadd.f32 %v2212, %v2452
        %v2603 = vadd.f32 %v2213, %v2457
        %v2604 = vadd.f32 %v2214, %v2462
        %v2605 = vadd.f32 %v2215, %v2467
        %v2606 = vadd.f32 %v2216, %v2472
        %v2607 = vadd.f32 %v2217, %v2477
        %v2608 = vadd.f32 %v2218, %v2482
        %v2609 = vadd.f32 %v2219, %v2487
        %v2610 = vadd.f32 %v2220, %v2492
        %v2611 = vadd.f32 %v2221, %v2497
        %v2612 = vadd.f32 %v2222, %v2502
        %v2613 = vadd.f32 %v2223, %v2507
        %v2614 = vadd.f32 %v2224, %v2512
        %v2615 = vadd.f32 %v2225, %v2517
        %v2616 = vadd.f32 %v2226, %v2522
        %v2617 = vadd.f32 %v2227, %v2527
        %v2618 = vadd.f32 %v2228, %v2532
        %v2619 = vadd.f32 %v2229, %v2537
        %v2620 = vadd.f32 %v2230, %v2542
        %v2621 = vadd.f32 %v2231, %v2547
        %v2622 = vadd.f32 %v2232, %v2552
        %v2623 = vadd.f32 %v2233, %v2557
        %v2624 = vadd.f32 %v2234, %v2562
        %v2625 = vadd.f32 %v2235, %v2567
        %v2626 = vadd.f32 %v2236, %v2572
        %v2627 = vadd.f32 %v2237, %v2577
        %v2628 = vadd.f32 %v2238, %v2582
        %v2629 = vadd.f32 %v2239, %v2587
        %v2630 = vadd.f32 %v2240, %v2592
        %v2631 = vadd.f32 %v2241, %v2597
        %v2632 = vld [vmem:[%s681 + $0x9] sm:$0xff]
        %v2633 = vld [vmem:[%s681 + $0x11] sm:$0xff]
        %v2634 = vld [vmem:[%s681 + $0x29] sm:$0xff]
        %v2635 = vld [vmem:[%s681 + $0x31] sm:$0xff]
        %v2636 = vld [vmem:[%s681 + $0x49] sm:$0xff]
        %v2637 = vld [vmem:[%s681 + $0x51] sm:$0xff]
        %v2638 = vld [vmem:[%s681 + $0x69] sm:$0xff]
        %v2639 = vld [vmem:[%s681 + $0x71] sm:$0xff]
        %v2640 = vld [vmem:[%s681 + $0x89] sm:$0xff]
        %v2641 = vld [vmem:[%s681 + $0x91] sm:$0xff]
        %v2642 = vld [vmem:[%s681 + $0xa9] sm:$0xff]
        %v2643 = vld [vmem:[%s681 + $0xb1] sm:$0xff]
        %v2644 = vld [vmem:[%s681 + $0xc9] sm:$0xff]
        %v2645 = vld [vmem:[%s681 + $0xd1] sm:$0xff]
        %v2646 = vld [vmem:[%s681 + $0xe9] sm:$0xff]
        %v2647 = vld [vmem:[%s681 + $0xf1] sm:$0xff]
        %v2648 = vld [vmem:[%s681 + $0x109] sm:$0xff]
        %v2649 = vld [vmem:[%s681 + $0x111] sm:$0xff]
        %v2650 = vld [vmem:[%s681 + $0x129] sm:$0xff]
        %v2651 = vld [vmem:[%s681 + $0x131] sm:$0xff]
        %v2652 = vld [vmem:[%s681 + $0x149] sm:$0xff]
        %v2653 = vld [vmem:[%s681 + $0x151] sm:$0xff]
        %v2654 = vld [vmem:[%s681 + $0x169] sm:$0xff]
        %v2655 = vld [vmem:[%s681 + $0x171] sm:$0xff]
        %v2656 = vld [vmem:[%s681 + $0x189] sm:$0xff]
        %v2657 = vld [vmem:[%s681 + $0x191] sm:$0xff]
        %v2658 = vld [vmem:[%s681 + $0x1a9] sm:$0xff]
        %v2659 = vld [vmem:[%s681 + $0x1b1] sm:$0xff]
        %v2660 = vld [vmem:[%s681 + $0x1c9] sm:$0xff]
        %v2661 = vld [vmem:[%s681 + $0x1d1] sm:$0xff]
        %v2662 = vld [vmem:[%s681 + $0x1e9] sm:$0xff]
        %v2663 = vld [vmem:[%s681 + $0x1f1] sm:$0xff]
        %s2664 = scalar_lea.vmem %s3, 160
        %v2665 = vld [vmem:[%s2664] sm:$0xff]
        %v2666 = vld [vmem:[%s2664 + $0x8] sm:$0xff]
        %v2667 = vld [vmem:[%s2664 + $0x10] sm:$0xff]
        %v2668 = vld [vmem:[%s2664 + $0x18] sm:$0xff]
        %v2670 = vsel %vm319, %v2632, 0
        %v2673 = vsel %vm319, %v2633, 0
        %v2676 = vsel %vm319, %v2634, 0
        %v2679 = vsel %vm319, %v2635, 0
        %v2682 = vsel %vm319, %v2636, 0
        %v2685 = vsel %vm319, %v2637, 0
        %v2688 = vsel %vm319, %v2638, 0
        %v2691 = vsel %vm319, %v2639, 0
        %v2694 = vsel %vm319, %v2640, 0
        %v2697 = vsel %vm319, %v2641, 0
        %v2700 = vsel %vm319, %v2642, 0
        %v2703 = vsel %vm319, %v2643, 0
        %v2706 = vsel %vm319, %v2644, 0
        %v2709 = vsel %vm319, %v2645, 0
        %v2712 = vsel %vm319, %v2646, 0
        %v2715 = vsel %vm319, %v2647, 0
        %v2718 = vsel %vm319, %v2648, 0
        %v2721 = vsel %vm319, %v2649, 0
        %v2724 = vsel %vm319, %v2650, 0
        %v2727 = vsel %vm319, %v2651, 0
        %v2730 = vsel %vm319, %v2652, 0
        %v2733 = vsel %vm319, %v2653, 0
        %v2736 = vsel %vm319, %v2654, 0
        %v2739 = vsel %vm319, %v2655, 0
        %v2742 = vsel %vm319, %v2656, 0
        %v2745 = vsel %vm319, %v2657, 0
        %v2748 = vsel %vm319, %v2658, 0
        %v2751 = vsel %vm319, %v2659, 0
        %v2754 = vsel %vm319, %v2660, 0
        %v2757 = vsel %vm319, %v2661, 0
        %v2760 = vsel %vm319, %v2662, 0
        %v2763 = vsel %vm319, %v2663, 0
        %2765 = vmatprep.subr.mxu0 0.0
        %2766 = vmatpush1.msra.mxu0 %v2665
        %2767 = vmatprep.subr.mxu0 0.0
        %2768 = vmatpush1.msra.mxu0 %v2666
        %2769 = vmatprep.subr.mxu0 0.0
        %2770 = vmatpush1.msra.mxu0 %v2667
        %2771 = vmatprep.subr.mxu0 0.0
        %2772 = vmatpush1.msra.mxu0 %v2668
        %2773 = vmatprep.subr.mxu0 0.0
        %2774 = vmatpush1.msra.mxu0 0.0
        %2775 = vmatprep.subr.mxu0 0.0
        %2776 = vmatpush1.msra.mxu0 0.0
        %2777 = vmatprep.subr.mxu0 0.0
        %2778 = vmatpush1.msra.mxu0 0.0
        %2779 = vmatprep.subr.mxu0 0.0
        %2780 = vmatpush1.msra.mxu0 0.0
        %2781 = vmatprep.subr.mxu0 0.0
        %2782 = vmatpush1.msra.mxu0 0.0
        %2783 = vmatprep.subr.mxu0 0.0
        %2784 = vmatpush1.msra.mxu0 0.0
        %2785 = vmatprep.subr.mxu0 0.0
        %2786 = vmatpush1.msra.mxu0 0.0
        %2787 = vmatprep.subr.mxu0 0.0
        %2788 = vmatpush1.msra.mxu0 0.0
        %2789 = vmatprep.subr.mxu0 0.0
        %2790 = vmatpush1.msra.mxu0 0.0
        %2791 = vmatprep.subr.mxu0 0.0
        %2792 = vmatpush1.msra.mxu0 0.0
        %2793 = vmatprep.subr.mxu0 0.0
        %2794 = vmatpush1.msra.mxu0 0.0
        %2795 = vmatprep.subr.mxu0 0.0
        %2796 = vmatpush1.msra.mxu0 0.0
        %2797 = vmatprep.subr.mxu0 0.0
        %2798 = vmatpush1.msra.mxu0 0.0
        %2799 = vmatprep.subr.mxu0 0.0
        %2800 = vmatpush1.msra.mxu0 0.0
        %2801 = vmatprep.subr.mxu0 0.0
        %2802 = vmatpush1.msra.mxu0 0.0
        %2803 = vmatprep.subr.mxu0 0.0
        %2804 = vmatpush1.msra.mxu0 0.0
        %2805 = vmatprep.subr.mxu0 0.0
        %2806 = vmatpush1.msra.mxu0 0.0
        %2807 = vmatprep.subr.mxu0 0.0
        %2808 = vmatpush1.msra.mxu0 0.0
        %2809 = vmatprep.subr.mxu0 0.0
        %2810 = vmatpush1.msra.mxu0 0.0
        %2811 = vmatprep.subr.mxu0 0.0
        %2812 = vmatpush1.msra.mxu0 0.0
        %2813 = vmatprep.subr.mxu0 0.0
        %2814 = vmatpush1.msra.mxu0 0.0
        %2815 = vmatprep.subr.mxu0 0.0
        %2816 = vmatpush1.msra.mxu0 0.0
        %2817 = vmatprep.subr.mxu0 0.0
        %2818 = vmatpush1.msra.mxu0 0.0
        %2819 = vmatprep.subr.mxu0 0.0
        %2820 = vmatpush1.msra.mxu0 0.0
        %2821 = vmatprep.subr.mxu0 0.0
        %2822 = vmatpush1.msra.mxu0 0.0
        %2823 = vmatprep.subr.mxu0 0.0
        %2824 = vmatpush1.msra.mxu0 0.0
        %2825 = vmatprep.subr.mxu0 0.0
        %2826 = vmatpush1.msra.mxu0 0.0
        %2827 = vmatprep.subr.mxu0 0.0
        %2828 = vmatpush1.msra.mxu0 0.0
        %2829 = vmatprep.mubr.f32.mxu0 0.0
        %2830 = vmatmul.mubr.f32.gmra.mrb[0].mxu0 %v2670
        %v2831 = vpop.f32.mrb[0].mxu0
        %v2832 = vadd.f32 0.0, %v2831
        %v2833 = vpop.f32.mrb[0].mxu0
        %2834 = vmatprep.mubr.f32.mxu0 0.0
        %2835 = vmatmul.mubr.f32.gmra.mrb[0].mxu0 %v2673
        %v2836 = vpop.f32.mrb[0].mxu0
        %v2837 = vadd.f32 0.0, %v2836
        %v2838 = vpop.f32.mrb[0].mxu0
        %2839 = vmatprep.mubr.f32.mxu0 0.0
        %2840 = vmatmul.mubr.f32.gmra.mrb[0].mxu0 %v2676
        %v2841 = vpop.f32.mrb[0].mxu0
        %v2842 = vadd.f32 0.0, %v2841
        %v2843 = vpop.f32.mrb[0].mxu0
        %2844 = vmatprep.mubr.f32.mxu0 0.0
        %2845 = vmatmul.mubr.f32.gmra.mrb[0].mxu0 %v2679
        %v2846 = vpop.f32.mrb[0].mxu0
        %v2847 = vadd.f32 0.0, %v2846
        %v2848 = vpop.f32.mrb[0].mxu0
        %2849 = vmatprep.mubr.f32.mxu0 0.0
        %2850 = vmatmul.mubr.f32.gmra.mrb[0].mxu0 %v2682
        %v2851 = vpop.f32.mrb[0].mxu0
        %v2852 = vadd.f32 0.0, %v2851
        %v2853 = vpop.f32.mrb[0].mxu0
        %2854 = vmatprep.mubr.f32.mxu0 0.0
        %2855 = vmatmul.mubr.f32.gmra.mrb[0].mxu0 %v2685
        %v2856 = vpop.f32.mrb[0].mxu0
        %v2857 = vadd.f32 0.0, %v2856
        %v2858 = vpop.f32.mrb[0].mxu0
        %2859 = vmatprep.mubr.f32.mxu0 0.0
        %2860 = vmatmul.mubr.f32.gmra.mrb[0].mxu0 %v2688
        %v2861 = vpop.f32.mrb[0].mxu0
        %v2862 = vadd.f32 0.0, %v2861
        %v2863 = vpop.f32.mrb[0].mxu0
        %2864 = vmatprep.mubr.f32.mxu0 0.0
        %2865 = vmatmul.mubr.f32.gmra.mrb[0].mxu0 %v2691
        %v2866 = vpop.f32.mrb[0].mxu0
        %v2867 = vadd.f32 0.0, %v2866
        %v2868 = vpop.f32.mrb[0].mxu0
        %2869 = vmatprep.mubr.f32.mxu0 0.0
        %2870 = vmatmul.mubr.f32.gmra.mrb[0].mxu0 %v2694
        %v2871 = vpop.f32.mrb[0].mxu0
        %v2872 = vadd.f32 0.0, %v2871
        %v2873 = vpop.f32.mrb[0].mxu0
        %2874 = vmatprep.mubr.f32.mxu0 0.0
        %2875 = vmatmul.mubr.f32.gmra.mrb[0].mxu0 %v2697
        %v2876 = vpop.f32.mrb[0].mxu0
        %v2877 = vadd.f32 0.0, %v2876
        %v2878 = vpop.f32.mrb[0].mxu0
        %2879 = vmatprep.mubr.f32.mxu0 0.0
        %2880 = vmatmul.mubr.f32.gmra.mrb[0].mxu0 %v2700
        %v2881 = vpop.f32.mrb[0].mxu0
        %v2882 = vadd.f32 0.0, %v2881
        %v2883 = vpop.f32.mrb[0].mxu0
        %2884 = vmatprep.mubr.f32.mxu0 0.0
        %2885 = vmatmul.mubr.f32.gmra.mrb[0].mxu0 %v2703
        %v2886 = vpop.f32.mrb[0].mxu0
        %v2887 = vadd.f32 0.0, %v2886
        %v2888 = vpop.f32.mrb[0].mxu0
        %2889 = vmatprep.mubr.f32.mxu0 0.0
        %2890 = vmatmul.mubr.f32.gmra.mrb[0].mxu0 %v2706
        %v2891 = vpop.f32.mrb[0].mxu0
        %v2892 = vadd.f32 0.0, %v2891
        %v2893 = vpop.f32.mrb[0].mxu0
        %2894 = vmatprep.mubr.f32.mxu0 0.0
        %2895 = vmatmul.mubr.f32.gmra.mrb[0].mxu0 %v2709
        %v2896 = vpop.f32.mrb[0].mxu0
        %v2897 = vadd.f32 0.0, %v2896
        %v2898 = vpop.f32.mrb[0].mxu0
        %2899 = vmatprep.mubr.f32.mxu0 0.0
        %2900 = vmatmul.mubr.f32.gmra.mrb[0].mxu0 %v2712
        %v2901 = vpop.f32.mrb[0].mxu0
        %v2902 = vadd.f32 0.0, %v2901
        %v2903 = vpop.f32.mrb[0].mxu0
        %2904 = vmatprep.mubr.f32.mxu0 0.0
        %2905 = vmatmul.mubr.f32.gmra.mrb[0].mxu0 %v2715
        %v2906 = vpop.f32.mrb[0].mxu0
        %v2907 = vadd.f32 0.0, %v2906
        %v2908 = vpop.f32.mrb[0].mxu0
        %2909 = vmatprep.mubr.f32.mxu0 0.0
        %2910 = vmatmul.mubr.f32.gmra.mrb[0].mxu0 %v2718
        %v2911 = vpop.f32.mrb[0].mxu0
        %v2912 = vadd.f32 0.0, %v2911
        %v2913 = vpop.f32.mrb[0].mxu0
        %2914 = vmatprep.mubr.f32.mxu0 0.0
        %2915 = vmatmul.mubr.f32.gmra.mrb[0].mxu0 %v2721
        %v2916 = vpop.f32.mrb[0].mxu0
        %v2917 = vadd.f32 0.0, %v2916
        %v2918 = vpop.f32.mrb[0].mxu0
        %2919 = vmatprep.mubr.f32.mxu0 0.0
        %2920 = vmatmul.mubr.f32.gmra.mrb[0].mxu0 %v2724
        %v2921 = vpop.f32.mrb[0].mxu0
        %v2922 = vadd.f32 0.0, %v2921
        %v2923 = vpop.f32.mrb[0].mxu0
        %2924 = vmatprep.mubr.f32.mxu0 0.0
        %2925 = vmatmul.mubr.f32.gmra.mrb[0].mxu0 %v2727
        %v2926 = vpop.f32.mrb[0].mxu0
        %v2927 = vadd.f32 0.0, %v2926
        %v2928 = vpop.f32.mrb[0].mxu0
        %2929 = vmatprep.mubr.f32.mxu0 0.0
        %2930 = vmatmul.mubr.f32.gmra.mrb[0].mxu0 %v2730
        %v2931 = vpop.f32.mrb[0].mxu0
        %v2932 = vadd.f32 0.0, %v2931
        %v2933 = vpop.f32.mrb[0].mxu0
        %2934 = vmatprep.mubr.f32.mxu0 0.0
        %2935 = vmatmul.mubr.f32.gmra.mrb[0].mxu0 %v2733
        %v2936 = vpop.f32.mrb[0].mxu0
        %v2937 = vadd.f32 0.0, %v2936
        %v2938 = vpop.f32.mrb[0].mxu0
        %2939 = vmatprep.mubr.f32.mxu0 0.0
        %2940 = vmatmul.mubr.f32.gmra.mrb[0].mxu0 %v2736
        %v2941 = vpop.f32.mrb[0].mxu0
        %v2942 = vadd.f32 0.0, %v2941
        %v2943 = vpop.f32.mrb[0].mxu0
        %2944 = vmatprep.mubr.f32.mxu0 0.0
        %2945 = vmatmul.mubr.f32.gmra.mrb[0].mxu0 %v2739
        %v2946 = vpop.f32.mrb[0].mxu0
        %v2947 = vadd.f32 0.0, %v2946
        %v2948 = vpop.f32.mrb[0].mxu0
        %2949 = vmatprep.mubr.f32.mxu0 0.0
        %2950 = vmatmul.mubr.f32.gmra.mrb[0].mxu0 %v2742
        %v2951 = vpop.f32.mrb[0].mxu0
        %v2952 = vadd.f32 0.0, %v2951
        %v2953 = vpop.f32.mrb[0].mxu0
        %2954 = vmatprep.mubr.f32.mxu0 0.0
        %2955 = vmatmul.mubr.f32.gmra.mrb[0].mxu0 %v2745
        %v2956 = vpop.f32.mrb[0].mxu0
        %v2957 = vadd.f32 0.0, %v2956
        %v2958 = vpop.f32.mrb[0].mxu0
        %2959 = vmatprep.mubr.f32.mxu0 0.0
        %2960 = vmatmul.mubr.f32.gmra.mrb[0].mxu0 %v2748
        %v2961 = vpop.f32.mrb[0].mxu0
        %v2962 = vadd.f32 0.0, %v2961
        %v2963 = vpop.f32.mrb[0].mxu0
        %2964 = vmatprep.mubr.f32.mxu0 0.0
        %2965 = vmatmul.mubr.f32.gmra.mrb[0].mxu0 %v2751
        %v2966 = vpop.f32.mrb[0].mxu0
        %v2967 = vadd.f32 0.0, %v2966
        %v2968 = vpop.f32.mrb[0].mxu0
        %2969 = vmatprep.mubr.f32.mxu0 0.0
        %2970 = vmatmul.mubr.f32.gmra.mrb[0].mxu0 %v2754
        %v2971 = vpop.f32.mrb[0].mxu0
        %v2972 = vadd.f32 0.0, %v2971
        %v2973 = vpop.f32.mrb[0].mxu0
        %2974 = vmatprep.mubr.f32.mxu0 0.0
        %2975 = vmatmul.mubr.f32.gmra.mrb[0].mxu0 %v2757
        %v2976 = vpop.f32.mrb[0].mxu0
        %v2977 = vadd.f32 0.0, %v2976
        %v2978 = vpop.f32.mrb[0].mxu0
        %2979 = vmatprep.mubr.f32.mxu0 0.0
        %2980 = vmatmul.mubr.f32.gmra.mrb[0].mxu0 %v2760
        %v2981 = vpop.f32.mrb[0].mxu0
        %v2982 = vadd.f32 0.0, %v2981
        %v2983 = vpop.f32.mrb[0].mxu0
        %2984 = vmatprep.mubr.f32.mxu0 0.0
        %2985 = vmatmul.mubr.f32.gmra.mrb[0].mxu0 %v2763
        %v2986 = vpop.f32.mrb[0].mxu0
        %v2987 = vadd.f32 0.0, %v2986
        %v2988 = vpop.f32.mrb[0].mxu0
        %2989 = vdwg.mxu0
        %v2990 = vadd.f32 %v2600, %v2832
        %v2991 = vadd.f32 %v2601, %v2837
        %v2992 = vadd.f32 %v2602, %v2842
        %v2993 = vadd.f32 %v2603, %v2847
        %v2994 = vadd.f32 %v2604, %v2852
        %v2995 = vadd.f32 %v2605, %v2857
        %v2996 = vadd.f32 %v2606, %v2862
        %v2997 = vadd.f32 %v2607, %v2867
        %v2998 = vadd.f32 %v2608, %v2872
        %v2999 = vadd.f32 %v2609, %v2877
        %v3000 = vadd.f32 %v2610, %v2882
        %v3001 = vadd.f32 %v2611, %v2887
        %v3002 = vadd.f32 %v2612, %v2892
        %v3003 = vadd.f32 %v2613, %v2897
        %v3004 = vadd.f32 %v2614, %v2902
        %v3005 = vadd.f32 %v2615, %v2907
        %v3006 = vadd.f32 %v2616, %v2912
        %v3007 = vadd.f32 %v2617, %v2917
        %v3008 = vadd.f32 %v2618, %v2922
        %v3009 = vadd.f32 %v2619, %v2927
        %v3010 = vadd.f32 %v2620, %v2932
        %v3011 = vadd.f32 %v2621, %v2937
        %v3012 = vadd.f32 %v2622, %v2942
        %v3013 = vadd.f32 %v2623, %v2947
        %v3014 = vadd.f32 %v2624, %v2952
        %v3015 = vadd.f32 %v2625, %v2957
        %v3016 = vadd.f32 %v2626, %v2962
        %v3017 = vadd.f32 %v2627, %v2967
        %v3018 = vadd.f32 %v2628, %v2972
        %v3019 = vadd.f32 %v2629, %v2977
        %v3020 = vadd.f32 %v2630, %v2982
        %v3021 = vadd.f32 %v2631, %v2987
        %s3022 = scalar_lea.vmem [#allocation2], 64
        %v3023 = vld [vmem:[%s3022 + $0x7] sm:$0xff]
        %v3024 = vld [vmem:[%s3022 + $0xf] sm:$0xff]
        %v3025 = vld [vmem:[%s3022 + $0x27] sm:$0xff]
        %v3026 = vld [vmem:[%s3022 + $0x2f] sm:$0xff]
        %v3027 = vld [vmem:[%s3022 + $0x47] sm:$0xff]
        %v3028 = vld [vmem:[%s3022 + $0x4f] sm:$0xff]
        %v3029 = vld [vmem:[%s3022 + $0x67] sm:$0xff]
        %v3030 = vld [vmem:[%s3022 + $0x6f] sm:$0xff]
        %v3031 = vld [vmem:[%s3022 + $0x87] sm:$0xff]
        %v3032 = vld [vmem:[%s3022 + $0x8f] sm:$0xff]
        %v3033 = vld [vmem:[%s3022 + $0xa7] sm:$0xff]
        %v3034 = vld [vmem:[%s3022 + $0xaf] sm:$0xff]
        %v3035 = vld [vmem:[%s3022 + $0xc7] sm:$0xff]
        %v3036 = vld [vmem:[%s3022 + $0xcf] sm:$0xff]
        %v3037 = vld [vmem:[%s3022 + $0xe7] sm:$0xff]
        %v3038 = vld [vmem:[%s3022 + $0xef] sm:$0xff]
        %v3039 = vld [vmem:[%s3022 + $0x107] sm:$0xff]
        %v3040 = vld [vmem:[%s3022 + $0x10f] sm:$0xff]
        %v3041 = vld [vmem:[%s3022 + $0x127] sm:$0xff]
        %v3042 = vld [vmem:[%s3022 + $0x12f] sm:$0xff]
        %v3043 = vld [vmem:[%s3022 + $0x147] sm:$0xff]
        %v3044 = vld [vmem:[%s3022 + $0x14f] sm:$0xff]
        %v3045 = vld [vmem:[%s3022 + $0x167] sm:$0xff]
        %v3046 = vld [vmem:[%s3022 + $0x16f] sm:$0xff]
        %v3047 = vld [vmem:[%s3022 + $0x187] sm:$0xff]
        %v3048 = vld [vmem:[%s3022 + $0x18f] sm:$0xff]
        %v3049 = vld [vmem:[%s3022 + $0x1a7] sm:$0xff]
        %v3050 = vld [vmem:[%s3022 + $0x1af] sm:$0xff]
        %v3051 = vld [vmem:[%s3022 + $0x1c7] sm:$0xff]
        %v3052 = vld [vmem:[%s3022 + $0x1cf] sm:$0xff]
        %v3053 = vld [vmem:[%s3022 + $0x1e7] sm:$0xff]
        %v3054 = vld [vmem:[%s3022 + $0x1ef] sm:$0xff]
        %s3055 = scalar_lea.vmem %s3, 192
        %v3056 = vld [vmem:[%s3055] sm:$0xff]
        %v3057 = vld [vmem:[%s3055 + $0x8] sm:$0xff]
        %v3058 = vld [vmem:[%s3055 + $0x10] sm:$0xff]
        %v3059 = vld [vmem:[%s3055 + $0x18] sm:$0xff]
        %v3061 = vsel %vm319, %v3023, 0
        %v3064 = vsel %vm319, %v3024, 0
        %v3067 = vsel %vm319, %v3025, 0
        %v3070 = vsel %vm319, %v3026, 0
        %v3073 = vsel %vm319, %v3027, 0
        %v3076 = vsel %vm319, %v3028, 0
        %v3079 = vsel %vm319, %v3029, 0
        %v3082 = vsel %vm319, %v3030, 0
        %v3085 = vsel %vm319, %v3031, 0
        %v3088 = vsel %vm319, %v3032, 0
        %v3091 = vsel %vm319, %v3033, 0
        %v3094 = vsel %vm319, %v3034, 0
        %v3097 = vsel %vm319, %v3035, 0
        %v3100 = vsel %vm319, %v3036, 0
        %v3103 = vsel %vm319, %v3037, 0
        %v3106 = vsel %vm319, %v3038, 0
        %v3109 = vsel %vm319, %v3039, 0
        %v3112 = vsel %vm319, %v3040, 0
        %v3115 = vsel %vm319, %v3041, 0
        %v3118 = vsel %vm319, %v3042, 0
        %v3121 = vsel %vm319, %v3043, 0
        %v3124 = vsel %vm319, %v3044, 0
        %v3127 = vsel %vm319, %v3045, 0
        %v3130 = vsel %vm319, %v3046, 0
        %v3133 = vsel %vm319, %v3047, 0
        %v3136 = vsel %vm319, %v3048, 0
        %v3139 = vsel %vm319, %v3049, 0
        %v3142 = vsel %vm319, %v3050, 0
        %v3145 = vsel %vm319, %v3051, 0
        %v3148 = vsel %vm319, %v3052, 0
        %v3151 = vsel %vm319, %v3053, 0
        %v3154 = vsel %vm319, %v3054, 0
        %3156 = vmatprep.subr.mxu0 0.0
        %3157 = vmatpush1.msra.mxu0 %v3056
        %3158 = vmatprep.subr.mxu0 0.0
        %3159 = vmatpush1.msra.mxu0 %v3057
        %3160 = vmatprep.subr.mxu0 0.0
        %3161 = vmatpush1.msra.mxu0 %v3058
        %3162 = vmatprep.subr.mxu0 0.0
        %3163 = vmatpush1.msra.mxu0 %v3059
        %3164 = vmatprep.subr.mxu0 0.0
        %3165 = vmatpush1.msra.mxu0 0.0
        %3166 = vmatprep.subr.mxu0 0.0
        %3167 = vmatpush1.msra.mxu0 0.0
        %3168 = vmatprep.subr.mxu0 0.0
        %3169 = vmatpush1.msra.mxu0 0.0
        %3170 = vmatprep.subr.mxu0 0.0
        %3171 = vmatpush1.msra.mxu0 0.0
        %3172 = vmatprep.subr.mxu0 0.0
        %3173 = vmatpush1.msra.mxu0 0.0
        %3174 = vmatprep.subr.mxu0 0.0
        %3175 = vmatpush1.msra.mxu0 0.0
        %3176 = vmatprep.subr.mxu0 0.0
        %3177 = vmatpush1.msra.mxu0 0.0
        %3178 = vmatprep.subr.mxu0 0.0
        %3179 = vmatpush1.msra.mxu0 0.0
        %3180 = vmatprep.subr.mxu0 0.0
        %3181 = vmatpush1.msra.mxu0 0.0
        %3182 = vmatprep.subr.mxu0 0.0
        %3183 = vmatpush1.msra.mxu0 0.0
        %3184 = vmatprep.subr.mxu0 0.0
        %3185 = vmatpush1.msra.mxu0 0.0
        %3186 = vmatprep.subr.mxu0 0.0
        %3187 = vmatpush1.msra.mxu0 0.0
        %3188 = vmatprep.subr.mxu0 0.0
        %3189 = vmatpush1.msra.mxu0 0.0
        %3190 = vmatprep.subr.mxu0 0.0
        %3191 = vmatpush1.msra.mxu0 0.0
        %3192 = vmatprep.subr.mxu0 0.0
        %3193 = vmatpush1.msra.mxu0 0.0
        %3194 = vmatprep.subr.mxu0 0.0
        %3195 = vmatpush1.msra.mxu0 0.0
        %3196 = vmatprep.subr.mxu0 0.0
        %3197 = vmatpush1.msra.mxu0 0.0
        %3198 = vmatprep.subr.mxu0 0.0
        %3199 = vmatpush1.msra.mxu0 0.0
        %3200 = vmatprep.subr.mxu0 0.0
        %3201 = vmatpush1.msra.mxu0 0.0
        %3202 = vmatprep.subr.mxu0 0.0
        %3203 = vmatpush1.msra.mxu0 0.0
        %3204 = vmatprep.subr.mxu0 0.0
        %3205 = vmatpush1.msra.mxu0 0.0
        %3206 = vmatprep.subr.mxu0 0.0
        %3207 = vmatpush1.msra.mxu0 0.0
        %3208 = vmatprep.subr.mxu0 0.0
        %3209 = vmatpush1.msra.mxu0 0.0
        %3210 = vmatprep.subr.mxu0 0.0
        %3211 = vmatpush1.msra.mxu0 0.0
        %3212 = vmatprep.subr.mxu0 0.0
        %3213 = vmatpush1.msra.mxu0 0.0
        %3214 = vmatprep.subr.mxu0 0.0
        %3215 = vmatpush1.msra.mxu0 0.0
        %3216 = vmatprep.subr.mxu0 0.0
        %3217 = vmatpush1.msra.mxu0 0.0
        %3218 = vmatprep.subr.mxu0 0.0
        %3219 = vmatpush1.msra.mxu0 0.0
        %3220 = vmatprep.mubr.f32.mxu0 0.0
        %3221 = vmatmul.mubr.f32.gmra.mrb[0].mxu0 %v3061
        %v3222 = vpop.f32.mrb[0].mxu0
        %v3223 = vadd.f32 0.0, %v3222
        %v3224 = vpop.f32.mrb[0].mxu0
        %3225 = vmatprep.mubr.f32.mxu0 0.0
        %3226 = vmatmul.mubr.f32.gmra.mrb[0].mxu0 %v3064
        %v3227 = vpop.f32.mrb[0].mxu0
        %v3228 = vadd.f32 0.0, %v3227
        %v3229 = vpop.f32.mrb[0].mxu0
        %3230 = vmatprep.mubr.f32.mxu0 0.0
        %3231 = vmatmul.mubr.f32.gmra.mrb[0].mxu0 %v3067
        %v3232 = vpop.f32.mrb[0].mxu0
        %v3233 = vadd.f32 0.0, %v3232
        %v3234 = vpop.f32.mrb[0].mxu0
        %3235 = vmatprep.mubr.f32.mxu0 0.0
        %3236 = vmatmul.mubr.f32.gmra.mrb[0].mxu0 %v3070
        %v3237 = vpop.f32.mrb[0].mxu0
        %v3238 = vadd.f32 0.0, %v3237
        %v3239 = vpop.f32.mrb[0].mxu0
        %3240 = vmatprep.mubr.f32.mxu0 0.0
        %3241 = vmatmul.mubr.f32.gmra.mrb[0].mxu0 %v3073
        %v3242 = vpop.f32.mrb[0].mxu0
        %v3243 = vadd.f32 0.0, %v3242
        %v3244 = vpop.f32.mrb[0].mxu0
        %3245 = vmatprep.mubr.f32.mxu0 0.0
        %3246 = vmatmul.mubr.f32.gmra.mrb[0].mxu0 %v3076
        %v3247 = vpop.f32.mrb[0].mxu0
        %v3248 = vadd.f32 0.0, %v3247
        %v3249 = vpop.f32.mrb[0].mxu0
        %3250 = vmatprep.mubr.f32.mxu0 0.0
        %3251 = vmatmul.mubr.f32.gmra.mrb[0].mxu0 %v3079
        %v3252 = vpop.f32.mrb[0].mxu0
        %v3253 = vadd.f32 0.0, %v3252
        %v3254 = vpop.f32.mrb[0].mxu0
        %3255 = vmatprep.mubr.f32.mxu0 0.0
        %3256 = vmatmul.mubr.f32.gmra.mrb[0].mxu0 %v3082
        %v3257 = vpop.f32.mrb[0].mxu0
        %v3258 = vadd.f32 0.0, %v3257
        %v3259 = vpop.f32.mrb[0].mxu0
        %3260 = vmatprep.mubr.f32.mxu0 0.0
        %3261 = vmatmul.mubr.f32.gmra.mrb[0].mxu0 %v3085
        %v3262 = vpop.f32.mrb[0].mxu0
        %v3263 = vadd.f32 0.0, %v3262
        %v3264 = vpop.f32.mrb[0].mxu0
        %3265 = vmatprep.mubr.f32.mxu0 0.0
        %3266 = vmatmul.mubr.f32.gmra.mrb[0].mxu0 %v3088
        %v3267 = vpop.f32.mrb[0].mxu0
        %v3268 = vadd.f32 0.0, %v3267
        %v3269 = vpop.f32.mrb[0].mxu0
        %3270 = vmatprep.mubr.f32.mxu0 0.0
        %3271 = vmatmul.mubr.f32.gmra.mrb[0].mxu0 %v3091
        %v3272 = vpop.f32.mrb[0].mxu0
        %v3273 = vadd.f32 0.0, %v3272
        %v3274 = vpop.f32.mrb[0].mxu0
        %3275 = vmatprep.mubr.f32.mxu0 0.0
        %3276 = vmatmul.mubr.f32.gmra.mrb[0].mxu0 %v3094
        %v3277 = vpop.f32.mrb[0].mxu0
        %v3278 = vadd.f32 0.0, %v3277
        %v3279 = vpop.f32.mrb[0].mxu0
        %3280 = vmatprep.mubr.f32.mxu0 0.0
        %3281 = vmatmul.mubr.f32.gmra.mrb[0].mxu0 %v3097
        %v3282 = vpop.f32.mrb[0].mxu0
        %v3283 = vadd.f32 0.0, %v3282
        %v3284 = vpop.f32.mrb[0].mxu0
        %3285 = vmatprep.mubr.f32.mxu0 0.0
        %3286 = vmatmul.mubr.f32.gmra.mrb[0].mxu0 %v3100
        %v3287 = vpop.f32.mrb[0].mxu0
        %v3288 = vadd.f32 0.0, %v3287
        %v3289 = vpop.f32.mrb[0].mxu0
        %3290 = vmatprep.mubr.f32.mxu0 0.0
        %3291 = vmatmul.mubr.f32.gmra.mrb[0].mxu0 %v3103
        %v3292 = vpop.f32.mrb[0].mxu0
        %v3293 = vadd.f32 0.0, %v3292
        %v3294 = vpop.f32.mrb[0].mxu0
        %3295 = vmatprep.mubr.f32.mxu0 0.0
        %3296 = vmatmul.mubr.f32.gmra.mrb[0].mxu0 %v3106
        %v3297 = vpop.f32.mrb[0].mxu0
        %v3298 = vadd.f32 0.0, %v3297
        %v3299 = vpop.f32.mrb[0].mxu0
        %3300 = vmatprep.mubr.f32.mxu0 0.0
        %3301 = vmatmul.mubr.f32.gmra.mrb[0].mxu0 %v3109
        %v3302 = vpop.f32.mrb[0].mxu0
        %v3303 = vadd.f32 0.0, %v3302
        %v3304 = vpop.f32.mrb[0].mxu0
        %3305 = vmatprep.mubr.f32.mxu0 0.0
        %3306 = vmatmul.mubr.f32.gmra.mrb[0].mxu0 %v3112
        %v3307 = vpop.f32.mrb[0].mxu0
        %v3308 = vadd.f32 0.0, %v3307
        %v3309 = vpop.f32.mrb[0].mxu0
        %3310 = vmatprep.mubr.f32.mxu0 0.0
        %3311 = vmatmul.mubr.f32.gmra.mrb[0].mxu0 %v3115
        %v3312 = vpop.f32.mrb[0].mxu0
        %v3313 = vadd.f32 0.0, %v3312
        %v3314 = vpop.f32.mrb[0].mxu0
        %3315 = vmatprep.mubr.f32.mxu0 0.0
        %3316 = vmatmul.mubr.f32.gmra.mrb[0].mxu0 %v3118
        %v3317 = vpop.f32.mrb[0].mxu0
        %v3318 = vadd.f32 0.0, %v3317
        %v3319 = vpop.f32.mrb[0].mxu0
        %3320 = vmatprep.mubr.f32.mxu0 0.0
        %3321 = vmatmul.mubr.f32.gmra.mrb[0].mxu0 %v3121
        %v3322 = vpop.f32.mrb[0].mxu0
        %v3323 = vadd.f32 0.0, %v3322
        %v3324 = vpop.f32.mrb[0].mxu0
        %3325 = vmatprep.mubr.f32.mxu0 0.0
        %3326 = vmatmul.mubr.f32.gmra.mrb[0].mxu0 %v3124
        %v3327 = vpop.f32.mrb[0].mxu0
        %v3328 = vadd.f32 0.0, %v3327
        %v3329 = vpop.f32.mrb[0].mxu0
        %3330 = vmatprep.mubr.f32.mxu0 0.0
        %3331 = vmatmul.mubr.f32.gmra.mrb[0].mxu0 %v3127
        %v3332 = vpop.f32.mrb[0].mxu0
        %v3333 = vadd.f32 0.0, %v3332
        %v3334 = vpop.f32.mrb[0].mxu0
        %3335 = vmatprep.mubr.f32.mxu0 0.0
        %3336 = vmatmul.mubr.f32.gmra.mrb[0].mxu0 %v3130
        %v3337 = vpop.f32.mrb[0].mxu0
        %v3338 = vadd.f32 0.0, %v3337
        %v3339 = vpop.f32.mrb[0].mxu0
        %3340 = vmatprep.mubr.f32.mxu0 0.0
        %3341 = vmatmul.mubr.f32.gmra.mrb[0].mxu0 %v3133
        %v3342 = vpop.f32.mrb[0].mxu0
        %v3343 = vadd.f32 0.0, %v3342
        %v3344 = vpop.f32.mrb[0].mxu0
        %3345 = vmatprep.mubr.f32.mxu0 0.0
        %3346 = vmatmul.mubr.f32.gmra.mrb[0].mxu0 %v3136
        %v3347 = vpop.f32.mrb[0].mxu0
        %v3348 = vadd.f32 0.0, %v3347
        %v3349 = vpop.f32.mrb[0].mxu0
        %3350 = vmatprep.mubr.f32.mxu0 0.0
        %3351 = vmatmul.mubr.f32.gmra.mrb[0].mxu0 %v3139
        %v3352 = vpop.f32.mrb[0].mxu0
        %v3353 = vadd.f32 0.0, %v3352
        %v3354 = vpop.f32.mrb[0].mxu0
        %3355 = vmatprep.mubr.f32.mxu0 0.0
        %3356 = vmatmul.mubr.f32.gmra.mrb[0].mxu0 %v3142
        %v3357 = vpop.f32.mrb[0].mxu0
        %v3358 = vadd.f32 0.0, %v3357
        %v3359 = vpop.f32.mrb[0].mxu0
        %3360 = vmatprep.mubr.f32.mxu0 0.0
        %3361 = vmatmul.mubr.f32.gmra.mrb[0].mxu0 %v3145
        %v3362 = vpop.f32.mrb[0].mxu0
        %v3363 = vadd.f32 0.0, %v3362
        %v3364 = vpop.f32.mrb[0].mxu0
        %3365 = vmatprep.mubr.f32.mxu0 0.0
        %3366 = vmatmul.mubr.f32.gmra.mrb[0].mxu0 %v3148
        %v3367 = vpop.f32.mrb[0].mxu0
        %v3368 = vadd.f32 0.0, %v3367
        %v3369 = vpop.f32.mrb[0].mxu0
        %3370 = vmatprep.mubr.f32.mxu0 0.0
        %3371 = vmatmul.mubr.f32.gmra.mrb[0].mxu0 %v3151
        %v3372 = vpop.f32.mrb[0].mxu0
        %v3373 = vadd.f32 0.0, %v3372
        %v3374 = vpop.f32.mrb[0].mxu0
        %3375 = vmatprep.mubr.f32.mxu0 0.0
        %3376 = vmatmul.mubr.f32.gmra.mrb[0].mxu0 %v3154
        %v3377 = vpop.f32.mrb[0].mxu0
        %v3378 = vadd.f32 0.0, %v3377
        %v3379 = vpop.f32.mrb[0].mxu0
        %3380 = vdwg.mxu0
        %v3381 = vadd.f32 %v2990, %v3223
        %v3382 = vadd.f32 %v2991, %v3228
        %v3383 = vadd.f32 %v2992, %v3233
        %v3384 = vadd.f32 %v2993, %v3238
        %v3385 = vadd.f32 %v2994, %v3243
        %v3386 = vadd.f32 %v2995, %v3248
        %v3387 = vadd.f32 %v2996, %v3253
        %v3388 = vadd.f32 %v2997, %v3258
        %v3389 = vadd.f32 %v2998, %v3263
        %v3390 = vadd.f32 %v2999, %v3268
        %v3391 = vadd.f32 %v3000, %v3273
        %v3392 = vadd.f32 %v3001, %v3278
        %v3393 = vadd.f32 %v3002, %v3283
        %v3394 = vadd.f32 %v3003, %v3288
        %v3395 = vadd.f32 %v3004, %v3293
        %v3396 = vadd.f32 %v3005, %v3298
        %v3397 = vadd.f32 %v3006, %v3303
        %v3398 = vadd.f32 %v3007, %v3308
        %v3399 = vadd.f32 %v3008, %v3313
        %v3400 = vadd.f32 %v3009, %v3318
        %v3401 = vadd.f32 %v3010, %v3323
        %v3402 = vadd.f32 %v3011, %v3328
        %v3403 = vadd.f32 %v3012, %v3333
        %v3404 = vadd.f32 %v3013, %v3338
        %v3405 = vadd.f32 %v3014, %v3343
        %v3406 = vadd.f32 %v3015, %v3348
        %v3407 = vadd.f32 %v3016, %v3353
        %v3408 = vadd.f32 %v3017, %v3358
        %v3409 = vadd.f32 %v3018, %v3363
        %v3410 = vadd.f32 %v3019, %v3368
        %v3411 = vadd.f32 %v3020, %v3373
        %v3412 = vadd.f32 %v3021, %v3378
        %v3413 = vld [vmem:[%s3022 + $0x8] sm:$0xff]
        %v3414 = vld [vmem:[%s3022 + $0x10] sm:$0xff]
        %v3415 = vld [vmem:[%s3022 + $0x28] sm:$0xff]
        %v3416 = vld [vmem:[%s3022 + $0x30] sm:$0xff]
        %v3417 = vld [vmem:[%s3022 + $0x48] sm:$0xff]
        %v3418 = vld [vmem:[%s3022 + $0x50] sm:$0xff]
        %v3419 = vld [vmem:[%s3022 + $0x68] sm:$0xff]
        %v3420 = vld [vmem:[%s3022 + $0x70] sm:$0xff]
        %v3421 = vld [vmem:[%s3022 + $0x88] sm:$0xff]
        %v3422 = vld [vmem:[%s3022 + $0x90] sm:$0xff]
        %v3423 = vld [vmem:[%s3022 + $0xa8] sm:$0xff]
        %v3424 = vld [vmem:[%s3022 + $0xb0] sm:$0xff]
        %v3425 = vld [vmem:[%s3022 + $0xc8] sm:$0xff]
        %v3426 = vld [vmem:[%s3022 + $0xd0] sm:$0xff]
        %v3427 = vld [vmem:[%s3022 + $0xe8] sm:$0xff]
        %v3428 = vld [vmem:[%s3022 + $0xf0] sm:$0xff]
        %v3429 = vld [vmem:[%s3022 + $0x108] sm:$0xff]
        %v3430 = vld [vmem:[%s3022 + $0x110] sm:$0xff]
        %v3431 = vld [vmem:[%s3022 + $0x128] sm:$0xff]
        %v3432 = vld [vmem:[%s3022 + $0x130] sm:$0xff]
        %v3433 = vld [vmem:[%s3022 + $0x148] sm:$0xff]
        %v3434 = vld [vmem:[%s3022 + $0x150] sm:$0xff]
        %v3435 = vld [vmem:[%s3022 + $0x168] sm:$0xff]
        %v3436 = vld [vmem:[%s3022 + $0x170] sm:$0xff]
        %v3437 = vld [vmem:[%s3022 + $0x188] sm:$0xff]
        %v3438 = vld [vmem:[%s3022 + $0x190] sm:$0xff]
        %v3439 = vld [vmem:[%s3022 + $0x1a8] sm:$0xff]
        %v3440 = vld [vmem:[%s3022 + $0x1b0] sm:$0xff]
        %v3441 = vld [vmem:[%s3022 + $0x1c8] sm:$0xff]
        %v3442 = vld [vmem:[%s3022 + $0x1d0] sm:$0xff]
        %v3443 = vld [vmem:[%s3022 + $0x1e8] sm:$0xff]
        %v3444 = vld [vmem:[%s3022 + $0x1f0] sm:$0xff]
        %s3445 = scalar_lea.vmem %s3, 224
        %v3446 = vld [vmem:[%s3445] sm:$0xff]
        %v3447 = vld [vmem:[%s3445 + $0x8] sm:$0xff]
        %v3448 = vld [vmem:[%s3445 + $0x10] sm:$0xff]
        %v3449 = vld [vmem:[%s3445 + $0x18] sm:$0xff]
        %v3451 = vsel %vm319, %v3413, 0
        %v3454 = vsel %vm319, %v3414, 0
        %v3457 = vsel %vm319, %v3415, 0
        %v3460 = vsel %vm319, %v3416, 0
        %v3463 = vsel %vm319, %v3417, 0
        %v3466 = vsel %vm319, %v3418, 0
        %v3469 = vsel %vm319, %v3419, 0
        %v3472 = vsel %vm319, %v3420, 0
        %v3475 = vsel %vm319, %v3421, 0
        %v3478 = vsel %vm319, %v3422, 0
        %v3481 = vsel %vm319, %v3423, 0
        %v3484 = vsel %vm319, %v3424, 0
        %v3487 = vsel %vm319, %v3425, 0
        %v3490 = vsel %vm319, %v3426, 0
        %v3493 = vsel %vm319, %v3427, 0
        %v3496 = vsel %vm319, %v3428, 0
        %v3499 = vsel %vm319, %v3429, 0
        %v3502 = vsel %vm319, %v3430, 0
        %v3505 = vsel %vm319, %v3431, 0
        %v3508 = vsel %vm319, %v3432, 0
        %v3511 = vsel %vm319, %v3433, 0
        %v3514 = vsel %vm319, %v3434, 0
        %v3517 = vsel %vm319, %v3435, 0
        %v3520 = vsel %vm319, %v3436, 0
        %v3523 = vsel %vm319, %v3437, 0
        %v3526 = vsel %vm319, %v3438, 0
        %v3529 = vsel %vm319, %v3439, 0
        %v3532 = vsel %vm319, %v3440, 0
        %v3535 = vsel %vm319, %v3441, 0
        %v3538 = vsel %vm319, %v3442, 0
        %v3541 = vsel %vm319, %v3443, 0
        %v3544 = vsel %vm319, %v3444, 0
        %3546 = vmatprep.subr.mxu0 0.0
        %3547 = vmatpush1.msra.mxu0 %v3446
        %3548 = vmatprep.subr.mxu0 0.0
        %3549 = vmatpush1.msra.mxu0 %v3447
        %3550 = vmatprep.subr.mxu0 0.0
        %3551 = vmatpush1.msra.mxu0 %v3448
        %3552 = vmatprep.subr.mxu0 0.0
        %3553 = vmatpush1.msra.mxu0 %v3449
        %3554 = vmatprep.subr.mxu0 0.0
        %3555 = vmatpush1.msra.mxu0 0.0
        %3556 = vmatprep.subr.mxu0 0.0
        %3557 = vmatpush1.msra.mxu0 0.0
        %3558 = vmatprep.subr.mxu0 0.0
        %3559 = vmatpush1.msra.mxu0 0.0
        %3560 = vmatprep.subr.mxu0 0.0
        %3561 = vmatpush1.msra.mxu0 0.0
        %3562 = vmatprep.subr.mxu0 0.0
        %3563 = vmatpush1.msra.mxu0 0.0
        %3564 = vmatprep.subr.mxu0 0.0
        %3565 = vmatpush1.msra.mxu0 0.0
        %3566 = vmatprep.subr.mxu0 0.0
        %3567 = vmatpush1.msra.mxu0 0.0
        %3568 = vmatprep.subr.mxu0 0.0
        %3569 = vmatpush1.msra.mxu0 0.0
        %3570 = vmatprep.subr.mxu0 0.0
        %3571 = vmatpush1.msra.mxu0 0.0
        %3572 = vmatprep.subr.mxu0 0.0
        %3573 = vmatpush1.msra.mxu0 0.0
        %3574 = vmatprep.subr.mxu0 0.0
        %3575 = vmatpush1.msra.mxu0 0.0
        %3576 = vmatprep.subr.mxu0 0.0
        %3577 = vmatpush1.msra.mxu0 0.0
        %3578 = vmatprep.subr.mxu0 0.0
        %3579 = vmatpush1.msra.mxu0 0.0
        %3580 = vmatprep.subr.mxu0 0.0
        %3581 = vmatpush1.msra.mxu0 0.0
        %3582 = vmatprep.subr.mxu0 0.0
        %3583 = vmatpush1.msra.mxu0 0.0
        %3584 = vmatprep.subr.mxu0 0.0
        %3585 = vmatpush1.msra.mxu0 0.0
        %3586 = vmatprep.subr.mxu0 0.0
        %3587 = vmatpush1.msra.mxu0 0.0
        %3588 = vmatprep.subr.mxu0 0.0
        %3589 = vmatpush1.msra.mxu0 0.0
        %3590 = vmatprep.subr.mxu0 0.0
        %3591 = vmatpush1.msra.mxu0 0.0
        %3592 = vmatprep.subr.mxu0 0.0
        %3593 = vmatpush1.msra.mxu0 0.0
        %3594 = vmatprep.subr.mxu0 0.0
        %3595 = vmatpush1.msra.mxu0 0.0
        %3596 = vmatprep.subr.mxu0 0.0
        %3597 = vmatpush1.msra.mxu0 0.0
        %3598 = vmatprep.subr.mxu0 0.0
        %3599 = vmatpush1.msra.mxu0 0.0
        %3600 = vmatprep.subr.mxu0 0.0
        %3601 = vmatpush1.msra.mxu0 0.0
        %3602 = vmatprep.subr.mxu0 0.0
        %3603 = vmatpush1.msra.mxu0 0.0
        %3604 = vmatprep.subr.mxu0 0.0
        %3605 = vmatpush1.msra.mxu0 0.0
        %3606 = vmatprep.subr.mxu0 0.0
        %3607 = vmatpush1.msra.mxu0 0.0
        %3608 = vmatprep.subr.mxu0 0.0
        %3609 = vmatpush1.msra.mxu0 0.0
        %3610 = vmatprep.mubr.f32.mxu0 0.0
        %3611 = vmatmul.mubr.f32.gmra.mrb[0].mxu0 %v3451
        %v3612 = vpop.f32.mrb[0].mxu0
        %v3613 = vadd.f32 0.0, %v3612
        %v3614 = vpop.f32.mrb[0].mxu0
        %3615 = vmatprep.mubr.f32.mxu0 0.0
        %3616 = vmatmul.mubr.f32.gmra.mrb[0].mxu0 %v3454
        %v3617 = vpop.f32.mrb[0].mxu0
        %v3618 = vadd.f32 0.0, %v3617
        %v3619 = vpop.f32.mrb[0].mxu0
        %3620 = vmatprep.mubr.f32.mxu0 0.0
        %3621 = vmatmul.mubr.f32.gmra.mrb[0].mxu0 %v3457
        %v3622 = vpop.f32.mrb[0].mxu0
        %v3623 = vadd.f32 0.0, %v3622
        %v3624 = vpop.f32.mrb[0].mxu0
        %3625 = vmatprep.mubr.f32.mxu0 0.0
        %3626 = vmatmul.mubr.f32.gmra.mrb[0].mxu0 %v3460
        %v3627 = vpop.f32.mrb[0].mxu0
        %v3628 = vadd.f32 0.0, %v3627
        %v3629 = vpop.f32.mrb[0].mxu0
        %3630 = vmatprep.mubr.f32.mxu0 0.0
        %3631 = vmatmul.mubr.f32.gmra.mrb[0].mxu0 %v3463
        %v3632 = vpop.f32.mrb[0].mxu0
        %v3633 = vadd.f32 0.0, %v3632
        %v3634 = vpop.f32.mrb[0].mxu0
        %3635 = vmatprep.mubr.f32.mxu0 0.0
        %3636 = vmatmul.mubr.f32.gmra.mrb[0].mxu0 %v3466
        %v3637 = vpop.f32.mrb[0].mxu0
        %v3638 = vadd.f32 0.0, %v3637
        %v3639 = vpop.f32.mrb[0].mxu0
        %3640 = vmatprep.mubr.f32.mxu0 0.0
        %3641 = vmatmul.mubr.f32.gmra.mrb[0].mxu0 %v3469
        %v3642 = vpop.f32.mrb[0].mxu0
        %v3643 = vadd.f32 0.0, %v3642
        %v3644 = vpop.f32.mrb[0].mxu0
        %3645 = vmatprep.mubr.f32.mxu0 0.0
        %3646 = vmatmul.mubr.f32.gmra.mrb[0].mxu0 %v3472
        %v3647 = vpop.f32.mrb[0].mxu0
        %v3648 = vadd.f32 0.0, %v3647
        %v3649 = vpop.f32.mrb[0].mxu0
        %3650 = vmatprep.mubr.f32.mxu0 0.0
        %3651 = vmatmul.mubr.f32.gmra.mrb[0].mxu0 %v3475
        %v3652 = vpop.f32.mrb[0].mxu0
        %v3653 = vadd.f32 0.0, %v3652
        %v3654 = vpop.f32.mrb[0].mxu0
        %3655 = vmatprep.mubr.f32.mxu0 0.0
        %3656 = vmatmul.mubr.f32.gmra.mrb[0].mxu0 %v3478
        %v3657 = vpop.f32.mrb[0].mxu0
        %v3658 = vadd.f32 0.0, %v3657
        %v3659 = vpop.f32.mrb[0].mxu0
        %3660 = vmatprep.mubr.f32.mxu0 0.0
        %3661 = vmatmul.mubr.f32.gmra.mrb[0].mxu0 %v3481
        %v3662 = vpop.f32.mrb[0].mxu0
        %v3663 = vadd.f32 0.0, %v3662
        %v3664 = vpop.f32.mrb[0].mxu0
        %3665 = vmatprep.mubr.f32.mxu0 0.0
        %3666 = vmatmul.mubr.f32.gmra.mrb[0].mxu0 %v3484
        %v3667 = vpop.f32.mrb[0].mxu0
        %v3668 = vadd.f32 0.0, %v3667
        %v3669 = vpop.f32.mrb[0].mxu0
        %3670 = vmatprep.mubr.f32.mxu0 0.0
        %3671 = vmatmul.mubr.f32.gmra.mrb[0].mxu0 %v3487
        %v3672 = vpop.f32.mrb[0].mxu0
        %v3673 = vadd.f32 0.0, %v3672
        %v3674 = vpop.f32.mrb[0].mxu0
        %3675 = vmatprep.mubr.f32.mxu0 0.0
        %3676 = vmatmul.mubr.f32.gmra.mrb[0].mxu0 %v3490
        %v3677 = vpop.f32.mrb[0].mxu0
        %v3678 = vadd.f32 0.0, %v3677
        %v3679 = vpop.f32.mrb[0].mxu0
        %3680 = vmatprep.mubr.f32.mxu0 0.0
        %3681 = vmatmul.mubr.f32.gmra.mrb[0].mxu0 %v3493
        %v3682 = vpop.f32.mrb[0].mxu0
        %v3683 = vadd.f32 0.0, %v3682
        %v3684 = vpop.f32.mrb[0].mxu0
        %3685 = vmatprep.mubr.f32.mxu0 0.0
        %3686 = vmatmul.mubr.f32.gmra.mrb[0].mxu0 %v3496
        %v3687 = vpop.f32.mrb[0].mxu0
        %v3688 = vadd.f32 0.0, %v3687
        %v3689 = vpop.f32.mrb[0].mxu0
        %3690 = vmatprep.mubr.f32.mxu0 0.0
        %3691 = vmatmul.mubr.f32.gmra.mrb[0].mxu0 %v3499
        %v3692 = vpop.f32.mrb[0].mxu0
        %v3693 = vadd.f32 0.0, %v3692
        %v3694 = vpop.f32.mrb[0].mxu0
        %3695 = vmatprep.mubr.f32.mxu0 0.0
        %3696 = vmatmul.mubr.f32.gmra.mrb[0].mxu0 %v3502
        %v3697 = vpop.f32.mrb[0].mxu0
        %v3698 = vadd.f32 0.0, %v3697
        %v3699 = vpop.f32.mrb[0].mxu0
        %3700 = vmatprep.mubr.f32.mxu0 0.0
        %3701 = vmatmul.mubr.f32.gmra.mrb[0].mxu0 %v3505
        %v3702 = vpop.f32.mrb[0].mxu0
        %v3703 = vadd.f32 0.0, %v3702
        %v3704 = vpop.f32.mrb[0].mxu0
        %3705 = vmatprep.mubr.f32.mxu0 0.0
        %3706 = vmatmul.mubr.f32.gmra.mrb[0].mxu0 %v3508
        %v3707 = vpop.f32.mrb[0].mxu0
        %v3708 = vadd.f32 0.0, %v3707
        %v3709 = vpop.f32.mrb[0].mxu0
        %3710 = vmatprep.mubr.f32.mxu0 0.0
        %3711 = vmatmul.mubr.f32.gmra.mrb[0].mxu0 %v3511
        %v3712 = vpop.f32.mrb[0].mxu0
        %v3713 = vadd.f32 0.0, %v3712
        %v3714 = vpop.f32.mrb[0].mxu0
        %3715 = vmatprep.mubr.f32.mxu0 0.0
        %3716 = vmatmul.mubr.f32.gmra.mrb[0].mxu0 %v3514
        %v3717 = vpop.f32.mrb[0].mxu0
        %v3718 = vadd.f32 0.0, %v3717
        %v3719 = vpop.f32.mrb[0].mxu0
        %3720 = vmatprep.mubr.f32.mxu0 0.0
        %3721 = vmatmul.mubr.f32.gmra.mrb[0].mxu0 %v3517
        %v3722 = vpop.f32.mrb[0].mxu0
        %v3723 = vadd.f32 0.0, %v3722
        %v3724 = vpop.f32.mrb[0].mxu0
        %3725 = vmatprep.mubr.f32.mxu0 0.0
        %3726 = vmatmul.mubr.f32.gmra.mrb[0].mxu0 %v3520
        %v3727 = vpop.f32.mrb[0].mxu0
        %v3728 = vadd.f32 0.0, %v3727
        %v3729 = vpop.f32.mrb[0].mxu0
        %3730 = vmatprep.mubr.f32.mxu0 0.0
        %3731 = vmatmul.mubr.f32.gmra.mrb[0].mxu0 %v3523
        %v3732 = vpop.f32.mrb[0].mxu0
        %v3733 = vadd.f32 0.0, %v3732
        %v3734 = vpop.f32.mrb[0].mxu0
        %3735 = vmatprep.mubr.f32.mxu0 0.0
        %3736 = vmatmul.mubr.f32.gmra.mrb[0].mxu0 %v3526
        %v3737 = vpop.f32.mrb[0].mxu0
        %v3738 = vadd.f32 0.0, %v3737
        %v3739 = vpop.f32.mrb[0].mxu0
        %3740 = vmatprep.mubr.f32.mxu0 0.0
        %3741 = vmatmul.mubr.f32.gmra.mrb[0].mxu0 %v3529
        %v3742 = vpop.f32.mrb[0].mxu0
        %v3743 = vadd.f32 0.0, %v3742
        %v3744 = vpop.f32.mrb[0].mxu0
        %3745 = vmatprep.mubr.f32.mxu0 0.0
        %3746 = vmatmul.mubr.f32.gmra.mrb[0].mxu0 %v3532
        %v3747 = vpop.f32.mrb[0].mxu0
        %v3748 = vadd.f32 0.0, %v3747
        %v3749 = vpop.f32.mrb[0].mxu0
        %3750 = vmatprep.mubr.f32.mxu0 0.0
        %3751 = vmatmul.mubr.f32.gmra.mrb[0].mxu0 %v3535
        %v3752 = vpop.f32.mrb[0].mxu0
        %v3753 = vadd.f32 0.0, %v3752
        %v3754 = vpop.f32.mrb[0].mxu0
        %3755 = vmatprep.mubr.f32.mxu0 0.0
        %3756 = vmatmul.mubr.f32.gmra.mrb[0].mxu0 %v3538
        %v3757 = vpop.f32.mrb[0].mxu0
        %v3758 = vadd.f32 0.0, %v3757
        %v3759 = vpop.f32.mrb[0].mxu0
        %3760 = vmatprep.mubr.f32.mxu0 0.0
        %3761 = vmatmul.mubr.f32.gmra.mrb[0].mxu0 %v3541
        %v3762 = vpop.f32.mrb[0].mxu0
        %v3763 = vadd.f32 0.0, %v3762
        %v3764 = vpop.f32.mrb[0].mxu0
        %3765 = vmatprep.mubr.f32.mxu0 0.0
        %3766 = vmatmul.mubr.f32.gmra.mrb[0].mxu0 %v3544
        %v3767 = vpop.f32.mrb[0].mxu0
        %v3768 = vadd.f32 0.0, %v3767
        %v3769 = vpop.f32.mrb[0].mxu0
        %3770 = vdwg.mxu0
        %v3771 = vadd.f32 %v3381, %v3613
        %v3772 = vadd.f32 %v3382, %v3618
        %v3773 = vadd.f32 %v3383, %v3623
        %v3774 = vadd.f32 %v3384, %v3628
        %v3775 = vadd.f32 %v3385, %v3633
        %v3776 = vadd.f32 %v3386, %v3638
        %v3777 = vadd.f32 %v3387, %v3643
        %v3778 = vadd.f32 %v3388, %v3648
        %v3779 = vadd.f32 %v3389, %v3653
        %v3780 = vadd.f32 %v3390, %v3658
        %v3781 = vadd.f32 %v3391, %v3663
        %v3782 = vadd.f32 %v3392, %v3668
        %v3783 = vadd.f32 %v3393, %v3673
        %v3784 = vadd.f32 %v3394, %v3678
        %v3785 = vadd.f32 %v3395, %v3683
        %v3786 = vadd.f32 %v3396, %v3688
        %v3787 = vadd.f32 %v3397, %v3693
        %v3788 = vadd.f32 %v3398, %v3698
        %v3789 = vadd.f32 %v3399, %v3703
        %v3790 = vadd.f32 %v3400, %v3708
        %v3791 = vadd.f32 %v3401, %v3713
        %v3792 = vadd.f32 %v3402, %v3718
        %v3793 = vadd.f32 %v3403, %v3723
        %v3794 = vadd.f32 %v3404, %v3728
        %v3795 = vadd.f32 %v3405, %v3733
        %v3796 = vadd.f32 %v3406, %v3738
        %v3797 = vadd.f32 %v3407, %v3743
        %v3798 = vadd.f32 %v3408, %v3748
        %v3799 = vadd.f32 %v3409, %v3753
        %v3800 = vadd.f32 %v3410, %v3758
        %v3801 = vadd.f32 %v3411, %v3763
        %v3802 = vadd.f32 %v3412, %v3768
        %v3803 = vld [vmem:[%s3022 + $0x9] sm:$0xff]
        %v3804 = vld [vmem:[%s3022 + $0x11] sm:$0xff]
        %v3805 = vld [vmem:[%s3022 + $0x29] sm:$0xff]
        %v3806 = vld [vmem:[%s3022 + $0x31] sm:$0xff]
        %v3807 = vld [vmem:[%s3022 + $0x49] sm:$0xff]
        %v3808 = vld [vmem:[%s3022 + $0x51] sm:$0xff]
        %v3809 = vld [vmem:[%s3022 + $0x69] sm:$0xff]
        %v3810 = vld [vmem:[%s3022 + $0x71] sm:$0xff]
        %v3811 = vld [vmem:[%s3022 + $0x89] sm:$0xff]
        %v3812 = vld [vmem:[%s3022 + $0x91] sm:$0xff]
        %v3813 = vld [vmem:[%s3022 + $0xa9] sm:$0xff]
        %v3814 = vld [vmem:[%s3022 + $0xb1] sm:$0xff]
        %v3815 = vld [vmem:[%s3022 + $0xc9] sm:$0xff]
        %v3816 = vld [vmem:[%s3022 + $0xd1] sm:$0xff]
        %v3817 = vld [vmem:[%s3022 + $0xe9] sm:$0xff]
        %v3818 = vld [vmem:[%s3022 + $0xf1] sm:$0xff]
        %v3819 = vld [vmem:[%s3022 + $0x109] sm:$0xff]
        %v3820 = vld [vmem:[%s3022 + $0x111] sm:$0xff]
        %v3821 = vld [vmem:[%s3022 + $0x129] sm:$0xff]
        %v3822 = vld [vmem:[%s3022 + $0x131] sm:$0xff]
        %v3823 = vld [vmem:[%s3022 + $0x149] sm:$0xff]
        %v3824 = vld [vmem:[%s3022 + $0x151] sm:$0xff]
        %v3825 = vld [vmem:[%s3022 + $0x169] sm:$0xff]
        %v3826 = vld [vmem:[%s3022 + $0x171] sm:$0xff]
        %v3827 = vld [vmem:[%s3022 + $0x189] sm:$0xff]
        %v3828 = vld [vmem:[%s3022 + $0x191] sm:$0xff]
        %v3829 = vld [vmem:[%s3022 + $0x1a9] sm:$0xff]
        %v3830 = vld [vmem:[%s3022 + $0x1b1] sm:$0xff]
        %v3831 = vld [vmem:[%s3022 + $0x1c9] sm:$0xff]
        %v3832 = vld [vmem:[%s3022 + $0x1d1] sm:$0xff]
        %v3833 = vld [vmem:[%s3022 + $0x1e9] sm:$0xff]
        %v3834 = vld [vmem:[%s3022 + $0x1f1] sm:$0xff]
        %s3835 = scalar_lea.vmem %s3, 256
        %v3836 = vld [vmem:[%s3835] sm:$0xff]
        %v3837 = vld [vmem:[%s3835 + $0x8] sm:$0xff]
        %v3838 = vld [vmem:[%s3835 + $0x10] sm:$0xff]
        %v3839 = vld [vmem:[%s3835 + $0x18] sm:$0xff]
        %v3841 = vsel %vm319, %v3803, 0
        %v3844 = vsel %vm319, %v3804, 0
        %v3847 = vsel %vm319, %v3805, 0
        %v3850 = vsel %vm319, %v3806, 0
        %v3853 = vsel %vm319, %v3807, 0
        %v3856 = vsel %vm319, %v3808, 0
        %v3859 = vsel %vm319, %v3809, 0
        %v3862 = vsel %vm319, %v3810, 0
        %v3865 = vsel %vm319, %v3811, 0
        %v3868 = vsel %vm319, %v3812, 0
        %v3871 = vsel %vm319, %v3813, 0
        %v3874 = vsel %vm319, %v3814, 0
        %v3877 = vsel %vm319, %v3815, 0
        %v3880 = vsel %vm319, %v3816, 0
        %v3883 = vsel %vm319, %v3817, 0
        %v3886 = vsel %vm319, %v3818, 0
        %v3889 = vsel %vm319, %v3819, 0
        %v3892 = vsel %vm319, %v3820, 0
        %v3895 = vsel %vm319, %v3821, 0
        %v3898 = vsel %vm319, %v3822, 0
        %v3901 = vsel %vm319, %v3823, 0
        %v3904 = vsel %vm319, %v3824, 0
        %v3907 = vsel %vm319, %v3825, 0
        %v3910 = vsel %vm319, %v3826, 0
        %v3913 = vsel %vm319, %v3827, 0
        %v3916 = vsel %vm319, %v3828, 0
        %v3919 = vsel %vm319, %v3829, 0
        %v3922 = vsel %vm319, %v3830, 0
        %v3925 = vsel %vm319, %v3831, 0
        %v3928 = vsel %vm319, %v3832, 0
        %v3931 = vsel %vm319, %v3833, 0
        %v3934 = vsel %vm319, %v3834, 0
        %3936 = vmatprep.subr.mxu0 0.0
        %3937 = vmatpush1.msra.mxu0 %v3836
        %3938 = vmatprep.subr.mxu0 0.0
        %3939 = vmatpush1.msra.mxu0 %v3837
        %3940 = vmatprep.subr.mxu0 0.0
        %3941 = vmatpush1.msra.mxu0 %v3838
        %3942 = vmatprep.subr.mxu0 0.0
        %3943 = vmatpush1.msra.mxu0 %v3839
        %3944 = vmatprep.subr.mxu0 0.0
        %3945 = vmatpush1.msra.mxu0 0.0
        %3946 = vmatprep.subr.mxu0 0.0
        %3947 = vmatpush1.msra.mxu0 0.0
        %3948 = vmatprep.subr.mxu0 0.0
        %3949 = vmatpush1.msra.mxu0 0.0
        %3950 = vmatprep.subr.mxu0 0.0
        %3951 = vmatpush1.msra.mxu0 0.0
        %3952 = vmatprep.subr.mxu0 0.0
        %3953 = vmatpush1.msra.mxu0 0.0
        %3954 = vmatprep.subr.mxu0 0.0
        %3955 = vmatpush1.msra.mxu0 0.0
        %3956 = vmatprep.subr.mxu0 0.0
        %3957 = vmatpush1.msra.mxu0 0.0
        %3958 = vmatprep.subr.mxu0 0.0
        %3959 = vmatpush1.msra.mxu0 0.0
        %3960 = vmatprep.subr.mxu0 0.0
        %3961 = vmatpush1.msra.mxu0 0.0
        %3962 = vmatprep.subr.mxu0 0.0
        %3963 = vmatpush1.msra.mxu0 0.0
        %3964 = vmatprep.subr.mxu0 0.0
        %3965 = vmatpush1.msra.mxu0 0.0
        %3966 = vmatprep.subr.mxu0 0.0
        %3967 = vmatpush1.msra.mxu0 0.0
        %3968 = vmatprep.subr.mxu0 0.0
        %3969 = vmatpush1.msra.mxu0 0.0
        %3970 = vmatprep.subr.mxu0 0.0
        %3971 = vmatpush1.msra.mxu0 0.0
        %3972 = vmatprep.subr.mxu0 0.0
        %3973 = vmatpush1.msra.mxu0 0.0
        %3974 = vmatprep.subr.mxu0 0.0
        %3975 = vmatpush1.msra.mxu0 0.0
        %3976 = vmatprep.subr.mxu0 0.0
        %3977 = vmatpush1.msra.mxu0 0.0
        %3978 = vmatprep.subr.mxu0 0.0
        %3979 = vmatpush1.msra.mxu0 0.0
        %3980 = vmatprep.subr.mxu0 0.0
        %3981 = vmatpush1.msra.mxu0 0.0
        %3982 = vmatprep.subr.mxu0 0.0
        %3983 = vmatpush1.msra.mxu0 0.0
        %3984 = vmatprep.subr.mxu0 0.0
        %3985 = vmatpush1.msra.mxu0 0.0
        %3986 = vmatprep.subr.mxu0 0.0
        %3987 = vmatpush1.msra.mxu0 0.0
        %3988 = vmatprep.subr.mxu0 0.0
        %3989 = vmatpush1.msra.mxu0 0.0
        %3990 = vmatprep.subr.mxu0 0.0
        %3991 = vmatpush1.msra.mxu0 0.0
        %3992 = vmatprep.subr.mxu0 0.0
        %3993 = vmatpush1.msra.mxu0 0.0
        %3994 = vmatprep.subr.mxu0 0.0
        %3995 = vmatpush1.msra.mxu0 0.0
        %3996 = vmatprep.subr.mxu0 0.0
        %3997 = vmatpush1.msra.mxu0 0.0
        %3998 = vmatprep.subr.mxu0 0.0
        %3999 = vmatpush1.msra.mxu0 0.0
        %4000 = vmatprep.mubr.f32.mxu0 0.0
        %4001 = vmatmul.mubr.f32.gmra.mrb[0].mxu0 %v3841
        %v4002 = vpop.f32.mrb[0].mxu0
        %v4003 = vadd.f32 0.0, %v4002
        %v4004 = vpop.f32.mrb[0].mxu0
        %4005 = vmatprep.mubr.f32.mxu0 0.0
        %4006 = vmatmul.mubr.f32.gmra.mrb[0].mxu0 %v3844
        %v4007 = vpop.f32.mrb[0].mxu0
        %v4008 = vadd.f32 0.0, %v4007
        %v4009 = vpop.f32.mrb[0].mxu0
        %4010 = vmatprep.mubr.f32.mxu0 0.0
        %4011 = vmatmul.mubr.f32.gmra.mrb[0].mxu0 %v3847
        %v4012 = vpop.f32.mrb[0].mxu0
        %v4013 = vadd.f32 0.0, %v4012
        %v4014 = vpop.f32.mrb[0].mxu0
        %4015 = vmatprep.mubr.f32.mxu0 0.0
        %4016 = vmatmul.mubr.f32.gmra.mrb[0].mxu0 %v3850
        %v4017 = vpop.f32.mrb[0].mxu0
        %v4018 = vadd.f32 0.0, %v4017
        %v4019 = vpop.f32.mrb[0].mxu0
        %4020 = vmatprep.mubr.f32.mxu0 0.0
        %4021 = vmatmul.mubr.f32.gmra.mrb[0].mxu0 %v3853
        %v4022 = vpop.f32.mrb[0].mxu0
        %v4023 = vadd.f32 0.0, %v4022
        %v4024 = vpop.f32.mrb[0].mxu0
        %4025 = vmatprep.mubr.f32.mxu0 0.0
        %4026 = vmatmul.mubr.f32.gmra.mrb[0].mxu0 %v3856
        %v4027 = vpop.f32.mrb[0].mxu0
        %v4028 = vadd.f32 0.0, %v4027
        %v4029 = vpop.f32.mrb[0].mxu0
        %4030 = vmatprep.mubr.f32.mxu0 0.0
        %4031 = vmatmul.mubr.f32.gmra.mrb[0].mxu0 %v3859
        %v4032 = vpop.f32.mrb[0].mxu0
        %v4033 = vadd.f32 0.0, %v4032
        %v4034 = vpop.f32.mrb[0].mxu0
        %4035 = vmatprep.mubr.f32.mxu0 0.0
        %4036 = vmatmul.mubr.f32.gmra.mrb[0].mxu0 %v3862
        %v4037 = vpop.f32.mrb[0].mxu0
        %v4038 = vadd.f32 0.0, %v4037
        %v4039 = vpop.f32.mrb[0].mxu0
        %4040 = vmatprep.mubr.f32.mxu0 0.0
        %4041 = vmatmul.mubr.f32.gmra.mrb[0].mxu0 %v3865
        %v4042 = vpop.f32.mrb[0].mxu0
        %v4043 = vadd.f32 0.0, %v4042
        %v4044 = vpop.f32.mrb[0].mxu0
        %4045 = vmatprep.mubr.f32.mxu0 0.0
        %4046 = vmatmul.mubr.f32.gmra.mrb[0].mxu0 %v3868
        %v4047 = vpop.f32.mrb[0].mxu0
        %v4048 = vadd.f32 0.0, %v4047
        %v4049 = vpop.f32.mrb[0].mxu0
        %4050 = vmatprep.mubr.f32.mxu0 0.0
        %4051 = vmatmul.mubr.f32.gmra.mrb[0].mxu0 %v3871
        %v4052 = vpop.f32.mrb[0].mxu0
        %v4053 = vadd.f32 0.0, %v4052
        %v4054 = vpop.f32.mrb[0].mxu0
        %4055 = vmatprep.mubr.f32.mxu0 0.0
        %4056 = vmatmul.mubr.f32.gmra.mrb[0].mxu0 %v3874
        %v4057 = vpop.f32.mrb[0].mxu0
        %v4058 = vadd.f32 0.0, %v4057
        %v4059 = vpop.f32.mrb[0].mxu0
        %4060 = vmatprep.mubr.f32.mxu0 0.0
        %4061 = vmatmul.mubr.f32.gmra.mrb[0].mxu0 %v3877
        %v4062 = vpop.f32.mrb[0].mxu0
        %v4063 = vadd.f32 0.0, %v4062
        %v4064 = vpop.f32.mrb[0].mxu0
        %4065 = vmatprep.mubr.f32.mxu0 0.0
        %4066 = vmatmul.mubr.f32.gmra.mrb[0].mxu0 %v3880
        %v4067 = vpop.f32.mrb[0].mxu0
        %v4068 = vadd.f32 0.0, %v4067
        %v4069 = vpop.f32.mrb[0].mxu0
        %4070 = vmatprep.mubr.f32.mxu0 0.0
        %4071 = vmatmul.mubr.f32.gmra.mrb[0].mxu0 %v3883
        %v4072 = vpop.f32.mrb[0].mxu0
        %v4073 = vadd.f32 0.0, %v4072
        %v4074 = vpop.f32.mrb[0].mxu0
        %4075 = vmatprep.mubr.f32.mxu0 0.0
        %4076 = vmatmul.mubr.f32.gmra.mrb[0].mxu0 %v3886
        %v4077 = vpop.f32.mrb[0].mxu0
        %v4078 = vadd.f32 0.0, %v4077
        %v4079 = vpop.f32.mrb[0].mxu0
        %4080 = vmatprep.mubr.f32.mxu0 0.0
        %4081 = vmatmul.mubr.f32.gmra.mrb[0].mxu0 %v3889
        %v4082 = vpop.f32.mrb[0].mxu0
        %v4083 = vadd.f32 0.0, %v4082
        %v4084 = vpop.f32.mrb[0].mxu0
        %4085 = vmatprep.mubr.f32.mxu0 0.0
        %4086 = vmatmul.mubr.f32.gmra.mrb[0].mxu0 %v3892
        %v4087 = vpop.f32.mrb[0].mxu0
        %v4088 = vadd.f32 0.0, %v4087
        %v4089 = vpop.f32.mrb[0].mxu0
        %4090 = vmatprep.mubr.f32.mxu0 0.0
        %4091 = vmatmul.mubr.f32.gmra.mrb[0].mxu0 %v3895
        %v4092 = vpop.f32.mrb[0].mxu0
        %v4093 = vadd.f32 0.0, %v4092
        %v4094 = vpop.f32.mrb[0].mxu0
        %4095 = vmatprep.mubr.f32.mxu0 0.0
        %4096 = vmatmul.mubr.f32.gmra.mrb[0].mxu0 %v3898
        %v4097 = vpop.f32.mrb[0].mxu0
        %v4098 = vadd.f32 0.0, %v4097
        %v4099 = vpop.f32.mrb[0].mxu0
        %4100 = vmatprep.mubr.f32.mxu0 0.0
        %4101 = vmatmul.mubr.f32.gmra.mrb[0].mxu0 %v3901
        %v4102 = vpop.f32.mrb[0].mxu0
        %v4103 = vadd.f32 0.0, %v4102
        %v4104 = vpop.f32.mrb[0].mxu0
        %4105 = vmatprep.mubr.f32.mxu0 0.0
        %4106 = vmatmul.mubr.f32.gmra.mrb[0].mxu0 %v3904
        %v4107 = vpop.f32.mrb[0].mxu0
        %v4108 = vadd.f32 0.0, %v4107
        %v4109 = vpop.f32.mrb[0].mxu0
        %4110 = vmatprep.mubr.f32.mxu0 0.0
        %4111 = vmatmul.mubr.f32.gmra.mrb[0].mxu0 %v3907
        %v4112 = vpop.f32.mrb[0].mxu0
        %v4113 = vadd.f32 0.0, %v4112
        %v4114 = vpop.f32.mrb[0].mxu0
        %4115 = vmatprep.mubr.f32.mxu0 0.0
        %4116 = vmatmul.mubr.f32.gmra.mrb[0].mxu0 %v3910
        %v4117 = vpop.f32.mrb[0].mxu0
        %v4118 = vadd.f32 0.0, %v4117
        %v4119 = vpop.f32.mrb[0].mxu0
        %4120 = vmatprep.mubr.f32.mxu0 0.0
        %4121 = vmatmul.mubr.f32.gmra.mrb[0].mxu0 %v3913
        %v4122 = vpop.f32.mrb[0].mxu0
        %v4123 = vadd.f32 0.0, %v4122
        %v4124 = vpop.f32.mrb[0].mxu0
        %4125 = vmatprep.mubr.f32.mxu0 0.0
        %4126 = vmatmul.mubr.f32.gmra.mrb[0].mxu0 %v3916
        %v4127 = vpop.f32.mrb[0].mxu0
        %v4128 = vadd.f32 0.0, %v4127
        %v4129 = vpop.f32.mrb[0].mxu0
        %4130 = vmatprep.mubr.f32.mxu0 0.0
        %4131 = vmatmul.mubr.f32.gmra.mrb[0].mxu0 %v3919
        %v4132 = vpop.f32.mrb[0].mxu0
        %v4133 = vadd.f32 0.0, %v4132
        %v4134 = vpop.f32.mrb[0].mxu0
        %4135 = vmatprep.mubr.f32.mxu0 0.0
        %4136 = vmatmul.mubr.f32.gmra.mrb[0].mxu0 %v3922
        %v4137 = vpop.f32.mrb[0].mxu0
        %v4138 = vadd.f32 0.0, %v4137
        %v4139 = vpop.f32.mrb[0].mxu0
        %4140 = vmatprep.mubr.f32.mxu0 0.0
        %4141 = vmatmul.mubr.f32.gmra.mrb[0].mxu0 %v3925
        %v4142 = vpop.f32.mrb[0].mxu0
        %v4143 = vadd.f32 0.0, %v4142
        %v4144 = vpop.f32.mrb[0].mxu0
        %4145 = vmatprep.mubr.f32.mxu0 0.0
        %4146 = vmatmul.mubr.f32.gmra.mrb[0].mxu0 %v3928
        %v4147 = vpop.f32.mrb[0].mxu0
        %v4148 = vadd.f32 0.0, %v4147
        %v4149 = vpop.f32.mrb[0].mxu0
        %4150 = vmatprep.mubr.f32.mxu0 0.0
        %4151 = vmatmul.mubr.f32.gmra.mrb[0].mxu0 %v3931
        %v4152 = vpop.f32.mrb[0].mxu0
        %v4153 = vadd.f32 0.0, %v4152
        %v4154 = vpop.f32.mrb[0].mxu0
        %4155 = vmatprep.mubr.f32.mxu0 0.0
        %4156 = vmatmul.mubr.f32.gmra.mrb[0].mxu0 %v3934
        %v4157 = vpop.f32.mrb[0].mxu0
        %v4158 = vadd.f32 0.0, %v4157
        %v4159 = vpop.f32.mrb[0].mxu0
        %4160 = vdwg.mxu0
        %v4161 = vadd.f32 %v3771, %v4003
        %v4162 = vadd.f32 %v3772, %v4008
        %v4163 = vadd.f32 %v3773, %v4013
        %v4164 = vadd.f32 %v3774, %v4018
        %v4165 = vadd.f32 %v3775, %v4023
        %v4166 = vadd.f32 %v3776, %v4028
        %v4167 = vadd.f32 %v3777, %v4033
        %v4168 = vadd.f32 %v3778, %v4038
        %v4169 = vadd.f32 %v3779, %v4043
        %v4170 = vadd.f32 %v3780, %v4048
        %v4171 = vadd.f32 %v3781, %v4053
        %v4172 = vadd.f32 %v3782, %v4058
        %v4173 = vadd.f32 %v3783, %v4063
        %v4174 = vadd.f32 %v3784, %v4068
        %v4175 = vadd.f32 %v3785, %v4073
        %v4176 = vadd.f32 %v3786, %v4078
        %v4177 = vadd.f32 %v3787, %v4083
        %v4178 = vadd.f32 %v3788, %v4088
        %v4179 = vadd.f32 %v3789, %v4093
        %v4180 = vadd.f32 %v3790, %v4098
        %v4181 = vadd.f32 %v3791, %v4103
        %v4182 = vadd.f32 %v3792, %v4108
        %v4183 = vadd.f32 %v3793, %v4113
        %v4184 = vadd.f32 %v3794, %v4118
        %v4185 = vadd.f32 %v3795, %v4123
        %v4186 = vadd.f32 %v3796, %v4128
        %v4187 = vadd.f32 %v3797, %v4133
        %v4188 = vadd.f32 %v3798, %v4138
        %v4189 = vadd.f32 %v3799, %v4143
        %v4190 = vadd.f32 %v3800, %v4148
        %v4191 = vadd.f32 %v3801, %v4153
        %v4192 = vadd.f32 %v3802, %v4158
        %v4193 = vld [vmem:[%s4] sm:$0x1]
        %v4195 = vlaneseq
        %v4196 = vshrl.u32 %v4195, 7
        %v4197 = vsub.s32 0, %v4196
        %v4198 = vrot.slane %v4193, %v4197
        %v4200 = vadd.f32 %v4161, %v4198
        %v4201 = vadd.f32 %v4162, %v4198
        %v4202 = vadd.f32 %v4163, %v4198
        %v4203 = vadd.f32 %v4164, %v4198
        %v4204 = vadd.f32 %v4165, %v4198
        %v4205 = vadd.f32 %v4166, %v4198
        %v4206 = vadd.f32 %v4167, %v4198
        %v4207 = vadd.f32 %v4168, %v4198
        %v4208 = vadd.f32 %v4169, %v4198
        %v4209 = vadd.f32 %v4170, %v4198
        %v4210 = vadd.f32 %v4171, %v4198
        %v4211 = vadd.f32 %v4172, %v4198
        %v4212 = vadd.f32 %v4173, %v4198
        %v4213 = vadd.f32 %v4174, %v4198
        %v4214 = vadd.f32 %v4175, %v4198
        %v4215 = vadd.f32 %v4176, %v4198
        %v4216 = vadd.f32 %v4177, %v4198
        %v4217 = vadd.f32 %v4178, %v4198
        %v4218 = vadd.f32 %v4179, %v4198
        %v4219 = vadd.f32 %v4180, %v4198
        %v4220 = vadd.f32 %v4181, %v4198
        %v4221 = vadd.f32 %v4182, %v4198
        %v4222 = vadd.f32 %v4183, %v4198
        %v4223 = vadd.f32 %v4184, %v4198
        %v4224 = vadd.f32 %v4185, %v4198
        %v4225 = vadd.f32 %v4186, %v4198
        %v4226 = vadd.f32 %v4187, %v4198
        %v4227 = vadd.f32 %v4188, %v4198
        %v4228 = vadd.f32 %v4189, %v4198
        %v4229 = vadd.f32 %v4190, %v4198
        %v4230 = vadd.f32 %v4191, %v4198
        %v4231 = vadd.f32 %v4192, %v4198
        %v4232 = vmax.f32 %v4200, 0.0
        %v4233 = vmax.f32 %v4201, 0.0
        %v4234 = vmax.f32 %v4202, 0.0
        %v4235 = vmax.f32 %v4203, 0.0
        %v4236 = vmax.f32 %v4204, 0.0
        %v4237 = vmax.f32 %v4205, 0.0
        %v4238 = vmax.f32 %v4206, 0.0
        %v4239 = vmax.f32 %v4207, 0.0
        %v4240 = vmax.f32 %v4208, 0.0
        %v4241 = vmax.f32 %v4209, 0.0
        %v4242 = vmax.f32 %v4210, 0.0
        %v4243 = vmax.f32 %v4211, 0.0
        %v4244 = vmax.f32 %v4212, 0.0
        %v4245 = vmax.f32 %v4213, 0.0
        %v4246 = vmax.f32 %v4214, 0.0
        %v4247 = vmax.f32 %v4215, 0.0
        %v4248 = vmax.f32 %v4216, 0.0
        %v4249 = vmax.f32 %v4217, 0.0
        %v4250 = vmax.f32 %v4218, 0.0
        %v4251 = vmax.f32 %v4219, 0.0
        %v4252 = vmax.f32 %v4220, 0.0
        %v4253 = vmax.f32 %v4221, 0.0
        %v4254 = vmax.f32 %v4222, 0.0
        %v4255 = vmax.f32 %v4223, 0.0
        %v4256 = vmax.f32 %v4224, 0.0
        %v4257 = vmax.f32 %v4225, 0.0
        %v4258 = vmax.f32 %v4226, 0.0
        %v4259 = vmax.f32 %v4227, 0.0
        %v4260 = vmax.f32 %v4228, 0.0
        %v4261 = vmax.f32 %v4229, 0.0
        %v4262 = vmax.f32 %v4230, 0.0
        %v4263 = vmax.f32 %v4231, 0.0
        %v4264 = vsel %vm319, %v4232, 0.0
        %v4265 = vsel %vm319, %v4233, 0.0
        %v4266 = vadd.f32 %v4264, %v4265
        %v4267 = vsel %vm319, %v4234, 0.0
        %v4268 = vadd.f32 %v4266, %v4267
        %v4269 = vsel %vm319, %v4235, 0.0
        %v4270 = vadd.f32 %v4268, %v4269
        %v4271 = vsel %vm319, %v4236, 0.0
        %v4272 = vadd.f32 %v4270, %v4271
        %v4273 = vsel %vm319, %v4237, 0.0
        %v4274 = vadd.f32 %v4272, %v4273
        %v4275 = vsel %vm319, %v4238, 0.0
        %v4276 = vadd.f32 %v4274, %v4275
        %v4277 = vsel %vm319, %v4239, 0.0
        %v4278 = vadd.f32 %v4276, %v4277
        %v4279 = vsel %vm319, %v4240, 0.0
        %v4280 = vadd.f32 %v4278, %v4279
        %v4281 = vsel %vm319, %v4241, 0.0
        %v4282 = vadd.f32 %v4280, %v4281
        %v4283 = vsel %vm319, %v4242, 0.0
        %v4284 = vadd.f32 %v4282, %v4283
        %v4285 = vsel %vm319, %v4243, 0.0
        %v4286 = vadd.f32 %v4284, %v4285
        %v4287 = vsel %vm319, %v4244, 0.0
        %v4288 = vadd.f32 %v4286, %v4287
        %v4289 = vsel %vm319, %v4245, 0.0
        %v4290 = vadd.f32 %v4288, %v4289
        %v4291 = vsel %vm319, %v4246, 0.0
        %v4292 = vadd.f32 %v4290, %v4291
        %v4293 = vsel %vm319, %v4247, 0.0
        %v4294 = vadd.f32 %v4292, %v4293
        %v4295 = vsel %vm319, %v4248, 0.0
        %v4296 = vadd.f32 %v4294, %v4295
        %v4297 = vsel %vm319, %v4249, 0.0
        %v4298 = vadd.f32 %v4296, %v4297
        %v4299 = vsel %vm319, %v4250, 0.0
        %v4300 = vadd.f32 %v4298, %v4299
        %v4301 = vsel %vm319, %v4251, 0.0
        %v4302 = vadd.f32 %v4300, %v4301
        %v4303 = vsel %vm319, %v4252, 0.0
        %v4304 = vadd.f32 %v4302, %v4303
        %v4305 = vsel %vm319, %v4253, 0.0
        %v4306 = vadd.f32 %v4304, %v4305
        %v4307 = vsel %vm319, %v4254, 0.0
        %v4308 = vadd.f32 %v4306, %v4307
        %v4309 = vsel %vm319, %v4255, 0.0
        %v4310 = vadd.f32 %v4308, %v4309
        %v4311 = vsel %vm319, %v4256, 0.0
        %v4312 = vadd.f32 %v4310, %v4311
        %v4313 = vsel %vm319, %v4257, 0.0
        %v4314 = vadd.f32 %v4312, %v4313
        %v4315 = vsel %vm319, %v4258, 0.0
        %v4316 = vadd.f32 %v4314, %v4315
        %v4317 = vsel %vm319, %v4259, 0.0
        %v4318 = vadd.f32 %v4316, %v4317
        %v4319 = vsel %vm319, %v4260, 0.0
        %v4320 = vadd.f32 %v4318, %v4319
        %v4321 = vsel %vm319, %v4261, 0.0
        %v4322 = vadd.f32 %v4320, %v4321
        %v4323 = vsel %vm319, %v4262, 0.0
        %v4324 = vadd.f32 %v4322, %v4323
        %v4325 = vsel %vm319, %v4263, 0.0
        %v4326 = vadd.f32 %v4324, %v4325
        %v4327 = vrot.slane %v4326, 4
        %v4328 = vadd.f32 %v4326, %v4327
        %v4329 = vrot.slane %v4328, 2
        %v4330 = vadd.f32 %v4328, %v4329
        %v4331 = vrot.slane %v4330, 1
        %v4332 = vadd.f32 %v4330, %v4331
        %v4333 = vmul.f32 %v4332, 0.00390625
        %v4334 = vld [vmem:[%s5] sm:$0xff]
        %v4335 = vld [vmem:[%s5 + $0x8] sm:$0xff]
        %v4336 = vld [vmem:[%s5 + $0x10] sm:$0xff]
        %v4337 = vld [vmem:[%s5 + $0x18] sm:$0xff]
        %v4338 = vld [vmem:[%s6] sm:$0x1]
        %v4340 = vsel %vm319, %v4333, 0
        %4342 = vmatprep.subr.mxu0 0.0
        %4343 = vmatpush1.msra.mxu0 %v4334
        %4344 = vmatprep.subr.mxu0 0.0
        %4345 = vmatpush1.msra.mxu0 %v4335
        %4346 = vmatprep.subr.mxu0 0.0
        %4347 = vmatpush1.msra.mxu0 %v4336
        %4348 = vmatprep.subr.mxu0 0.0
        %4349 = vmatpush1.msra.mxu0 %v4337
        %4350 = vmatprep.subr.mxu0 0.0
        %4351 = vmatpush1.msra.mxu0 0.0
        %4352 = vmatprep.subr.mxu0 0.0
        %4353 = vmatpush1.msra.mxu0 0.0
        %4354 = vmatprep.subr.mxu0 0.0
        %4355 = vmatpush1.msra.mxu0 0.0
        %4356 = vmatprep.subr.mxu0 0.0
        %4357 = vmatpush1.msra.mxu0 0.0
        %4358 = vmatprep.subr.mxu0 0.0
        %4359 = vmatpush1.msra.mxu0 0.0
        %4360 = vmatprep.subr.mxu0 0.0
        %4361 = vmatpush1.msra.mxu0 0.0
        %4362 = vmatprep.subr.mxu0 0.0
        %4363 = vmatpush1.msra.mxu0 0.0
        %4364 = vmatprep.subr.mxu0 0.0
        %4365 = vmatpush1.msra.mxu0 0.0
        %4366 = vmatprep.subr.mxu0 0.0
        %4367 = vmatpush1.msra.mxu0 0.0
        %4368 = vmatprep.subr.mxu0 0.0
        %4369 = vmatpush1.msra.mxu0 0.0
        %4370 = vmatprep.subr.mxu0 0.0
        %4371 = vmatpush1.msra.mxu0 0.0
        %4372 = vmatprep.subr.mxu0 0.0
        %4373 = vmatpush1.msra.mxu0 0.0
        %4374 = vmatprep.subr.mxu0 0.0
        %4375 = vmatpush1.msra.mxu0 0.0
        %4376 = vmatprep.subr.mxu0 0.0
        %4377 = vmatpush1.msra.mxu0 0.0
        %4378 = vmatprep.subr.mxu0 0.0
        %4379 = vmatpush1.msra.mxu0 0.0
        %4380 = vmatprep.subr.mxu0 0.0
        %4381 = vmatpush1.msra.mxu0 0.0
        %4382 = vmatprep.subr.mxu0 0.0
        %4383 = vmatpush1.msra.mxu0 0.0
        %4384 = vmatprep.subr.mxu0 0.0
        %4385 = vmatpush1.msra.mxu0 0.0
        %4386 = vmatprep.subr.mxu0 0.0
        %4387 = vmatpush1.msra.mxu0 0.0
        %4388 = vmatprep.subr.mxu0 0.0
        %4389 = vmatpush1.msra.mxu0 0.0
        %4390 = vmatprep.subr.mxu0 0.0
        %4391 = vmatpush1.msra.mxu0 0.0
        %4392 = vmatprep.subr.mxu0 0.0
        %4393 = vmatpush1.msra.mxu0 0.0
        %4394 = vmatprep.subr.mxu0 0.0
        %4395 = vmatpush1.msra.mxu0 0.0
        %4396 = vmatprep.subr.mxu0 0.0
        %4397 = vmatpush1.msra.mxu0 0.0
        %4398 = vmatprep.subr.mxu0 0.0
        %4399 = vmatpush1.msra.mxu0 0.0
        %4400 = vmatprep.subr.mxu0 0.0
        %4401 = vmatpush1.msra.mxu0 0.0
        %4402 = vmatprep.subr.mxu0 0.0
        %4403 = vmatpush1.msra.mxu0 0.0
        %4404 = vmatprep.subr.mxu0 0.0
        %4405 = vmatpush1.msra.mxu0 0.0
        %4406 = vmatprep.mubr.f32.mxu0 0.0
        %4407 = vmatmul.mubr.f32.gmra.mrb[0].mxu0 %v4340
        %v4408 = vpop.f32.mrb[0].mxu0
        %v4409 = vadd.f32 %v4338, %v4408
        %v4410 = vpop.f32.mrb[0].mxu0
        %4411 = vdwg.mxu0
        %4412 = vst [vmem:[%s270] sm:$0x1] %v4409
        %s4413 = sand.u32 %s181, 1
        %s4414 = scalar_lea.sflag [#allocation4], %s4413
        %s4415 = sand.u32 %s181, 1
        %s4416 = scalar_lea.vmem [#allocation3], %s4415
        // Predicated region
        $region49: #{color_classifier_forward.1} parent=47 // pred_check
          %p4417 = pneg %p191
        $region50: #{color_classifier_forward.1} parent=47 // pred_check_branch
          %4419 = sbr.rel (%p4417) target = $region52
        $region51: #{color_classifier_forward.1} parent=47 // pred_region
          %s4421 = ssub.s32 16, 16
          %4422 = vsyncadd %s4414, %s4421
          %s4423 = smul.addr %s21, 16
          %s4424 = scalar_lea.hbm %s7, %s4423
          %s4426 = sshll.u32 %s4416, 4
          %s4427 = int_to_ptr.vmem [resolvable:$true] %s4426
          %4429 = dma.vmem_to_hbm [thread:$0]  %s4427, 16, %s4424, %s4414
        $region52: #{color_classifier_forward.1} parent=47 // pred_fallthru
          _
      $region48: #{color_classifier_forward.1} parent=5 // pred_fallthru
        _
      %p4430 = scmp.le.s32.totalorder 2, %s16
      // Predicated region
      $region53: #{color_classifier_forward.1} parent=5 // pred_check
        %p4431 = pneg %p4430
      $region54: #{color_classifier_forward.1} parent=5 // pred_check_branch
        %4433 = sbr.rel (%p4431) target = $region56
      $region55: #{color_classifier_forward.1} parent=5 // pred_region
        %s4434 = ssub.s32 %s16, 2
        // Predicated region
        $region57: #{color_classifier_forward.1} parent=55 // pred_check
          %p4435 = pneg %p197
        $region58: #{color_classifier_forward.1} parent=55 // pred_check_branch
          %4437 = sbr.rel (%p4435) target = $region60
        $region59: #{color_classifier_forward.1} parent=55 // pred_region
          %s4438 = sand.u32 %s182, 1
          %s4439 = scalar_lea.sflag [#allocation4], %s4438
          %s4440 = sand.u32 %s182, 1
          %s4441 = scalar_lea.vmem [#allocation3], %s4440
          %4442 = dma.done %s4439, 16
        $region60: #{color_classifier_forward.1} parent=55 // pred_fallthru
          _
      $region56: #{color_classifier_forward.1} parent=5 // pred_fallthru
        _
    $region6: #{color_classifier_forward.1} parent=1 // loop_footer
      %s20 = sadd.s32 1, %s16
    $region7: #{color_classifier_forward.1} parent=1 // loop_footer_branch
      %15 = sbr.rel target = $region3
    $region8: #{color_classifier_forward.1} parent=1 // loop_exit
      _
    %4443 = vsyncpa [#allocation4], 1
    %s4444 = scalar_lea.sflag [#allocation4], 1
    %4445 = vsyncpa %s4444, 1

</llo_original>
